<compile_context>
chip_gen: v5e
topology: v5e:2x2
jax: 0.10.0
libtpu: 0.0.40
codegen_flags: <defaults>
</compile_context>

<pallas_src>
import functools
import math

import jax
import jax.numpy as jnp
from jax.experimental import pallas as pl
from jax.experimental.pallas import tpu as pltpu


def _fused_kernel(x_ref, wdw_ref, s1_ref, b1_ref, wpw_ref, s2_ref, b2_ref,
                  o_ref, xp_ref, y_ref, *, H, W, K, Cin, Cout):
    """One batch element per grid step.  All tensors NCHW, W on the lane axis.

    x_ref  : (1, Cin, H, W)          VMEM input tile (unpadded)
    wdw_ref: (Cin*K*K,)   SMEM depthwise weights, idx = c*K*K + kh*K + kw
    s1_ref : (Cin,)  b1_ref: (Cin,)  SMEM folded BN1 scale / (bias + conv1 bias)
    wpw_ref: (Cout*Cin,)  SMEM 1x1 weights, idx = co*Cin + ci
    s2_ref : (Cout,) b2_ref: (Cout,) SMEM folded BN2 scale / (bias + conv2 bias)
    o_ref  : (1, Cout, H, W)         VMEM output tile
    xp_ref : (Cin, H+K-1, W+K-1)     VMEM scratch: zero-padded input
    y_ref  : (Cin, H, W)             VMEM scratch: depthwise + BN1 + ReLU result
    """
    P = (K - 1) // 2

    # ---- zero-pad inside the kernel (replaces wrapper jnp.pad HBM round trip) ----
    xp_ref[...] = jnp.zeros_like(xp_ref)
    xp_ref[:, P:P + H, P:P + W] = x_ref[0]

    # ---- depthwise KxK conv + BN1 + ReLU: unrolled shift-and-MAC on the VPU ----
    # Per-tap weights are SMEM scalars -> vector*scalar ops, no broadcast arrays
    # materialized inside the 49-tap loop.
    for c in range(Cin):
        base = c * K * K
        acc = xp_ref[c, 0:H, 0:W] * wdw_ref[base]
        for kh in range(K):
            for kw in range(K):
                if kh == 0 and kw == 0:
                    continue
                acc = acc + (xp_ref[c, kh:kh + H, kw:kw + W]
                             * wdw_ref[base + kh * K + kw])
        y_ref[c, :, :] = jnp.maximum(acc * s1_ref[c] + b1_ref[c], 0.0)

    # ---- 1x1 conv + BN2 + ReLU: VPU scalar FMAs over Cin (MXU skipped: tiny K/N) ----
    for co in range(Cout):
        acc = y_ref[0] * wpw_ref[co * Cin]
        for ci in range(1, Cin):
            acc = acc + y_ref[ci] * wpw_ref[co * Cin + ci]
        o_ref[0, co, :, :] = jnp.maximum(acc * s2_ref[co] + b2_ref[co], 0.0)


def split_separable_conv2d(x_nchw, params, *, kernel_size=7):
    """Forward pass matching the PyTorch module (inference-mode BN)."""
    (w_dw, b_dw, g1, be1, m1, v1, w_pw, b_pw, g2, be2, m2, v2) = params
    eps = 1e-5
    K = kernel_size

    N, Cin, H, W = x_nchw.shape
    Cout = w_pw.shape[0]

    x = x_nchw.astype(jnp.float32)   # NCHW, unpadded: no transpose / pad in HBM

    # conv1.weight (Cin,1,K,K) -> flat (Cin*K*K,); conv2.weight (Cout,Cin,1,1) -> (Cout*Cin,)
    wdw = w_dw[:, 0, :, :].reshape(Cin * K * K).astype(jnp.float32)
    wpw = w_pw[:, :, 0, 0].reshape(Cout * Cin).astype(jnp.float32)

    # Fold BN (running stats) + conv bias into per-channel scale/shift.
    inv1 = g1 / jnp.sqrt(v1 + eps)
    s1 = inv1.astype(jnp.float32)
    b1 = ((b_dw - m1) * inv1 + be1).astype(jnp.float32)
    inv2 = g2 / jnp.sqrt(v2 + eps)
    s2 = inv2.astype(jnp.float32)
    b2 = ((b_pw - m2) * inv2 + be2).astype(jnp.float32)

    kern = functools.partial(_fused_kernel, H=H, W=W, K=K, Cin=Cin, Cout=Cout)
    smem = pl.BlockSpec(memory_space=pltpu.MemorySpace.SMEM)

    return pl.pallas_call(
        kern,
        out_shape=jax.ShapeDtypeStruct((N, Cout, H, W), jnp.float32),
        grid=(N,),
        in_specs=[
            pl.BlockSpec((1, Cin, H, W), lambda n: (n, 0, 0, 0)),  # activations: pipelined
            smem, smem, smem, smem, smem, smem,                    # weights/scales: SMEM scalars
        ],
        out_specs=pl.BlockSpec((1, Cout, H, W), lambda n: (n, 0, 0, 0)),
        scratch_shapes=[
            pltpu.VMEM((Cin, H + K - 1, W + K - 1), jnp.float32),  # padded input plane
            pltpu.VMEM((Cin, H, W), jnp.float32),                  # depthwise+BN1+ReLU result
        ],
        compiler_params=pltpu.CompilerParams(
            dimension_semantics=("parallel",),
            vmem_limit_bytes=32 * 1024 * 1024,
        ),
    )(x, wdw, s1, b1, wpw, s2, b2)


def make_params(key, in_dim, out_dim, kernel_size=7):
    """Deterministic parameter init mirroring the module's __init__ shapes."""
    ks = jax.random.split(key, 8)
    K = kernel_size
    # kaiming_normal_(mode='fan_out', nonlinearity='relu')
    fan_out1 = (in_dim // in_dim) * K * K            # out_channels/groups * kH*kW
    std1 = math.sqrt(2.0 / fan_out1)
    w_dw = std1 * jax.random.normal(ks[0], (in_dim, 1, K, K), jnp.float32)
    b_dw = 0.1 * jax.random.normal(ks[1], (in_dim,), jnp.float32)

    fan_out2 = out_dim * 1 * 1
    std2 = math.sqrt(2.0 / fan_out2)
    w_pw = std2 * jax.random.normal(ks[2], (out_dim, in_dim, 1, 1), jnp.float32)
    b_pw = 0.1 * jax.random.normal(ks[3], (out_dim,), jnp.float32)

    # BN params (non-trivial but deterministic); inference/running stats.
    g1 = 1.0 + 0.1 * jax.random.normal(ks[4], (in_dim,), jnp.float32)
    be1 = 0.1 * jax.random.normal(ks[5], (in_dim,), jnp.float32)
    m1 = 0.05 * jax.random.normal(ks[6], (in_dim,), jnp.float32)
    v1 = 1.0 + 0.1 * jnp.abs(jax.random.normal(ks[7], (in_dim,), jnp.float32))

    ks2 = jax.random.split(ks[7], 4)
    g2 = 1.0 + 0.1 * jax.random.normal(ks2[0], (out_dim,), jnp.float32)
    be2 = 0.1 * jax.random.normal(ks2[1], (out_dim,), jnp.float32)
    m2 = 0.05 * jax.random.normal(ks2[2], (out_dim,), jnp.float32)
    v2 = 1.0 + 0.1 * jnp.abs(jax.random.normal(ks2[3], (out_dim,), jnp.float32))
    return (w_dw, b_dw, g1, be1, m1, v1, w_pw, b_pw, g2, be2, m2, v2)


def _reference(x_nchw, params, kernel_size=7):
    """Pure-JAX reference (lax.conv) for a correctness check."""
    (w_dw, b_dw, g1, be1, m1, v1, w_pw, b_pw, g2, be2, m2, v2) = params
    eps = 1e-5
    P = (kernel_size - 1) // 2
    Cin = x_nchw.shape[1]
    y = jax.lax.conv_general_dilated(
        x_nchw, w_dw, window_strides=(1, 1), padding=((P, P), (P, P)),
        feature_group_count=Cin,
        dimension_numbers=("NCHW", "OIHW", "NCHW")) + b_dw[None, :, None, None]
    y = (y - m1[None, :, None, None]) / jnp.sqrt(v1 + eps)[None, :, None, None]
    y = y * g1[None, :, None, None] + be1[None, :, None, None]
    y = jnp.maximum(y, 0.0)
    z = jax.lax.conv_general_dilated(
        y, w_pw, window_strides=(1, 1), padding=((0, 0), (0, 0)),
        dimension_numbers=("NCHW", "OIHW", "NCHW")) + b_pw[None, :, None, None]
    z = (z - m2[None, :, None, None]) / jnp.sqrt(v2 + eps)[None, :, None, None]
    z = z * g2[None, :, None, None] + be2[None, :, None, None]
    return jnp.maximum(z, 0.0)


if __name__ == "__main__":
    key = jax.random.PRNGKey(0)
    k_x, k_p = jax.random.split(key)

    N, Cin, H, W = 2, 4, 16, 16
    Cout = 8
    x = jax.random.normal(k_x, (N, Cin, H, W), jnp.float32)
    params = make_params(k_p, Cin, Cout, kernel_size=7)

    out = split_separable_conv2d(x, params, kernel_size=7)
    out = jax.block_until_ready(out)

    ref = _reference(x, params, kernel_size=7)
    assert out.shape == (N, Cout, H, W)
    assert jnp.allclose(out, ref, atol=1e-4, rtol=1e-4), "mismatch vs reference"

    print("KERNEL_OK")
</pallas_src>

<mosaic_0001>
module attributes {stable_mosaic.version = 11 : i64} {
  func.func @_fused_kernel(%arg0: i32, %arg1: memref<1x4x16x16xf32, #tpu.memory_space<vmem>>, %arg2: memref<196xf32, #tpu.memory_space<smem>>, %arg3: memref<4xf32, #tpu.memory_space<smem>>, %arg4: memref<4xf32, #tpu.memory_space<smem>>, %arg5: memref<32xf32, #tpu.memory_space<smem>>, %arg6: memref<8xf32, #tpu.memory_space<smem>>, %arg7: memref<8xf32, #tpu.memory_space<smem>>, %arg8: memref<1x8x16x16xf32, #tpu.memory_space<vmem>>, %arg9: memref<4x22x22xf32, #tpu.memory_space<vmem>>, %arg10: memref<4x16x16xf32, #tpu.memory_space<vmem>>) attributes {dimension_semantics = [#tpu.dimension_semantics<parallel>], iteration_bounds = array<i64: 2>, scalar_prefetch = 0 : i64, scratch_operands = 2 : i64, tpu.core_type = #tpu.core_type<tc>, window_params = [{transform_indices = @transform_0, window_bounds = array<i64: 1, 4, 16, 16>}, {transform_indices = @transform_1, window_bounds = array<i64: 196>}, {transform_indices = @transform_2, window_bounds = array<i64: 4>}, {transform_indices = @transform_3, window_bounds = array<i64: 4>}, {transform_indices = @transform_4, window_bounds = array<i64: 32>}, {transform_indices = @transform_5, window_bounds = array<i64: 8>}, {transform_indices = @transform_6, window_bounds = array<i64: 8>}, {transform_indices = @transform_7, window_bounds = array<i64: 1, 8, 16, 16>}]} {
    %cst = arith.constant 0.000000e+00 : f32
    %0 = vector.broadcast %cst : f32 to vector<4x22x22xf32>
    %c0 = arith.constant 0 : index
    %c0_0 = arith.constant 0 : index
    %c0_1 = arith.constant 0 : index
    %1 = vector.load %arg9[%c0, %c0_0, %c0_1] : memref<4x22x22xf32, #tpu.memory_space<vmem>>, vector<4x22x22xf32>
    tpu.vector_store %arg9[%c0, %c0_0, %c0_1], %0 {strides = array<i32>} : memref<4x22x22xf32, #tpu.memory_space<vmem>>, vector<4x22x22xf32>,
    %c0_2 = arith.constant 0 : index
    %c0_3 = arith.constant 0 : index
    %c0_4 = arith.constant 0 : index
    %c0_5 = arith.constant 0 : index
    %2 = vector.load %arg1[%c0_2, %c0_3, %c0_4, %c0_5] : memref<1x4x16x16xf32, #tpu.memory_space<vmem>>, vector<1x4x16x16xf32>
    %3 = vector.shape_cast %2 : vector<1x4x16x16xf32> to vector<4x16x16xf32>
    %c0_6 = arith.constant 0 : index
    %c3 = arith.constant 3 : index
    %c3_7 = arith.constant 3 : index
    %4 = vector.load %arg9[%c0_6, %c3, %c3_7] : memref<4x22x22xf32, #tpu.memory_space<vmem>>, vector<4x16x16xf32>
    tpu.vector_store %arg9[%c0_6, %c3, %c3_7], %3 {strides = array<i32>} : memref<4x22x22xf32, #tpu.memory_space<vmem>>, vector<4x16x16xf32>,
    %c0_8 = arith.constant 0 : index
    %c0_9 = arith.constant 0 : index
    %c0_10 = arith.constant 0 : index
    %5 = vector.load %arg9[%c0_8, %c0_9, %c0_10] : memref<4x22x22xf32, #tpu.memory_space<vmem>>, vector<1x16x16xf32>
    %6 = vector.shape_cast %5 : vector<1x16x16xf32> to vector<16x16xf32>
    %c0_11 = arith.constant 0 : index
    %7 = memref.load %arg2[%c0_11] : memref<196xf32, #tpu.memory_space<smem>>
    %8 = vector.broadcast %7 : f32 to vector<16x16xf32>
    %9 = arith.mulf %6, %8 : vector<16x16xf32>
    %c0_12 = arith.constant 0 : index
    %c0_13 = arith.constant 0 : index
    %c1 = arith.constant 1 : index
    %10 = vector.load %arg9[%c0_12, %c0_13, %c1] : memref<4x22x22xf32, #tpu.memory_space<vmem>>, vector<1x16x16xf32>
    %11 = vector.shape_cast %10 : vector<1x16x16xf32> to vector<16x16xf32>
    %c1_14 = arith.constant 1 : index
    %12 = memref.load %arg2[%c1_14] : memref<196xf32, #tpu.memory_space<smem>>
    %13 = vector.broadcast %12 : f32 to vector<16x16xf32>
    %14 = arith.mulf %11, %13 : vector<16x16xf32>
    %15 = arith.addf %9, %14 : vector<16x16xf32>
    %c0_15 = arith.constant 0 : index
    %c0_16 = arith.constant 0 : index
    %c2 = arith.constant 2 : index
    %16 = vector.load %arg9[%c0_15, %c0_16, %c2] : memref<4x22x22xf32, #tpu.memory_space<vmem>>, vector<1x16x16xf32>
    %17 = vector.shape_cast %16 : vector<1x16x16xf32> to vector<16x16xf32>
    %c2_17 = arith.constant 2 : index
    %18 = memref.load %arg2[%c2_17] : memref<196xf32, #tpu.memory_space<smem>>
    %19 = vector.broadcast %18 : f32 to vector<16x16xf32>
    %20 = arith.mulf %17, %19 : vector<16x16xf32>
    %21 = arith.addf %15, %20 : vector<16x16xf32>
    %c0_18 = arith.constant 0 : index
    %c0_19 = arith.constant 0 : index
    %c3_20 = arith.constant 3 : index
    %22 = vector.load %arg9[%c0_18, %c0_19, %c3_20] : memref<4x22x22xf32, #tpu.memory_space<vmem>>, vector<1x16x16xf32>
    %23 = vector.shape_cast %22 : vector<1x16x16xf32> to vector<16x16xf32>
    %c3_21 = arith.constant 3 : index
    %24 = memref.load %arg2[%c3_21] : memref<196xf32, #tpu.memory_space<smem>>
    %25 = vector.broadcast %24 : f32 to vector<16x16xf32>
    %26 = arith.mulf %23, %25 : vector<16x16xf32>
    %27 = arith.addf %21, %26 : vector<16x16xf32>
    %c0_22 = arith.constant 0 : index
    %c0_23 = arith.constant 0 : index
    %c4 = arith.constant 4 : index
    %28 = vector.load %arg9[%c0_22, %c0_23, %c4] : memref<4x22x22xf32, #tpu.memory_space<vmem>>, vector<1x16x16xf32>
    %29 = vector.shape_cast %28 : vector<1x16x16xf32> to vector<16x16xf32>
    %c4_24 = arith.constant 4 : index
    %30 = memref.load %arg2[%c4_24] : memref<196xf32, #tpu.memory_space<smem>>
    %31 = vector.broadcast %30 : f32 to vector<16x16xf32>
    %32 = arith.mulf %29, %31 : vector<16x16xf32>
    %33 = arith.addf %27, %32 : vector<16x16xf32>
    %c0_25 = arith.constant 0 : index
    %c0_26 = arith.constant 0 : index
    %c5 = arith.constant 5 : index
    %34 = vector.load %arg9[%c0_25, %c0_26, %c5] : memref<4x22x22xf32, #tpu.memory_space<vmem>>, vector<1x16x16xf32>
    %35 = vector.shape_cast %34 : vector<1x16x16xf32> to vector<16x16xf32>
    %c5_27 = arith.constant 5 : index
    %36 = memref.load %arg2[%c5_27] : memref<196xf32, #tpu.memory_space<smem>>
    %37 = vector.broadcast %36 : f32 to vector<16x16xf32>
    %38 = arith.mulf %35, %37 : vector<16x16xf32>
    %39 = arith.addf %33, %38 : vector<16x16xf32>
    %c0_28 = arith.constant 0 : index
    %c0_29 = arith.constant 0 : index
    %c6 = arith.constant 6 : index
    %40 = vector.load %arg9[%c0_28, %c0_29, %c6] : memref<4x22x22xf32, #tpu.memory_space<vmem>>, vector<1x16x16xf32>
    %41 = vector.shape_cast %40 : vector<1x16x16xf32> to vector<16x16xf32>
    %c6_30 = arith.constant 6 : index
    %42 = memref.load %arg2[%c6_30] : memref<196xf32, #tpu.memory_space<smem>>
    %43 = vector.broadcast %42 : f32 to vector<16x16xf32>
    %44 = arith.mulf %41, %43 : vector<16x16xf32>
    %45 = arith.addf %39, %44 : vector<16x16xf32>
    %c0_31 = arith.constant 0 : index
    %c1_32 = arith.constant 1 : index
    %c0_33 = arith.constant 0 : index
    %46 = vector.load %arg9[%c0_31, %c1_32, %c0_33] : memref<4x22x22xf32, #tpu.memory_space<vmem>>, vector<1x16x16xf32>
    %47 = vector.shape_cast %46 : vector<1x16x16xf32> to vector<16x16xf32>
    %c7 = arith.constant 7 : index
    %48 = memref.load %arg2[%c7] : memref<196xf32, #tpu.memory_space<smem>>
    %49 = vector.broadcast %48 : f32 to vector<16x16xf32>
    %50 = arith.mulf %47, %49 : vector<16x16xf32>
    %51 = arith.addf %45, %50 : vector<16x16xf32>
    %c0_34 = arith.constant 0 : index
    %c1_35 = arith.constant 1 : index
    %c1_36 = arith.constant 1 : index
    %52 = vector.load %arg9[%c0_34, %c1_35, %c1_36] : memref<4x22x22xf32, #tpu.memory_space<vmem>>, vector<1x16x16xf32>
    %53 = vector.shape_cast %52 : vector<1x16x16xf32> to vector<16x16xf32>
    %c8 = arith.constant 8 : index
    %54 = memref.load %arg2[%c8] : memref<196xf32, #tpu.memory_space<smem>>
    %55 = vector.broadcast %54 : f32 to vector<16x16xf32>
    %56 = arith.mulf %53, %55 : vector<16x16xf32>
    %57 = arith.addf %51, %56 : vector<16x16xf32>
    %c0_37 = arith.constant 0 : index
    %c1_38 = arith.constant 1 : index
    %c2_39 = arith.constant 2 : index
    %58 = vector.load %arg9[%c0_37, %c1_38, %c2_39] : memref<4x22x22xf32, #tpu.memory_space<vmem>>, vector<1x16x16xf32>
    %59 = vector.shape_cast %58 : vector<1x16x16xf32> to vector<16x16xf32>
    %c9 = arith.constant 9 : index
    %60 = memref.load %arg2[%c9] : memref<196xf32, #tpu.memory_space<smem>>
    %61 = vector.broadcast %60 : f32 to vector<16x16xf32>
    %62 = arith.mulf %59, %61 : vector<16x16xf32>
    %63 = arith.addf %57, %62 : vector<16x16xf32>
    %c0_40 = arith.constant 0 : index
    %c1_41 = arith.constant 1 : index
    %c3_42 = arith.constant 3 : index
    %64 = vector.load %arg9[%c0_40, %c1_41, %c3_42] : memref<4x22x22xf32, #tpu.memory_space<vmem>>, vector<1x16x16xf32>
    %65 = vector.shape_cast %64 : vector<1x16x16xf32> to vector<16x16xf32>
    %c10 = arith.constant 10 : index
    %66 = memref.load %arg2[%c10] : memref<196xf32, #tpu.memory_space<smem>>
    %67 = vector.broadcast %66 : f32 to vector<16x16xf32>
    %68 = arith.mulf %65, %67 : vector<16x16xf32>
    %69 = arith.addf %63, %68 : vector<16x16xf32>
    %c0_43 = arith.constant 0 : index
    %c1_44 = arith.constant 1 : index
    %c4_45 = arith.constant 4 : index
    %70 = vector.load %arg9[%c0_43, %c1_44, %c4_45] : memref<4x22x22xf32, #tpu.memory_space<vmem>>, vector<1x16x16xf32>
    %71 = vector.shape_cast %70 : vector<1x16x16xf32> to vector<16x16xf32>
    %c11 = arith.constant 11 : index
    %72 = memref.load %arg2[%c11] : memref<196xf32, #tpu.memory_space<smem>>
    %73 = vector.broadcast %72 : f32 to vector<16x16xf32>
    %74 = arith.mulf %71, %73 : vector<16x16xf32>
    %75 = arith.addf %69, %74 : vector<16x16xf32>
    %c0_46 = arith.constant 0 : index
    %c1_47 = arith.constant 1 : index
    %c5_48 = arith.constant 5 : index
    %76 = vector.load %arg9[%c0_46, %c1_47, %c5_48] : memref<4x22x22xf32, #tpu.memory_space<vmem>>, vector<1x16x16xf32>
    %77 = vector.shape_cast %76 : vector<1x16x16xf32> to vector<16x16xf32>
    %c12 = arith.constant 12 : index
    %78 = memref.load %arg2[%c12] : memref<196xf32, #tpu.memory_space<smem>>
    %79 = vector.broadcast %78 : f32 to vector<16x16xf32>
    %80 = arith.mulf %77, %79 : vector<16x16xf32>
    %81 = arith.addf %75, %80 : vector<16x16xf32>
    %c0_49 = arith.constant 0 : index
    %c1_50 = arith.constant 1 : index
    %c6_51 = arith.constant 6 : index
    %82 = vector.load %arg9[%c0_49, %c1_50, %c6_51] : memref<4x22x22xf32, #tpu.memory_space<vmem>>, vector<1x16x16xf32>
    %83 = vector.shape_cast %82 : vector<1x16x16xf32> to vector<16x16xf32>
    %c13 = arith.constant 13 : index
    %84 = memref.load %arg2[%c13] : memref<196xf32, #tpu.memory_space<smem>>
    %85 = vector.broadcast %84 : f32 to vector<16x16xf32>
    %86 = arith.mulf %83, %85 : vector<16x16xf32>
    %87 = arith.addf %81, %86 : vector<16x16xf32>
    %c0_52 = arith.constant 0 : index
    %c2_53 = arith.constant 2 : index
    %c0_54 = arith.constant 0 : index
    %88 = vector.load %arg9[%c0_52, %c2_53, %c0_54] : memref<4x22x22xf32, #tpu.memory_space<vmem>>, vector<1x16x16xf32>
    %89 = vector.shape_cast %88 : vector<1x16x16xf32> to vector<16x16xf32>
    %c14 = arith.constant 14 : index
    %90 = memref.load %arg2[%c14] : memref<196xf32, #tpu.memory_space<smem>>
    %91 = vector.broadcast %90 : f32 to vector<16x16xf32>
    %92 = arith.mulf %89, %91 : vector<16x16xf32>
    %93 = arith.addf %87, %92 : vector<16x16xf32>
    %c0_55 = arith.constant 0 : index
    %c2_56 = arith.constant 2 : index
    %c1_57 = arith.constant 1 : index
    %94 = vector.load %arg9[%c0_55, %c2_56, %c1_57] : memref<4x22x22xf32, #tpu.memory_space<vmem>>, vector<1x16x16xf32>
    %95 = vector.shape_cast %94 : vector<1x16x16xf32> to vector<16x16xf32>
    %c15 = arith.constant 15 : index
    %96 = memref.load %arg2[%c15] : memref<196xf32, #tpu.memory_space<smem>>
    %97 = vector.broadcast %96 : f32 to vector<16x16xf32>
    %98 = arith.mulf %95, %97 : vector<16x16xf32>
    %99 = arith.addf %93, %98 : vector<16x16xf32>
    %c0_58 = arith.constant 0 : index
    %c2_59 = arith.constant 2 : index
    %c2_60 = arith.constant 2 : index
    %100 = vector.load %arg9[%c0_58, %c2_59, %c2_60] : memref<4x22x22xf32, #tpu.memory_space<vmem>>, vector<1x16x16xf32>
    %101 = vector.shape_cast %100 : vector<1x16x16xf32> to vector<16x16xf32>
    %c16 = arith.constant 16 : index
    %102 = memref.load %arg2[%c16] : memref<196xf32, #tpu.memory_space<smem>>
    %103 = vector.broadcast %102 : f32 to vector<16x16xf32>
    %104 = arith.mulf %101, %103 : vector<16x16xf32>
    %105 = arith.addf %99, %104 : vector<16x16xf32>
    %c0_61 = arith.constant 0 : index
    %c2_62 = arith.constant 2 : index
    %c3_63 = arith.constant 3 : index
    %106 = vector.load %arg9[%c0_61, %c2_62, %c3_63] : memref<4x22x22xf32, #tpu.memory_space<vmem>>, vector<1x16x16xf32>
    %107 = vector.shape_cast %106 : vector<1x16x16xf32> to vector<16x16xf32>
    %c17 = arith.constant 17 : index
    %108 = memref.load %arg2[%c17] : memref<196xf32, #tpu.memory_space<smem>>
    %109 = vector.broadcast %108 : f32 to vector<16x16xf32>
    %110 = arith.mulf %107, %109 : vector<16x16xf32>
    %111 = arith.addf %105, %110 : vector<16x16xf32>
    %c0_64 = arith.constant 0 : index
    %c2_65 = arith.constant 2 : index
    %c4_66 = arith.constant 4 : index
    %112 = vector.load %arg9[%c0_64, %c2_65, %c4_66] : memref<4x22x22xf32, #tpu.memory_space<vmem>>, vector<1x16x16xf32>
    %113 = vector.shape_cast %112 : vector<1x16x16xf32> to vector<16x16xf32>
    %c18 = arith.constant 18 : index
    %114 = memref.load %arg2[%c18] : memref<196xf32, #tpu.memory_space<smem>>
    %115 = vector.broadcast %114 : f32 to vector<16x16xf32>
    %116 = arith.mulf %113, %115 : vector<16x16xf32>
    %117 = arith.addf %111, %116 : vector<16x16xf32>
    %c0_67 = arith.constant 0 : index
    %c2_68 = arith.constant 2 : index
    %c5_69 = arith.constant 5 : index
    %118 = vector.load %arg9[%c0_67, %c2_68, %c5_69] : memref<4x22x22xf32, #tpu.memory_space<vmem>>, vector<1x16x16xf32>
    %119 = vector.shape_cast %118 : vector<1x16x16xf32> to vector<16x16xf32>
    %c19 = arith.constant 19 : index
    %120 = memref.load %arg2[%c19] : memref<196xf32, #tpu.memory_space<smem>>
    %121 = vector.broadcast %120 : f32 to vector<16x16xf32>
    %122 = arith.mulf %119, %121 : vector<16x16xf32>
    %123 = arith.addf %117, %122 : vector<16x16xf32>
    %c0_70 = arith.constant 0 : index
    %c2_71 = arith.constant 2 : index
    %c6_72 = arith.constant 6 : index
    %124 = vector.load %arg9[%c0_70, %c2_71, %c6_72] : memref<4x22x22xf32, #tpu.memory_space<vmem>>, vector<1x16x16xf32>
    %125 = vector.shape_cast %124 : vector<1x16x16xf32> to vector<16x16xf32>
    %c20 = arith.constant 20 : index
    %126 = memref.load %arg2[%c20] : memref<196xf32, #tpu.memory_space<smem>>
    %127 = vector.broadcast %126 : f32 to vector<16x16xf32>
    %128 = arith.mulf %125, %127 : vector<16x16xf32>
    %129 = arith.addf %123, %128 : vector<16x16xf32>
    %c0_73 = arith.constant 0 : index
    %c3_74 = arith.constant 3 : index
    %c0_75 = arith.constant 0 : index
    %130 = vector.load %arg9[%c0_73, %c3_74, %c0_75] : memref<4x22x22xf32, #tpu.memory_space<vmem>>, vector<1x16x16xf32>
    %131 = vector.shape_cast %130 : vector<1x16x16xf32> to vector<16x16xf32>
    %c21 = arith.constant 21 : index
    %132 = memref.load %arg2[%c21] : memref<196xf32, #tpu.memory_space<smem>>
    %133 = vector.broadcast %132 : f32 to vector<16x16xf32>
    %134 = arith.mulf %131, %133 : vector<16x16xf32>
    %135 = arith.addf %129, %134 : vector<16x16xf32>
    %c0_76 = arith.constant 0 : index
    %c3_77 = arith.constant 3 : index
    %c1_78 = arith.constant 1 : index
    %136 = vector.load %arg9[%c0_76, %c3_77, %c1_78] : memref<4x22x22xf32, #tpu.memory_space<vmem>>, vector<1x16x16xf32>
    %137 = vector.shape_cast %136 : vector<1x16x16xf32> to vector<16x16xf32>
    %c22 = arith.constant 22 : index
    %138 = memref.load %arg2[%c22] : memref<196xf32, #tpu.memory_space<smem>>
    %139 = vector.broadcast %138 : f32 to vector<16x16xf32>
    %140 = arith.mulf %137, %139 : vector<16x16xf32>
    %141 = arith.addf %135, %140 : vector<16x16xf32>
    %c0_79 = arith.constant 0 : index
    %c3_80 = arith.constant 3 : index
    %c2_81 = arith.constant 2 : index
    %142 = vector.load %arg9[%c0_79, %c3_80, %c2_81] : memref<4x22x22xf32, #tpu.memory_space<vmem>>, vector<1x16x16xf32>
    %143 = vector.shape_cast %142 : vector<1x16x16xf32> to vector<16x16xf32>
    %c23 = arith.constant 23 : index
    %144 = memref.load %arg2[%c23] : memref<196xf32, #tpu.memory_space<smem>>
    %145 = vector.broadcast %144 : f32 to vector<16x16xf32>
    %146 = arith.mulf %143, %145 : vector<16x16xf32>
    %147 = arith.addf %141, %146 : vector<16x16xf32>
    %c0_82 = arith.constant 0 : index
    %c3_83 = arith.constant 3 : index
    %c3_84 = arith.constant 3 : index
    %148 = vector.load %arg9[%c0_82, %c3_83, %c3_84] : memref<4x22x22xf32, #tpu.memory_space<vmem>>, vector<1x16x16xf32>
    %149 = vector.shape_cast %148 : vector<1x16x16xf32> to vector<16x16xf32>
    %c24 = arith.constant 24 : index
    %150 = memref.load %arg2[%c24] : memref<196xf32, #tpu.memory_space<smem>>
    %151 = vector.broadcast %150 : f32 to vector<16x16xf32>
    %152 = arith.mulf %149, %151 : vector<16x16xf32>
    %153 = arith.addf %147, %152 : vector<16x16xf32>
    %c0_85 = arith.constant 0 : index
    %c3_86 = arith.constant 3 : index
    %c4_87 = arith.constant 4 : index
    %154 = vector.load %arg9[%c0_85, %c3_86, %c4_87] : memref<4x22x22xf32, #tpu.memory_space<vmem>>, vector<1x16x16xf32>
    %155 = vector.shape_cast %154 : vector<1x16x16xf32> to vector<16x16xf32>
    %c25 = arith.constant 25 : index
    %156 = memref.load %arg2[%c25] : memref<196xf32, #tpu.memory_space<smem>>
    %157 = vector.broadcast %156 : f32 to vector<16x16xf32>
    %158 = arith.mulf %155, %157 : vector<16x16xf32>
    %159 = arith.addf %153, %158 : vector<16x16xf32>
    %c0_88 = arith.constant 0 : index
    %c3_89 = arith.constant 3 : index
    %c5_90 = arith.constant 5 : index
    %160 = vector.load %arg9[%c0_88, %c3_89, %c5_90] : memref<4x22x22xf32, #tpu.memory_space<vmem>>, vector<1x16x16xf32>
    %161 = vector.shape_cast %160 : vector<1x16x16xf32> to vector<16x16xf32>
    %c26 = arith.constant 26 : index
    %162 = memref.load %arg2[%c26] : memref<196xf32, #tpu.memory_space<smem>>
    %163 = vector.broadcast %162 : f32 to vector<16x16xf32>
    %164 = arith.mulf %161, %163 : vector<16x16xf32>
    %165 = arith.addf %159, %164 : vector<16x16xf32>
    %c0_91 = arith.constant 0 : index
    %c3_92 = arith.constant 3 : index
    %c6_93 = arith.constant 6 : index
    %166 = vector.load %arg9[%c0_91, %c3_92, %c6_93] : memref<4x22x22xf32, #tpu.memory_space<vmem>>, vector<1x16x16xf32>
    %167 = vector.shape_cast %166 : vector<1x16x16xf32> to vector<16x16xf32>
    %c27 = arith.constant 27 : index
    %168 = memref.load %arg2[%c27] : memref<196xf32, #tpu.memory_space<smem>>
    %169 = vector.broadcast %168 : f32 to vector<16x16xf32>
    %170 = arith.mulf %167, %169 : vector<16x16xf32>
    %171 = arith.addf %165, %170 : vector<16x16xf32>
    %c0_94 = arith.constant 0 : index
    %c4_95 = arith.constant 4 : index
    %c0_96 = arith.constant 0 : index
    %172 = vector.load %arg9[%c0_94, %c4_95, %c0_96] : memref<4x22x22xf32, #tpu.memory_space<vmem>>, vector<1x16x16xf32>
    %173 = vector.shape_cast %172 : vector<1x16x16xf32> to vector<16x16xf32>
    %c28 = arith.constant 28 : index
    %174 = memref.load %arg2[%c28] : memref<196xf32, #tpu.memory_space<smem>>
    %175 = vector.broadcast %174 : f32 to vector<16x16xf32>
    %176 = arith.mulf %173, %175 : vector<16x16xf32>
    %177 = arith.addf %171, %176 : vector<16x16xf32>
    %c0_97 = arith.constant 0 : index
    %c4_98 = arith.constant 4 : index
    %c1_99 = arith.constant 1 : index
    %178 = vector.load %arg9[%c0_97, %c4_98, %c1_99] : memref<4x22x22xf32, #tpu.memory_space<vmem>>, vector<1x16x16xf32>
    %179 = vector.shape_cast %178 : vector<1x16x16xf32> to vector<16x16xf32>
    %c29 = arith.constant 29 : index
    %180 = memref.load %arg2[%c29] : memref<196xf32, #tpu.memory_space<smem>>
    %181 = vector.broadcast %180 : f32 to vector<16x16xf32>
    %182 = arith.mulf %179, %181 : vector<16x16xf32>
    %183 = arith.addf %177, %182 : vector<16x16xf32>
    %c0_100 = arith.constant 0 : index
    %c4_101 = arith.constant 4 : index
    %c2_102 = arith.constant 2 : index
    %184 = vector.load %arg9[%c0_100, %c4_101, %c2_102] : memref<4x22x22xf32, #tpu.memory_space<vmem>>, vector<1x16x16xf32>
    %185 = vector.shape_cast %184 : vector<1x16x16xf32> to vector<16x16xf32>
    %c30 = arith.constant 30 : index
    %186 = memref.load %arg2[%c30] : memref<196xf32, #tpu.memory_space<smem>>
    %187 = vector.broadcast %186 : f32 to vector<16x16xf32>
    %188 = arith.mulf %185, %187 : vector<16x16xf32>
    %189 = arith.addf %183, %188 : vector<16x16xf32>
    %c0_103 = arith.constant 0 : index
    %c4_104 = arith.constant 4 : index
    %c3_105 = arith.constant 3 : index
    %190 = vector.load %arg9[%c0_103, %c4_104, %c3_105] : memref<4x22x22xf32, #tpu.memory_space<vmem>>, vector<1x16x16xf32>
    %191 = vector.shape_cast %190 : vector<1x16x16xf32> to vector<16x16xf32>
    %c31 = arith.constant 31 : index
    %192 = memref.load %arg2[%c31] : memref<196xf32, #tpu.memory_space<smem>>
    %193 = vector.broadcast %192 : f32 to vector<16x16xf32>
    %194 = arith.mulf %191, %193 : vector<16x16xf32>
    %195 = arith.addf %189, %194 : vector<16x16xf32>
    %c0_106 = arith.constant 0 : index
    %c4_107 = arith.constant 4 : index
    %c4_108 = arith.constant 4 : index
    %196 = vector.load %arg9[%c0_106, %c4_107, %c4_108] : memref<4x22x22xf32, #tpu.memory_space<vmem>>, vector<1x16x16xf32>
    %197 = vector.shape_cast %196 : vector<1x16x16xf32> to vector<16x16xf32>
    %c32 = arith.constant 32 : index
    %198 = memref.load %arg2[%c32] : memref<196xf32, #tpu.memory_space<smem>>
    %199 = vector.broadcast %198 : f32 to vector<16x16xf32>
    %200 = arith.mulf %197, %199 : vector<16x16xf32>
    %201 = arith.addf %195, %200 : vector<16x16xf32>
    %c0_109 = arith.constant 0 : index
    %c4_110 = arith.constant 4 : index
    %c5_111 = arith.constant 5 : index
    %202 = vector.load %arg9[%c0_109, %c4_110, %c5_111] : memref<4x22x22xf32, #tpu.memory_space<vmem>>, vector<1x16x16xf32>
    %203 = vector.shape_cast %202 : vector<1x16x16xf32> to vector<16x16xf32>
    %c33 = arith.constant 33 : index
    %204 = memref.load %arg2[%c33] : memref<196xf32, #tpu.memory_space<smem>>
    %205 = vector.broadcast %204 : f32 to vector<16x16xf32>
    %206 = arith.mulf %203, %205 : vector<16x16xf32>
    %207 = arith.addf %201, %206 : vector<16x16xf32>
    %c0_112 = arith.constant 0 : index
    %c4_113 = arith.constant 4 : index
    %c6_114 = arith.constant 6 : index
    %208 = vector.load %arg9[%c0_112, %c4_113, %c6_114] : memref<4x22x22xf32, #tpu.memory_space<vmem>>, vector<1x16x16xf32>
    %209 = vector.shape_cast %208 : vector<1x16x16xf32> to vector<16x16xf32>
    %c34 = arith.constant 34 : index
    %210 = memref.load %arg2[%c34] : memref<196xf32, #tpu.memory_space<smem>>
    %211 = vector.broadcast %210 : f32 to vector<16x16xf32>
    %212 = arith.mulf %209, %211 : vector<16x16xf32>
    %213 = arith.addf %207, %212 : vector<16x16xf32>
    %c0_115 = arith.constant 0 : index
    %c5_116 = arith.constant 5 : index
    %c0_117 = arith.constant 0 : index
    %214 = vector.load %arg9[%c0_115, %c5_116, %c0_117] : memref<4x22x22xf32, #tpu.memory_space<vmem>>, vector<1x16x16xf32>
    %215 = vector.shape_cast %214 : vector<1x16x16xf32> to vector<16x16xf32>
    %c35 = arith.constant 35 : index
    %216 = memref.load %arg2[%c35] : memref<196xf32, #tpu.memory_space<smem>>
    %217 = vector.broadcast %216 : f32 to vector<16x16xf32>
    %218 = arith.mulf %215, %217 : vector<16x16xf32>
    %219 = arith.addf %213, %218 : vector<16x16xf32>
    %c0_118 = arith.constant 0 : index
    %c5_119 = arith.constant 5 : index
    %c1_120 = arith.constant 1 : index
    %220 = vector.load %arg9[%c0_118, %c5_119, %c1_120] : memref<4x22x22xf32, #tpu.memory_space<vmem>>, vector<1x16x16xf32>
    %221 = vector.shape_cast %220 : vector<1x16x16xf32> to vector<16x16xf32>
    %c36 = arith.constant 36 : index
    %222 = memref.load %arg2[%c36] : memref<196xf32, #tpu.memory_space<smem>>
    %223 = vector.broadcast %222 : f32 to vector<16x16xf32>
    %224 = arith.mulf %221, %223 : vector<16x16xf32>
    %225 = arith.addf %219, %224 : vector<16x16xf32>
    %c0_121 = arith.constant 0 : index
    %c5_122 = arith.constant 5 : index
    %c2_123 = arith.constant 2 : index
    %226 = vector.load %arg9[%c0_121, %c5_122, %c2_123] : memref<4x22x22xf32, #tpu.memory_space<vmem>>, vector<1x16x16xf32>
    %227 = vector.shape_cast %226 : vector<1x16x16xf32> to vector<16x16xf32>
    %c37 = arith.constant 37 : index
    %228 = memref.load %arg2[%c37] : memref<196xf32, #tpu.memory_space<smem>>
    %229 = vector.broadcast %228 : f32 to vector<16x16xf32>
    %230 = arith.mulf %227, %229 : vector<16x16xf32>
    %231 = arith.addf %225, %230 : vector<16x16xf32>
    %c0_124 = arith.constant 0 : index
    %c5_125 = arith.constant 5 : index
    %c3_126 = arith.constant 3 : index
    %232 = vector.load %arg9[%c0_124, %c5_125, %c3_126] : memref<4x22x22xf32, #tpu.memory_space<vmem>>, vector<1x16x16xf32>
    %233 = vector.shape_cast %232 : vector<1x16x16xf32> to vector<16x16xf32>
    %c38 = arith.constant 38 : index
    %234 = memref.load %arg2[%c38] : memref<196xf32, #tpu.memory_space<smem>>
    %235 = vector.broadcast %234 : f32 to vector<16x16xf32>
    %236 = arith.mulf %233, %235 : vector<16x16xf32>
    %237 = arith.addf %231, %236 : vector<16x16xf32>
    %c0_127 = arith.constant 0 : index
    %c5_128 = arith.constant 5 : index
    %c4_129 = arith.constant 4 : index
    %238 = vector.load %arg9[%c0_127, %c5_128, %c4_129] : memref<4x22x22xf32, #tpu.memory_space<vmem>>, vector<1x16x16xf32>
    %239 = vector.shape_cast %238 : vector<1x16x16xf32> to vector<16x16xf32>
    %c39 = arith.constant 39 : index
    %240 = memref.load %arg2[%c39] : memref<196xf32, #tpu.memory_space<smem>>
    %241 = vector.broadcast %240 : f32 to vector<16x16xf32>
    %242 = arith.mulf %239, %241 : vector<16x16xf32>
    %243 = arith.addf %237, %242 : vector<16x16xf32>
    %c0_130 = arith.constant 0 : index
    %c5_131 = arith.constant 5 : index
    %c5_132 = arith.constant 5 : index
    %244 = vector.load %arg9[%c0_130, %c5_131, %c5_132] : memref<4x22x22xf32, #tpu.memory_space<vmem>>, vector<1x16x16xf32>
    %245 = vector.shape_cast %244 : vector<1x16x16xf32> to vector<16x16xf32>
    %c40 = arith.constant 40 : index
    %246 = memref.load %arg2[%c40] : memref<196xf32, #tpu.memory_space<smem>>
    %247 = vector.broadcast %246 : f32 to vector<16x16xf32>
    %248 = arith.mulf %245, %247 : vector<16x16xf32>
    %249 = arith.addf %243, %248 : vector<16x16xf32>
    %c0_133 = arith.constant 0 : index
    %c5_134 = arith.constant 5 : index
    %c6_135 = arith.constant 6 : index
    %250 = vector.load %arg9[%c0_133, %c5_134, %c6_135] : memref<4x22x22xf32, #tpu.memory_space<vmem>>, vector<1x16x16xf32>
    %251 = vector.shape_cast %250 : vector<1x16x16xf32> to vector<16x16xf32>
    %c41 = arith.constant 41 : index
    %252 = memref.load %arg2[%c41] : memref<196xf32, #tpu.memory_space<smem>>
    %253 = vector.broadcast %252 : f32 to vector<16x16xf32>
    %254 = arith.mulf %251, %253 : vector<16x16xf32>
    %255 = arith.addf %249, %254 : vector<16x16xf32>
    %c0_136 = arith.constant 0 : index
    %c6_137 = arith.constant 6 : index
    %c0_138 = arith.constant 0 : index
    %256 = vector.load %arg9[%c0_136, %c6_137, %c0_138] : memref<4x22x22xf32, #tpu.memory_space<vmem>>, vector<1x16x16xf32>
    %257 = vector.shape_cast %256 : vector<1x16x16xf32> to vector<16x16xf32>
    %c42 = arith.constant 42 : index
    %258 = memref.load %arg2[%c42] : memref<196xf32, #tpu.memory_space<smem>>
    %259 = vector.broadcast %258 : f32 to vector<16x16xf32>
    %260 = arith.mulf %257, %259 : vector<16x16xf32>
    %261 = arith.addf %255, %260 : vector<16x16xf32>
    %c0_139 = arith.constant 0 : index
    %c6_140 = arith.constant 6 : index
    %c1_141 = arith.constant 1 : index
    %262 = vector.load %arg9[%c0_139, %c6_140, %c1_141] : memref<4x22x22xf32, #tpu.memory_space<vmem>>, vector<1x16x16xf32>
    %263 = vector.shape_cast %262 : vector<1x16x16xf32> to vector<16x16xf32>
    %c43 = arith.constant 43 : index
    %264 = memref.load %arg2[%c43] : memref<196xf32, #tpu.memory_space<smem>>
    %265 = vector.broadcast %264 : f32 to vector<16x16xf32>
    %266 = arith.mulf %263, %265 : vector<16x16xf32>
    %267 = arith.addf %261, %266 : vector<16x16xf32>
    %c0_142 = arith.constant 0 : index
    %c6_143 = arith.constant 6 : index
    %c2_144 = arith.constant 2 : index
    %268 = vector.load %arg9[%c0_142, %c6_143, %c2_144] : memref<4x22x22xf32, #tpu.memory_space<vmem>>, vector<1x16x16xf32>
    %269 = vector.shape_cast %268 : vector<1x16x16xf32> to vector<16x16xf32>
    %c44 = arith.constant 44 : index
    %270 = memref.load %arg2[%c44] : memref<196xf32, #tpu.memory_space<smem>>
    %271 = vector.broadcast %270 : f32 to vector<16x16xf32>
    %272 = arith.mulf %269, %271 : vector<16x16xf32>
    %273 = arith.addf %267, %272 : vector<16x16xf32>
    %c0_145 = arith.constant 0 : index
    %c6_146 = arith.constant 6 : index
    %c3_147 = arith.constant 3 : index
    %274 = vector.load %arg9[%c0_145, %c6_146, %c3_147] : memref<4x22x22xf32, #tpu.memory_space<vmem>>, vector<1x16x16xf32>
    %275 = vector.shape_cast %274 : vector<1x16x16xf32> to vector<16x16xf32>
    %c45 = arith.constant 45 : index
    %276 = memref.load %arg2[%c45] : memref<196xf32, #tpu.memory_space<smem>>
    %277 = vector.broadcast %276 : f32 to vector<16x16xf32>
    %278 = arith.mulf %275, %277 : vector<16x16xf32>
    %279 = arith.addf %273, %278 : vector<16x16xf32>
    %c0_148 = arith.constant 0 : index
    %c6_149 = arith.constant 6 : index
    %c4_150 = arith.constant 4 : index
    %280 = vector.load %arg9[%c0_148, %c6_149, %c4_150] : memref<4x22x22xf32, #tpu.memory_space<vmem>>, vector<1x16x16xf32>
    %281 = vector.shape_cast %280 : vector<1x16x16xf32> to vector<16x16xf32>
    %c46 = arith.constant 46 : index
    %282 = memref.load %arg2[%c46] : memref<196xf32, #tpu.memory_space<smem>>
    %283 = vector.broadcast %282 : f32 to vector<16x16xf32>
    %284 = arith.mulf %281, %283 : vector<16x16xf32>
    %285 = arith.addf %279, %284 : vector<16x16xf32>
    %c0_151 = arith.constant 0 : index
    %c6_152 = arith.constant 6 : index
    %c5_153 = arith.constant 5 : index
    %286 = vector.load %arg9[%c0_151, %c6_152, %c5_153] : memref<4x22x22xf32, #tpu.memory_space<vmem>>, vector<1x16x16xf32>
    %287 = vector.shape_cast %286 : vector<1x16x16xf32> to vector<16x16xf32>
    %c47 = arith.constant 47 : index
    %288 = memref.load %arg2[%c47] : memref<196xf32, #tpu.memory_space<smem>>
    %289 = vector.broadcast %288 : f32 to vector<16x16xf32>
    %290 = arith.mulf %287, %289 : vector<16x16xf32>
    %291 = arith.addf %285, %290 : vector<16x16xf32>
    %c0_154 = arith.constant 0 : index
    %c6_155 = arith.constant 6 : index
    %c6_156 = arith.constant 6 : index
    %292 = vector.load %arg9[%c0_154, %c6_155, %c6_156] : memref<4x22x22xf32, #tpu.memory_space<vmem>>, vector<1x16x16xf32>
    %293 = vector.shape_cast %292 : vector<1x16x16xf32> to vector<16x16xf32>
    %c48 = arith.constant 48 : index
    %294 = memref.load %arg2[%c48] : memref<196xf32, #tpu.memory_space<smem>>
    %295 = vector.broadcast %294 : f32 to vector<16x16xf32>
    %296 = arith.mulf %293, %295 : vector<16x16xf32>
    %297 = arith.addf %291, %296 : vector<16x16xf32>
    %c0_157 = arith.constant 0 : index
    %298 = memref.load %arg3[%c0_157] : memref<4xf32, #tpu.memory_space<smem>>
    %299 = vector.broadcast %298 : f32 to vector<16x16xf32>
    %300 = arith.mulf %297, %299 : vector<16x16xf32>
    %c0_158 = arith.constant 0 : index
    %301 = memref.load %arg4[%c0_158] : memref<4xf32, #tpu.memory_space<smem>>
    %302 = vector.broadcast %301 : f32 to vector<16x16xf32>
    %303 = arith.addf %300, %302 : vector<16x16xf32>
    %cst_159 = arith.constant 0.000000e+00 : f32
    %304 = vector.broadcast %cst_159 : f32 to vector<16x16xf32>
    %305 = arith.maximumf %303, %304 : vector<16x16xf32>
    %c0_160 = arith.constant 0 : index
    %c0_161 = arith.constant 0 : index
    %c0_162 = arith.constant 0 : index
    %306 = vector.load %arg10[%c0_160, %c0_161, %c0_162] : memref<4x16x16xf32, #tpu.memory_space<vmem>>, vector<1x16x16xf32>
    %307 = vector.shape_cast %306 : vector<1x16x16xf32> to vector<16x16xf32>
    %308 = vector.shape_cast %305 : vector<16x16xf32> to vector<1x16x16xf32>
    tpu.vector_store %arg10[%c0_160, %c0_161, %c0_162], %308 {strides = array<i32>} : memref<4x16x16xf32, #tpu.memory_space<vmem>>, vector<1x16x16xf32>,
    %c1_163 = arith.constant 1 : index
    %c0_164 = arith.constant 0 : index
    %c0_165 = arith.constant 0 : index
    %309 = vector.load %arg9[%c1_163, %c0_164, %c0_165] : memref<4x22x22xf32, #tpu.memory_space<vmem>>, vector<1x16x16xf32>
    %310 = vector.shape_cast %309 : vector<1x16x16xf32> to vector<16x16xf32>
    %c49 = arith.constant 49 : index
    %311 = memref.load %arg2[%c49] : memref<196xf32, #tpu.memory_space<smem>>
    %312 = vector.broadcast %311 : f32 to vector<16x16xf32>
    %313 = arith.mulf %310, %312 : vector<16x16xf32>
    %c1_166 = arith.constant 1 : index
    %c0_167 = arith.constant 0 : index
    %c1_168 = arith.constant 1 : index
    %314 = vector.load %arg9[%c1_166, %c0_167, %c1_168] : memref<4x22x22xf32, #tpu.memory_space<vmem>>, vector<1x16x16xf32>
    %315 = vector.shape_cast %314 : vector<1x16x16xf32> to vector<16x16xf32>
    %c50 = arith.constant 50 : index
    %316 = memref.load %arg2[%c50] : memref<196xf32, #tpu.memory_space<smem>>
    %317 = vector.broadcast %316 : f32 to vector<16x16xf32>
    %318 = arith.mulf %315, %317 : vector<16x16xf32>
    %319 = arith.addf %313, %318 : vector<16x16xf32>
    %c1_169 = arith.constant 1 : index
    %c0_170 = arith.constant 0 : index
    %c2_171 = arith.constant 2 : index
    %320 = vector.load %arg9[%c1_169, %c0_170, %c2_171] : memref<4x22x22xf32, #tpu.memory_space<vmem>>, vector<1x16x16xf32>
    %321 = vector.shape_cast %320 : vector<1x16x16xf32> to vector<16x16xf32>
    %c51 = arith.constant 51 : index
    %322 = memref.load %arg2[%c51] : memref<196xf32, #tpu.memory_space<smem>>
    %323 = vector.broadcast %322 : f32 to vector<16x16xf32>
    %324 = arith.mulf %321, %323 : vector<16x16xf32>
    %325 = arith.addf %319, %324 : vector<16x16xf32>
    %c1_172 = arith.constant 1 : index
    %c0_173 = arith.constant 0 : index
    %c3_174 = arith.constant 3 : index
    %326 = vector.load %arg9[%c1_172, %c0_173, %c3_174] : memref<4x22x22xf32, #tpu.memory_space<vmem>>, vector<1x16x16xf32>
    %327 = vector.shape_cast %326 : vector<1x16x16xf32> to vector<16x16xf32>
    %c52 = arith.constant 52 : index
    %328 = memref.load %arg2[%c52] : memref<196xf32, #tpu.memory_space<smem>>
    %329 = vector.broadcast %328 : f32 to vector<16x16xf32>
    %330 = arith.mulf %327, %329 : vector<16x16xf32>
    %331 = arith.addf %325, %330 : vector<16x16xf32>
    %c1_175 = arith.constant 1 : index
    %c0_176 = arith.constant 0 : index
    %c4_177 = arith.constant 4 : index
    %332 = vector.load %arg9[%c1_175, %c0_176, %c4_177] : memref<4x22x22xf32, #tpu.memory_space<vmem>>, vector<1x16x16xf32>
    %333 = vector.shape_cast %332 : vector<1x16x16xf32> to vector<16x16xf32>
    %c53 = arith.constant 53 : index
    %334 = memref.load %arg2[%c53] : memref<196xf32, #tpu.memory_space<smem>>
    %335 = vector.broadcast %334 : f32 to vector<16x16xf32>
    %336 = arith.mulf %333, %335 : vector<16x16xf32>
    %337 = arith.addf %331, %336 : vector<16x16xf32>
    %c1_178 = arith.constant 1 : index
    %c0_179 = arith.constant 0 : index
    %c5_180 = arith.constant 5 : index
    %338 = vector.load %arg9[%c1_178, %c0_179, %c5_180] : memref<4x22x22xf32, #tpu.memory_space<vmem>>, vector<1x16x16xf32>
    %339 = vector.shape_cast %338 : vector<1x16x16xf32> to vector<16x16xf32>
    %c54 = arith.constant 54 : index
    %340 = memref.load %arg2[%c54] : memref<196xf32, #tpu.memory_space<smem>>
    %341 = vector.broadcast %340 : f32 to vector<16x16xf32>
    %342 = arith.mulf %339, %341 : vector<16x16xf32>
    %343 = arith.addf %337, %342 : vector<16x16xf32>
    %c1_181 = arith.constant 1 : index
    %c0_182 = arith.constant 0 : index
    %c6_183 = arith.constant 6 : index
    %344 = vector.load %arg9[%c1_181, %c0_182, %c6_183] : memref<4x22x22xf32, #tpu.memory_space<vmem>>, vector<1x16x16xf32>
    %345 = vector.shape_cast %344 : vector<1x16x16xf32> to vector<16x16xf32>
    %c55 = arith.constant 55 : index
    %346 = memref.load %arg2[%c55] : memref<196xf32, #tpu.memory_space<smem>>
    %347 = vector.broadcast %346 : f32 to vector<16x16xf32>
    %348 = arith.mulf %345, %347 : vector<16x16xf32>
    %349 = arith.addf %343, %348 : vector<16x16xf32>
    %c1_184 = arith.constant 1 : index
    %c1_185 = arith.constant 1 : index
    %c0_186 = arith.constant 0 : index
    %350 = vector.load %arg9[%c1_184, %c1_185, %c0_186] : memref<4x22x22xf32, #tpu.memory_space<vmem>>, vector<1x16x16xf32>
    %351 = vector.shape_cast %350 : vector<1x16x16xf32> to vector<16x16xf32>
    %c56 = arith.constant 56 : index
    %352 = memref.load %arg2[%c56] : memref<196xf32, #tpu.memory_space<smem>>
    %353 = vector.broadcast %352 : f32 to vector<16x16xf32>
    %354 = arith.mulf %351, %353 : vector<16x16xf32>
    %355 = arith.addf %349, %354 : vector<16x16xf32>
    %c1_187 = arith.constant 1 : index
    %c1_188 = arith.constant 1 : index
    %c1_189 = arith.constant 1 : index
    %356 = vector.load %arg9[%c1_187, %c1_188, %c1_189] : memref<4x22x22xf32, #tpu.memory_space<vmem>>, vector<1x16x16xf32>
    %357 = vector.shape_cast %356 : vector<1x16x16xf32> to vector<16x16xf32>
    %c57 = arith.constant 57 : index
    %358 = memref.load %arg2[%c57] : memref<196xf32, #tpu.memory_space<smem>>
    %359 = vector.broadcast %358 : f32 to vector<16x16xf32>
    %360 = arith.mulf %357, %359 : vector<16x16xf32>
    %361 = arith.addf %355, %360 : vector<16x16xf32>
    %c1_190 = arith.constant 1 : index
    %c1_191 = arith.constant 1 : index
    %c2_192 = arith.constant 2 : index
    %362 = vector.load %arg9[%c1_190, %c1_191, %c2_192] : memref<4x22x22xf32, #tpu.memory_space<vmem>>, vector<1x16x16xf32>
    %363 = vector.shape_cast %362 : vector<1x16x16xf32> to vector<16x16xf32>
    %c58 = arith.constant 58 : index
    %364 = memref.load %arg2[%c58] : memref<196xf32, #tpu.memory_space<smem>>
    %365 = vector.broadcast %364 : f32 to vector<16x16xf32>
    %366 = arith.mulf %363, %365 : vector<16x16xf32>
    %367 = arith.addf %361, %366 : vector<16x16xf32>
    %c1_193 = arith.constant 1 : index
    %c1_194 = arith.constant 1 : index
    %c3_195 = arith.constant 3 : index
    %368 = vector.load %arg9[%c1_193, %c1_194, %c3_195] : memref<4x22x22xf32, #tpu.memory_space<vmem>>, vector<1x16x16xf32>
    %369 = vector.shape_cast %368 : vector<1x16x16xf32> to vector<16x16xf32>
    %c59 = arith.constant 59 : index
    %370 = memref.load %arg2[%c59] : memref<196xf32, #tpu.memory_space<smem>>
    %371 = vector.broadcast %370 : f32 to vector<16x16xf32>
    %372 = arith.mulf %369, %371 : vector<16x16xf32>
    %373 = arith.addf %367, %372 : vector<16x16xf32>
    %c1_196 = arith.constant 1 : index
    %c1_197 = arith.constant 1 : index
    %c4_198 = arith.constant 4 : index
    %374 = vector.load %arg9[%c1_196, %c1_197, %c4_198] : memref<4x22x22xf32, #tpu.memory_space<vmem>>, vector<1x16x16xf32>
    %375 = vector.shape_cast %374 : vector<1x16x16xf32> to vector<16x16xf32>
    %c60 = arith.constant 60 : index
    %376 = memref.load %arg2[%c60] : memref<196xf32, #tpu.memory_space<smem>>
    %377 = vector.broadcast %376 : f32 to vector<16x16xf32>
    %378 = arith.mulf %375, %377 : vector<16x16xf32>
    %379 = arith.addf %373, %378 : vector<16x16xf32>
    %c1_199 = arith.constant 1 : index
    %c1_200 = arith.constant 1 : index
    %c5_201 = arith.constant 5 : index
    %380 = vector.load %arg9[%c1_199, %c1_200, %c5_201] : memref<4x22x22xf32, #tpu.memory_space<vmem>>, vector<1x16x16xf32>
    %381 = vector.shape_cast %380 : vector<1x16x16xf32> to vector<16x16xf32>
    %c61 = arith.constant 61 : index
    %382 = memref.load %arg2[%c61] : memref<196xf32, #tpu.memory_space<smem>>
    %383 = vector.broadcast %382 : f32 to vector<16x16xf32>
    %384 = arith.mulf %381, %383 : vector<16x16xf32>
    %385 = arith.addf %379, %384 : vector<16x16xf32>
    %c1_202 = arith.constant 1 : index
    %c1_203 = arith.constant 1 : index
    %c6_204 = arith.constant 6 : index
    %386 = vector.load %arg9[%c1_202, %c1_203, %c6_204] : memref<4x22x22xf32, #tpu.memory_space<vmem>>, vector<1x16x16xf32>
    %387 = vector.shape_cast %386 : vector<1x16x16xf32> to vector<16x16xf32>
    %c62 = arith.constant 62 : index
    %388 = memref.load %arg2[%c62] : memref<196xf32, #tpu.memory_space<smem>>
    %389 = vector.broadcast %388 : f32 to vector<16x16xf32>
    %390 = arith.mulf %387, %389 : vector<16x16xf32>
    %391 = arith.addf %385, %390 : vector<16x16xf32>
    %c1_205 = arith.constant 1 : index
    %c2_206 = arith.constant 2 : index
    %c0_207 = arith.constant 0 : index
    %392 = vector.load %arg9[%c1_205, %c2_206, %c0_207] : memref<4x22x22xf32, #tpu.memory_space<vmem>>, vector<1x16x16xf32>
    %393 = vector.shape_cast %392 : vector<1x16x16xf32> to vector<16x16xf32>
    %c63 = arith.constant 63 : index
    %394 = memref.load %arg2[%c63] : memref<196xf32, #tpu.memory_space<smem>>
    %395 = vector.broadcast %394 : f32 to vector<16x16xf32>
    %396 = arith.mulf %393, %395 : vector<16x16xf32>
    %397 = arith.addf %391, %396 : vector<16x16xf32>
    %c1_208 = arith.constant 1 : index
    %c2_209 = arith.constant 2 : index
    %c1_210 = arith.constant 1 : index
    %398 = vector.load %arg9[%c1_208, %c2_209, %c1_210] : memref<4x22x22xf32, #tpu.memory_space<vmem>>, vector<1x16x16xf32>
    %399 = vector.shape_cast %398 : vector<1x16x16xf32> to vector<16x16xf32>
    %c64 = arith.constant 64 : index
    %400 = memref.load %arg2[%c64] : memref<196xf32, #tpu.memory_space<smem>>
    %401 = vector.broadcast %400 : f32 to vector<16x16xf32>
    %402 = arith.mulf %399, %401 : vector<16x16xf32>
    %403 = arith.addf %397, %402 : vector<16x16xf32>
    %c1_211 = arith.constant 1 : index
    %c2_212 = arith.constant 2 : index
    %c2_213 = arith.constant 2 : index
    %404 = vector.load %arg9[%c1_211, %c2_212, %c2_213] : memref<4x22x22xf32, #tpu.memory_space<vmem>>, vector<1x16x16xf32>
    %405 = vector.shape_cast %404 : vector<1x16x16xf32> to vector<16x16xf32>
    %c65 = arith.constant 65 : index
    %406 = memref.load %arg2[%c65] : memref<196xf32, #tpu.memory_space<smem>>
    %407 = vector.broadcast %406 : f32 to vector<16x16xf32>
    %408 = arith.mulf %405, %407 : vector<16x16xf32>
    %409 = arith.addf %403, %408 : vector<16x16xf32>
    %c1_214 = arith.constant 1 : index
    %c2_215 = arith.constant 2 : index
    %c3_216 = arith.constant 3 : index
    %410 = vector.load %arg9[%c1_214, %c2_215, %c3_216] : memref<4x22x22xf32, #tpu.memory_space<vmem>>, vector<1x16x16xf32>
    %411 = vector.shape_cast %410 : vector<1x16x16xf32> to vector<16x16xf32>
    %c66 = arith.constant 66 : index
    %412 = memref.load %arg2[%c66] : memref<196xf32, #tpu.memory_space<smem>>
    %413 = vector.broadcast %412 : f32 to vector<16x16xf32>
    %414 = arith.mulf %411, %413 : vector<16x16xf32>
    %415 = arith.addf %409, %414 : vector<16x16xf32>
    %c1_217 = arith.constant 1 : index
    %c2_218 = arith.constant 2 : index
    %c4_219 = arith.constant 4 : index
    %416 = vector.load %arg9[%c1_217, %c2_218, %c4_219] : memref<4x22x22xf32, #tpu.memory_space<vmem>>, vector<1x16x16xf32>
    %417 = vector.shape_cast %416 : vector<1x16x16xf32> to vector<16x16xf32>
    %c67 = arith.constant 67 : index
    %418 = memref.load %arg2[%c67] : memref<196xf32, #tpu.memory_space<smem>>
    %419 = vector.broadcast %418 : f32 to vector<16x16xf32>
    %420 = arith.mulf %417, %419 : vector<16x16xf32>
    %421 = arith.addf %415, %420 : vector<16x16xf32>
    %c1_220 = arith.constant 1 : index
    %c2_221 = arith.constant 2 : index
    %c5_222 = arith.constant 5 : index
    %422 = vector.load %arg9[%c1_220, %c2_221, %c5_222] : memref<4x22x22xf32, #tpu.memory_space<vmem>>, vector<1x16x16xf32>
    %423 = vector.shape_cast %422 : vector<1x16x16xf32> to vector<16x16xf32>
    %c68 = arith.constant 68 : index
    %424 = memref.load %arg2[%c68] : memref<196xf32, #tpu.memory_space<smem>>
    %425 = vector.broadcast %424 : f32 to vector<16x16xf32>
    %426 = arith.mulf %423, %425 : vector<16x16xf32>
    %427 = arith.addf %421, %426 : vector<16x16xf32>
    %c1_223 = arith.constant 1 : index
    %c2_224 = arith.constant 2 : index
    %c6_225 = arith.constant 6 : index
    %428 = vector.load %arg9[%c1_223, %c2_224, %c6_225] : memref<4x22x22xf32, #tpu.memory_space<vmem>>, vector<1x16x16xf32>
    %429 = vector.shape_cast %428 : vector<1x16x16xf32> to vector<16x16xf32>
    %c69 = arith.constant 69 : index
    %430 = memref.load %arg2[%c69] : memref<196xf32, #tpu.memory_space<smem>>
    %431 = vector.broadcast %430 : f32 to vector<16x16xf32>
    %432 = arith.mulf %429, %431 : vector<16x16xf32>
    %433 = arith.addf %427, %432 : vector<16x16xf32>
    %c1_226 = arith.constant 1 : index
    %c3_227 = arith.constant 3 : index
    %c0_228 = arith.constant 0 : index
    %434 = vector.load %arg9[%c1_226, %c3_227, %c0_228] : memref<4x22x22xf32, #tpu.memory_space<vmem>>, vector<1x16x16xf32>
    %435 = vector.shape_cast %434 : vector<1x16x16xf32> to vector<16x16xf32>
    %c70 = arith.constant 70 : index
    %436 = memref.load %arg2[%c70] : memref<196xf32, #tpu.memory_space<smem>>
    %437 = vector.broadcast %436 : f32 to vector<16x16xf32>
    %438 = arith.mulf %435, %437 : vector<16x16xf32>
    %439 = arith.addf %433, %438 : vector<16x16xf32>
    %c1_229 = arith.constant 1 : index
    %c3_230 = arith.constant 3 : index
    %c1_231 = arith.constant 1 : index
    %440 = vector.load %arg9[%c1_229, %c3_230, %c1_231] : memref<4x22x22xf32, #tpu.memory_space<vmem>>, vector<1x16x16xf32>
    %441 = vector.shape_cast %440 : vector<1x16x16xf32> to vector<16x16xf32>
    %c71 = arith.constant 71 : index
    %442 = memref.load %arg2[%c71] : memref<196xf32, #tpu.memory_space<smem>>
    %443 = vector.broadcast %442 : f32 to vector<16x16xf32>
    %444 = arith.mulf %441, %443 : vector<16x16xf32>
    %445 = arith.addf %439, %444 : vector<16x16xf32>
    %c1_232 = arith.constant 1 : index
    %c3_233 = arith.constant 3 : index
    %c2_234 = arith.constant 2 : index
    %446 = vector.load %arg9[%c1_232, %c3_233, %c2_234] : memref<4x22x22xf32, #tpu.memory_space<vmem>>, vector<1x16x16xf32>
    %447 = vector.shape_cast %446 : vector<1x16x16xf32> to vector<16x16xf32>
    %c72 = arith.constant 72 : index
    %448 = memref.load %arg2[%c72] : memref<196xf32, #tpu.memory_space<smem>>
    %449 = vector.broadcast %448 : f32 to vector<16x16xf32>
    %450 = arith.mulf %447, %449 : vector<16x16xf32>
    %451 = arith.addf %445, %450 : vector<16x16xf32>
    %c1_235 = arith.constant 1 : index
    %c3_236 = arith.constant 3 : index
    %c3_237 = arith.constant 3 : index
    %452 = vector.load %arg9[%c1_235, %c3_236, %c3_237] : memref<4x22x22xf32, #tpu.memory_space<vmem>>, vector<1x16x16xf32>
    %453 = vector.shape_cast %452 : vector<1x16x16xf32> to vector<16x16xf32>
    %c73 = arith.constant 73 : index
    %454 = memref.load %arg2[%c73] : memref<196xf32, #tpu.memory_space<smem>>
    %455 = vector.broadcast %454 : f32 to vector<16x16xf32>
    %456 = arith.mulf %453, %455 : vector<16x16xf32>
    %457 = arith.addf %451, %456 : vector<16x16xf32>
    %c1_238 = arith.constant 1 : index
    %c3_239 = arith.constant 3 : index
    %c4_240 = arith.constant 4 : index
    %458 = vector.load %arg9[%c1_238, %c3_239, %c4_240] : memref<4x22x22xf32, #tpu.memory_space<vmem>>, vector<1x16x16xf32>
    %459 = vector.shape_cast %458 : vector<1x16x16xf32> to vector<16x16xf32>
    %c74 = arith.constant 74 : index
    %460 = memref.load %arg2[%c74] : memref<196xf32, #tpu.memory_space<smem>>
    %461 = vector.broadcast %460 : f32 to vector<16x16xf32>
    %462 = arith.mulf %459, %461 : vector<16x16xf32>
    %463 = arith.addf %457, %462 : vector<16x16xf32>
    %c1_241 = arith.constant 1 : index
    %c3_242 = arith.constant 3 : index
    %c5_243 = arith.constant 5 : index
    %464 = vector.load %arg9[%c1_241, %c3_242, %c5_243] : memref<4x22x22xf32, #tpu.memory_space<vmem>>, vector<1x16x16xf32>
    %465 = vector.shape_cast %464 : vector<1x16x16xf32> to vector<16x16xf32>
    %c75 = arith.constant 75 : index
    %466 = memref.load %arg2[%c75] : memref<196xf32, #tpu.memory_space<smem>>
    %467 = vector.broadcast %466 : f32 to vector<16x16xf32>
    %468 = arith.mulf %465, %467 : vector<16x16xf32>
    %469 = arith.addf %463, %468 : vector<16x16xf32>
    %c1_244 = arith.constant 1 : index
    %c3_245 = arith.constant 3 : index
    %c6_246 = arith.constant 6 : index
    %470 = vector.load %arg9[%c1_244, %c3_245, %c6_246] : memref<4x22x22xf32, #tpu.memory_space<vmem>>, vector<1x16x16xf32>
    %471 = vector.shape_cast %470 : vector<1x16x16xf32> to vector<16x16xf32>
    %c76 = arith.constant 76 : index
    %472 = memref.load %arg2[%c76] : memref<196xf32, #tpu.memory_space<smem>>
    %473 = vector.broadcast %472 : f32 to vector<16x16xf32>
    %474 = arith.mulf %471, %473 : vector<16x16xf32>
    %475 = arith.addf %469, %474 : vector<16x16xf32>
    %c1_247 = arith.constant 1 : index
    %c4_248 = arith.constant 4 : index
    %c0_249 = arith.constant 0 : index
    %476 = vector.load %arg9[%c1_247, %c4_248, %c0_249] : memref<4x22x22xf32, #tpu.memory_space<vmem>>, vector<1x16x16xf32>
    %477 = vector.shape_cast %476 : vector<1x16x16xf32> to vector<16x16xf32>
    %c77 = arith.constant 77 : index
    %478 = memref.load %arg2[%c77] : memref<196xf32, #tpu.memory_space<smem>>
    %479 = vector.broadcast %478 : f32 to vector<16x16xf32>
    %480 = arith.mulf %477, %479 : vector<16x16xf32>
    %481 = arith.addf %475, %480 : vector<16x16xf32>
    %c1_250 = arith.constant 1 : index
    %c4_251 = arith.constant 4 : index
    %c1_252 = arith.constant 1 : index
    %482 = vector.load %arg9[%c1_250, %c4_251, %c1_252] : memref<4x22x22xf32, #tpu.memory_space<vmem>>, vector<1x16x16xf32>
    %483 = vector.shape_cast %482 : vector<1x16x16xf32> to vector<16x16xf32>
    %c78 = arith.constant 78 : index
    %484 = memref.load %arg2[%c78] : memref<196xf32, #tpu.memory_space<smem>>
    %485 = vector.broadcast %484 : f32 to vector<16x16xf32>
    %486 = arith.mulf %483, %485 : vector<16x16xf32>
    %487 = arith.addf %481, %486 : vector<16x16xf32>
    %c1_253 = arith.constant 1 : index
    %c4_254 = arith.constant 4 : index
    %c2_255 = arith.constant 2 : index
    %488 = vector.load %arg9[%c1_253, %c4_254, %c2_255] : memref<4x22x22xf32, #tpu.memory_space<vmem>>, vector<1x16x16xf32>
    %489 = vector.shape_cast %488 : vector<1x16x16xf32> to vector<16x16xf32>
    %c79 = arith.constant 79 : index
    %490 = memref.load %arg2[%c79] : memref<196xf32, #tpu.memory_space<smem>>
    %491 = vector.broadcast %490 : f32 to vector<16x16xf32>
    %492 = arith.mulf %489, %491 : vector<16x16xf32>
    %493 = arith.addf %487, %492 : vector<16x16xf32>
    %c1_256 = arith.constant 1 : index
    %c4_257 = arith.constant 4 : index
    %c3_258 = arith.constant 3 : index
    %494 = vector.load %arg9[%c1_256, %c4_257, %c3_258] : memref<4x22x22xf32, #tpu.memory_space<vmem>>, vector<1x16x16xf32>
    %495 = vector.shape_cast %494 : vector<1x16x16xf32> to vector<16x16xf32>
    %c80 = arith.constant 80 : index
    %496 = memref.load %arg2[%c80] : memref<196xf32, #tpu.memory_space<smem>>
    %497 = vector.broadcast %496 : f32 to vector<16x16xf32>
    %498 = arith.mulf %495, %497 : vector<16x16xf32>
    %499 = arith.addf %493, %498 : vector<16x16xf32>
    %c1_259 = arith.constant 1 : index
    %c4_260 = arith.constant 4 : index
    %c4_261 = arith.constant 4 : index
    %500 = vector.load %arg9[%c1_259, %c4_260, %c4_261] : memref<4x22x22xf32, #tpu.memory_space<vmem>>, vector<1x16x16xf32>
    %501 = vector.shape_cast %500 : vector<1x16x16xf32> to vector<16x16xf32>
    %c81 = arith.constant 81 : index
    %502 = memref.load %arg2[%c81] : memref<196xf32, #tpu.memory_space<smem>>
    %503 = vector.broadcast %502 : f32 to vector<16x16xf32>
    %504 = arith.mulf %501, %503 : vector<16x16xf32>
    %505 = arith.addf %499, %504 : vector<16x16xf32>
    %c1_262 = arith.constant 1 : index
    %c4_263 = arith.constant 4 : index
    %c5_264 = arith.constant 5 : index
    %506 = vector.load %arg9[%c1_262, %c4_263, %c5_264] : memref<4x22x22xf32, #tpu.memory_space<vmem>>, vector<1x16x16xf32>
    %507 = vector.shape_cast %506 : vector<1x16x16xf32> to vector<16x16xf32>
    %c82 = arith.constant 82 : index
    %508 = memref.load %arg2[%c82] : memref<196xf32, #tpu.memory_space<smem>>
    %509 = vector.broadcast %508 : f32 to vector<16x16xf32>
    %510 = arith.mulf %507, %509 : vector<16x16xf32>
    %511 = arith.addf %505, %510 : vector<16x16xf32>
    %c1_265 = arith.constant 1 : index
    %c4_266 = arith.constant 4 : index
    %c6_267 = arith.constant 6 : index
    %512 = vector.load %arg9[%c1_265, %c4_266, %c6_267] : memref<4x22x22xf32, #tpu.memory_space<vmem>>, vector<1x16x16xf32>
    %513 = vector.shape_cast %512 : vector<1x16x16xf32> to vector<16x16xf32>
    %c83 = arith.constant 83 : index
    %514 = memref.load %arg2[%c83] : memref<196xf32, #tpu.memory_space<smem>>
    %515 = vector.broadcast %514 : f32 to vector<16x16xf32>
    %516 = arith.mulf %513, %515 : vector<16x16xf32>
    %517 = arith.addf %511, %516 : vector<16x16xf32>
    %c1_268 = arith.constant 1 : index
    %c5_269 = arith.constant 5 : index
    %c0_270 = arith.constant 0 : index
    %518 = vector.load %arg9[%c1_268, %c5_269, %c0_270] : memref<4x22x22xf32, #tpu.memory_space<vmem>>, vector<1x16x16xf32>
    %519 = vector.shape_cast %518 : vector<1x16x16xf32> to vector<16x16xf32>
    %c84 = arith.constant 84 : index
    %520 = memref.load %arg2[%c84] : memref<196xf32, #tpu.memory_space<smem>>
    %521 = vector.broadcast %520 : f32 to vector<16x16xf32>
    %522 = arith.mulf %519, %521 : vector<16x16xf32>
    %523 = arith.addf %517, %522 : vector<16x16xf32>
    %c1_271 = arith.constant 1 : index
    %c5_272 = arith.constant 5 : index
    %c1_273 = arith.constant 1 : index
    %524 = vector.load %arg9[%c1_271, %c5_272, %c1_273] : memref<4x22x22xf32, #tpu.memory_space<vmem>>, vector<1x16x16xf32>
    %525 = vector.shape_cast %524 : vector<1x16x16xf32> to vector<16x16xf32>
    %c85 = arith.constant 85 : index
    %526 = memref.load %arg2[%c85] : memref<196xf32, #tpu.memory_space<smem>>
    %527 = vector.broadcast %526 : f32 to vector<16x16xf32>
    %528 = arith.mulf %525, %527 : vector<16x16xf32>
    %529 = arith.addf %523, %528 : vector<16x16xf32>
    %c1_274 = arith.constant 1 : index
    %c5_275 = arith.constant 5 : index
    %c2_276 = arith.constant 2 : index
    %530 = vector.load %arg9[%c1_274, %c5_275, %c2_276] : memref<4x22x22xf32, #tpu.memory_space<vmem>>, vector<1x16x16xf32>
    %531 = vector.shape_cast %530 : vector<1x16x16xf32> to vector<16x16xf32>
    %c86 = arith.constant 86 : index
    %532 = memref.load %arg2[%c86] : memref<196xf32, #tpu.memory_space<smem>>
    %533 = vector.broadcast %532 : f32 to vector<16x16xf32>
    %534 = arith.mulf %531, %533 : vector<16x16xf32>
    %535 = arith.addf %529, %534 : vector<16x16xf32>
    %c1_277 = arith.constant 1 : index
    %c5_278 = arith.constant 5 : index
    %c3_279 = arith.constant 3 : index
    %536 = vector.load %arg9[%c1_277, %c5_278, %c3_279] : memref<4x22x22xf32, #tpu.memory_space<vmem>>, vector<1x16x16xf32>
    %537 = vector.shape_cast %536 : vector<1x16x16xf32> to vector<16x16xf32>
    %c87 = arith.constant 87 : index
    %538 = memref.load %arg2[%c87] : memref<196xf32, #tpu.memory_space<smem>>
    %539 = vector.broadcast %538 : f32 to vector<16x16xf32>
    %540 = arith.mulf %537, %539 : vector<16x16xf32>
    %541 = arith.addf %535, %540 : vector<16x16xf32>
    %c1_280 = arith.constant 1 : index
    %c5_281 = arith.constant 5 : index
    %c4_282 = arith.constant 4 : index
    %542 = vector.load %arg9[%c1_280, %c5_281, %c4_282] : memref<4x22x22xf32, #tpu.memory_space<vmem>>, vector<1x16x16xf32>
    %543 = vector.shape_cast %542 : vector<1x16x16xf32> to vector<16x16xf32>
    %c88 = arith.constant 88 : index
    %544 = memref.load %arg2[%c88] : memref<196xf32, #tpu.memory_space<smem>>
    %545 = vector.broadcast %544 : f32 to vector<16x16xf32>
    %546 = arith.mulf %543, %545 : vector<16x16xf32>
    %547 = arith.addf %541, %546 : vector<16x16xf32>
    %c1_283 = arith.constant 1 : index
    %c5_284 = arith.constant 5 : index
    %c5_285 = arith.constant 5 : index
    %548 = vector.load %arg9[%c1_283, %c5_284, %c5_285] : memref<4x22x22xf32, #tpu.memory_space<vmem>>, vector<1x16x16xf32>
    %549 = vector.shape_cast %548 : vector<1x16x16xf32> to vector<16x16xf32>
    %c89 = arith.constant 89 : index
    %550 = memref.load %arg2[%c89] : memref<196xf32, #tpu.memory_space<smem>>
    %551 = vector.broadcast %550 : f32 to vector<16x16xf32>
    %552 = arith.mulf %549, %551 : vector<16x16xf32>
    %553 = arith.addf %547, %552 : vector<16x16xf32>
    %c1_286 = arith.constant 1 : index
    %c5_287 = arith.constant 5 : index
    %c6_288 = arith.constant 6 : index
    %554 = vector.load %arg9[%c1_286, %c5_287, %c6_288] : memref<4x22x22xf32, #tpu.memory_space<vmem>>, vector<1x16x16xf32>
    %555 = vector.shape_cast %554 : vector<1x16x16xf32> to vector<16x16xf32>
    %c90 = arith.constant 90 : index
    %556 = memref.load %arg2[%c90] : memref<196xf32, #tpu.memory_space<smem>>
    %557 = vector.broadcast %556 : f32 to vector<16x16xf32>
    %558 = arith.mulf %555, %557 : vector<16x16xf32>
    %559 = arith.addf %553, %558 : vector<16x16xf32>
    %c1_289 = arith.constant 1 : index
    %c6_290 = arith.constant 6 : index
    %c0_291 = arith.constant 0 : index
    %560 = vector.load %arg9[%c1_289, %c6_290, %c0_291] : memref<4x22x22xf32, #tpu.memory_space<vmem>>, vector<1x16x16xf32>
    %561 = vector.shape_cast %560 : vector<1x16x16xf32> to vector<16x16xf32>
    %c91 = arith.constant 91 : index
    %562 = memref.load %arg2[%c91] : memref<196xf32, #tpu.memory_space<smem>>
    %563 = vector.broadcast %562 : f32 to vector<16x16xf32>
    %564 = arith.mulf %561, %563 : vector<16x16xf32>
    %565 = arith.addf %559, %564 : vector<16x16xf32>
    %c1_292 = arith.constant 1 : index
    %c6_293 = arith.constant 6 : index
    %c1_294 = arith.constant 1 : index
    %566 = vector.load %arg9[%c1_292, %c6_293, %c1_294] : memref<4x22x22xf32, #tpu.memory_space<vmem>>, vector<1x16x16xf32>
    %567 = vector.shape_cast %566 : vector<1x16x16xf32> to vector<16x16xf32>
    %c92 = arith.constant 92 : index
    %568 = memref.load %arg2[%c92] : memref<196xf32, #tpu.memory_space<smem>>
    %569 = vector.broadcast %568 : f32 to vector<16x16xf32>
    %570 = arith.mulf %567, %569 : vector<16x16xf32>
    %571 = arith.addf %565, %570 : vector<16x16xf32>
    %c1_295 = arith.constant 1 : index
    %c6_296 = arith.constant 6 : index
    %c2_297 = arith.constant 2 : index
    %572 = vector.load %arg9[%c1_295, %c6_296, %c2_297] : memref<4x22x22xf32, #tpu.memory_space<vmem>>, vector<1x16x16xf32>
    %573 = vector.shape_cast %572 : vector<1x16x16xf32> to vector<16x16xf32>
    %c93 = arith.constant 93 : index
    %574 = memref.load %arg2[%c93] : memref<196xf32, #tpu.memory_space<smem>>
    %575 = vector.broadcast %574 : f32 to vector<16x16xf32>
    %576 = arith.mulf %573, %575 : vector<16x16xf32>
    %577 = arith.addf %571, %576 : vector<16x16xf32>
    %c1_298 = arith.constant 1 : index
    %c6_299 = arith.constant 6 : index
    %c3_300 = arith.constant 3 : index
    %578 = vector.load %arg9[%c1_298, %c6_299, %c3_300] : memref<4x22x22xf32, #tpu.memory_space<vmem>>, vector<1x16x16xf32>
    %579 = vector.shape_cast %578 : vector<1x16x16xf32> to vector<16x16xf32>
    %c94 = arith.constant 94 : index
    %580 = memref.load %arg2[%c94] : memref<196xf32, #tpu.memory_space<smem>>
    %581 = vector.broadcast %580 : f32 to vector<16x16xf32>
    %582 = arith.mulf %579, %581 : vector<16x16xf32>
    %583 = arith.addf %577, %582 : vector<16x16xf32>
    %c1_301 = arith.constant 1 : index
    %c6_302 = arith.constant 6 : index
    %c4_303 = arith.constant 4 : index
    %584 = vector.load %arg9[%c1_301, %c6_302, %c4_303] : memref<4x22x22xf32, #tpu.memory_space<vmem>>, vector<1x16x16xf32>
    %585 = vector.shape_cast %584 : vector<1x16x16xf32> to vector<16x16xf32>
    %c95 = arith.constant 95 : index
    %586 = memref.load %arg2[%c95] : memref<196xf32, #tpu.memory_space<smem>>
    %587 = vector.broadcast %586 : f32 to vector<16x16xf32>
    %588 = arith.mulf %585, %587 : vector<16x16xf32>
    %589 = arith.addf %583, %588 : vector<16x16xf32>
    %c1_304 = arith.constant 1 : index
    %c6_305 = arith.constant 6 : index
    %c5_306 = arith.constant 5 : index
    %590 = vector.load %arg9[%c1_304, %c6_305, %c5_306] : memref<4x22x22xf32, #tpu.memory_space<vmem>>, vector<1x16x16xf32>
    %591 = vector.shape_cast %590 : vector<1x16x16xf32> to vector<16x16xf32>
    %c96 = arith.constant 96 : index
    %592 = memref.load %arg2[%c96] : memref<196xf32, #tpu.memory_space<smem>>
    %593 = vector.broadcast %592 : f32 to vector<16x16xf32>
    %594 = arith.mulf %591, %593 : vector<16x16xf32>
    %595 = arith.addf %589, %594 : vector<16x16xf32>
    %c1_307 = arith.constant 1 : index
    %c6_308 = arith.constant 6 : index
    %c6_309 = arith.constant 6 : index
    %596 = vector.load %arg9[%c1_307, %c6_308, %c6_309] : memref<4x22x22xf32, #tpu.memory_space<vmem>>, vector<1x16x16xf32>
    %597 = vector.shape_cast %596 : vector<1x16x16xf32> to vector<16x16xf32>
    %c97 = arith.constant 97 : index
    %598 = memref.load %arg2[%c97] : memref<196xf32, #tpu.memory_space<smem>>
    %599 = vector.broadcast %598 : f32 to vector<16x16xf32>
    %600 = arith.mulf %597, %599 : vector<16x16xf32>
    %601 = arith.addf %595, %600 : vector<16x16xf32>
    %c1_310 = arith.constant 1 : index
    %602 = memref.load %arg3[%c1_310] : memref<4xf32, #tpu.memory_space<smem>>
    %603 = vector.broadcast %602 : f32 to vector<16x16xf32>
    %604 = arith.mulf %601, %603 : vector<16x16xf32>
    %c1_311 = arith.constant 1 : index
    %605 = memref.load %arg4[%c1_311] : memref<4xf32, #tpu.memory_space<smem>>
    %606 = vector.broadcast %605 : f32 to vector<16x16xf32>
    %607 = arith.addf %604, %606 : vector<16x16xf32>
    %cst_312 = arith.constant 0.000000e+00 : f32
    %608 = vector.broadcast %cst_312 : f32 to vector<16x16xf32>
    %609 = arith.maximumf %607, %608 : vector<16x16xf32>
    %c1_313 = arith.constant 1 : index
    %c0_314 = arith.constant 0 : index
    %c0_315 = arith.constant 0 : index
    %610 = vector.load %arg10[%c1_313, %c0_314, %c0_315] : memref<4x16x16xf32, #tpu.memory_space<vmem>>, vector<1x16x16xf32>
    %611 = vector.shape_cast %610 : vector<1x16x16xf32> to vector<16x16xf32>
    %612 = vector.shape_cast %609 : vector<16x16xf32> to vector<1x16x16xf32>
    tpu.vector_store %arg10[%c1_313, %c0_314, %c0_315], %612 {strides = array<i32>} : memref<4x16x16xf32, #tpu.memory_space<vmem>>, vector<1x16x16xf32>,
    %c2_316 = arith.constant 2 : index
    %c0_317 = arith.constant 0 : index
    %c0_318 = arith.constant 0 : index
    %613 = vector.load %arg9[%c2_316, %c0_317, %c0_318] : memref<4x22x22xf32, #tpu.memory_space<vmem>>, vector<1x16x16xf32>
    %614 = vector.shape_cast %613 : vector<1x16x16xf32> to vector<16x16xf32>
    %c98 = arith.constant 98 : index
    %615 = memref.load %arg2[%c98] : memref<196xf32, #tpu.memory_space<smem>>
    %616 = vector.broadcast %615 : f32 to vector<16x16xf32>
    %617 = arith.mulf %614, %616 : vector<16x16xf32>
    %c2_319 = arith.constant 2 : index
    %c0_320 = arith.constant 0 : index
    %c1_321 = arith.constant 1 : index
    %618 = vector.load %arg9[%c2_319, %c0_320, %c1_321] : memref<4x22x22xf32, #tpu.memory_space<vmem>>, vector<1x16x16xf32>
    %619 = vector.shape_cast %618 : vector<1x16x16xf32> to vector<16x16xf32>
    %c99 = arith.constant 99 : index
    %620 = memref.load %arg2[%c99] : memref<196xf32, #tpu.memory_space<smem>>
    %621 = vector.broadcast %620 : f32 to vector<16x16xf32>
    %622 = arith.mulf %619, %621 : vector<16x16xf32>
    %623 = arith.addf %617, %622 : vector<16x16xf32>
    %c2_322 = arith.constant 2 : index
    %c0_323 = arith.constant 0 : index
    %c2_324 = arith.constant 2 : index
    %624 = vector.load %arg9[%c2_322, %c0_323, %c2_324] : memref<4x22x22xf32, #tpu.memory_space<vmem>>, vector<1x16x16xf32>
    %625 = vector.shape_cast %624 : vector<1x16x16xf32> to vector<16x16xf32>
    %c100 = arith.constant 100 : index
    %626 = memref.load %arg2[%c100] : memref<196xf32, #tpu.memory_space<smem>>
    %627 = vector.broadcast %626 : f32 to vector<16x16xf32>
    %628 = arith.mulf %625, %627 : vector<16x16xf32>
    %629 = arith.addf %623, %628 : vector<16x16xf32>
    %c2_325 = arith.constant 2 : index
    %c0_326 = arith.constant 0 : index
    %c3_327 = arith.constant 3 : index
    %630 = vector.load %arg9[%c2_325, %c0_326, %c3_327] : memref<4x22x22xf32, #tpu.memory_space<vmem>>, vector<1x16x16xf32>
    %631 = vector.shape_cast %630 : vector<1x16x16xf32> to vector<16x16xf32>
    %c101 = arith.constant 101 : index
    %632 = memref.load %arg2[%c101] : memref<196xf32, #tpu.memory_space<smem>>
    %633 = vector.broadcast %632 : f32 to vector<16x16xf32>
    %634 = arith.mulf %631, %633 : vector<16x16xf32>
    %635 = arith.addf %629, %634 : vector<16x16xf32>
    %c2_328 = arith.constant 2 : index
    %c0_329 = arith.constant 0 : index
    %c4_330 = arith.constant 4 : index
    %636 = vector.load %arg9[%c2_328, %c0_329, %c4_330] : memref<4x22x22xf32, #tpu.memory_space<vmem>>, vector<1x16x16xf32>
    %637 = vector.shape_cast %636 : vector<1x16x16xf32> to vector<16x16xf32>
    %c102 = arith.constant 102 : index
    %638 = memref.load %arg2[%c102] : memref<196xf32, #tpu.memory_space<smem>>
    %639 = vector.broadcast %638 : f32 to vector<16x16xf32>
    %640 = arith.mulf %637, %639 : vector<16x16xf32>
    %641 = arith.addf %635, %640 : vector<16x16xf32>
    %c2_331 = arith.constant 2 : index
    %c0_332 = arith.constant 0 : index
    %c5_333 = arith.constant 5 : index
    %642 = vector.load %arg9[%c2_331, %c0_332, %c5_333] : memref<4x22x22xf32, #tpu.memory_space<vmem>>, vector<1x16x16xf32>
    %643 = vector.shape_cast %642 : vector<1x16x16xf32> to vector<16x16xf32>
    %c103 = arith.constant 103 : index
    %644 = memref.load %arg2[%c103] : memref<196xf32, #tpu.memory_space<smem>>
    %645 = vector.broadcast %644 : f32 to vector<16x16xf32>
    %646 = arith.mulf %643, %645 : vector<16x16xf32>
    %647 = arith.addf %641, %646 : vector<16x16xf32>
    %c2_334 = arith.constant 2 : index
    %c0_335 = arith.constant 0 : index
    %c6_336 = arith.constant 6 : index
    %648 = vector.load %arg9[%c2_334, %c0_335, %c6_336] : memref<4x22x22xf32, #tpu.memory_space<vmem>>, vector<1x16x16xf32>
    %649 = vector.shape_cast %648 : vector<1x16x16xf32> to vector<16x16xf32>
    %c104 = arith.constant 104 : index
    %650 = memref.load %arg2[%c104] : memref<196xf32, #tpu.memory_space<smem>>
    %651 = vector.broadcast %650 : f32 to vector<16x16xf32>
    %652 = arith.mulf %649, %651 : vector<16x16xf32>
    %653 = arith.addf %647, %652 : vector<16x16xf32>
    %c2_337 = arith.constant 2 : index
    %c1_338 = arith.constant 1 : index
    %c0_339 = arith.constant 0 : index
    %654 = vector.load %arg9[%c2_337, %c1_338, %c0_339] : memref<4x22x22xf32, #tpu.memory_space<vmem>>, vector<1x16x16xf32>
    %655 = vector.shape_cast %654 : vector<1x16x16xf32> to vector<16x16xf32>
    %c105 = arith.constant 105 : index
    %656 = memref.load %arg2[%c105] : memref<196xf32, #tpu.memory_space<smem>>
    %657 = vector.broadcast %656 : f32 to vector<16x16xf32>
    %658 = arith.mulf %655, %657 : vector<16x16xf32>
    %659 = arith.addf %653, %658 : vector<16x16xf32>
    %c2_340 = arith.constant 2 : index
    %c1_341 = arith.constant 1 : index
    %c1_342 = arith.constant 1 : index
    %660 = vector.load %arg9[%c2_340, %c1_341, %c1_342] : memref<4x22x22xf32, #tpu.memory_space<vmem>>, vector<1x16x16xf32>
    %661 = vector.shape_cast %660 : vector<1x16x16xf32> to vector<16x16xf32>
    %c106 = arith.constant 106 : index
    %662 = memref.load %arg2[%c106] : memref<196xf32, #tpu.memory_space<smem>>
    %663 = vector.broadcast %662 : f32 to vector<16x16xf32>
    %664 = arith.mulf %661, %663 : vector<16x16xf32>
    %665 = arith.addf %659, %664 : vector<16x16xf32>
    %c2_343 = arith.constant 2 : index
    %c1_344 = arith.constant 1 : index
    %c2_345 = arith.constant 2 : index
    %666 = vector.load %arg9[%c2_343, %c1_344, %c2_345] : memref<4x22x22xf32, #tpu.memory_space<vmem>>, vector<1x16x16xf32>
    %667 = vector.shape_cast %666 : vector<1x16x16xf32> to vector<16x16xf32>
    %c107 = arith.constant 107 : index
    %668 = memref.load %arg2[%c107] : memref<196xf32, #tpu.memory_space<smem>>
    %669 = vector.broadcast %668 : f32 to vector<16x16xf32>
    %670 = arith.mulf %667, %669 : vector<16x16xf32>
    %671 = arith.addf %665, %670 : vector<16x16xf32>
    %c2_346 = arith.constant 2 : index
    %c1_347 = arith.constant 1 : index
    %c3_348 = arith.constant 3 : index
    %672 = vector.load %arg9[%c2_346, %c1_347, %c3_348] : memref<4x22x22xf32, #tpu.memory_space<vmem>>, vector<1x16x16xf32>
    %673 = vector.shape_cast %672 : vector<1x16x16xf32> to vector<16x16xf32>
    %c108 = arith.constant 108 : index
    %674 = memref.load %arg2[%c108] : memref<196xf32, #tpu.memory_space<smem>>
    %675 = vector.broadcast %674 : f32 to vector<16x16xf32>
    %676 = arith.mulf %673, %675 : vector<16x16xf32>
    %677 = arith.addf %671, %676 : vector<16x16xf32>
    %c2_349 = arith.constant 2 : index
    %c1_350 = arith.constant 1 : index
    %c4_351 = arith.constant 4 : index
    %678 = vector.load %arg9[%c2_349, %c1_350, %c4_351] : memref<4x22x22xf32, #tpu.memory_space<vmem>>, vector<1x16x16xf32>
    %679 = vector.shape_cast %678 : vector<1x16x16xf32> to vector<16x16xf32>
    %c109 = arith.constant 109 : index
    %680 = memref.load %arg2[%c109] : memref<196xf32, #tpu.memory_space<smem>>
    %681 = vector.broadcast %680 : f32 to vector<16x16xf32>
    %682 = arith.mulf %679, %681 : vector<16x16xf32>
    %683 = arith.addf %677, %682 : vector<16x16xf32>
    %c2_352 = arith.constant 2 : index
    %c1_353 = arith.constant 1 : index
    %c5_354 = arith.constant 5 : index
    %684 = vector.load %arg9[%c2_352, %c1_353, %c5_354] : memref<4x22x22xf32, #tpu.memory_space<vmem>>, vector<1x16x16xf32>
    %685 = vector.shape_cast %684 : vector<1x16x16xf32> to vector<16x16xf32>
    %c110 = arith.constant 110 : index
    %686 = memref.load %arg2[%c110] : memref<196xf32, #tpu.memory_space<smem>>
    %687 = vector.broadcast %686 : f32 to vector<16x16xf32>
    %688 = arith.mulf %685, %687 : vector<16x16xf32>
    %689 = arith.addf %683, %688 : vector<16x16xf32>
    %c2_355 = arith.constant 2 : index
    %c1_356 = arith.constant 1 : index
    %c6_357 = arith.constant 6 : index
    %690 = vector.load %arg9[%c2_355, %c1_356, %c6_357] : memref<4x22x22xf32, #tpu.memory_space<vmem>>, vector<1x16x16xf32>
    %691 = vector.shape_cast %690 : vector<1x16x16xf32> to vector<16x16xf32>
    %c111 = arith.constant 111 : index
    %692 = memref.load %arg2[%c111] : memref<196xf32, #tpu.memory_space<smem>>
    %693 = vector.broadcast %692 : f32 to vector<16x16xf32>
    %694 = arith.mulf %691, %693 : vector<16x16xf32>
    %695 = arith.addf %689, %694 : vector<16x16xf32>
    %c2_358 = arith.constant 2 : index
    %c2_359 = arith.constant 2 : index
    %c0_360 = arith.constant 0 : index
    %696 = vector.load %arg9[%c2_358, %c2_359, %c0_360] : memref<4x22x22xf32, #tpu.memory_space<vmem>>, vector<1x16x16xf32>
    %697 = vector.shape_cast %696 : vector<1x16x16xf32> to vector<16x16xf32>
    %c112 = arith.constant 112 : index
    %698 = memref.load %arg2[%c112] : memref<196xf32, #tpu.memory_space<smem>>
    %699 = vector.broadcast %698 : f32 to vector<16x16xf32>
    %700 = arith.mulf %697, %699 : vector<16x16xf32>
    %701 = arith.addf %695, %700 : vector<16x16xf32>
    %c2_361 = arith.constant 2 : index
    %c2_362 = arith.constant 2 : index
    %c1_363 = arith.constant 1 : index
    %702 = vector.load %arg9[%c2_361, %c2_362, %c1_363] : memref<4x22x22xf32, #tpu.memory_space<vmem>>, vector<1x16x16xf32>
    %703 = vector.shape_cast %702 : vector<1x16x16xf32> to vector<16x16xf32>
    %c113 = arith.constant 113 : index
    %704 = memref.load %arg2[%c113] : memref<196xf32, #tpu.memory_space<smem>>
    %705 = vector.broadcast %704 : f32 to vector<16x16xf32>
    %706 = arith.mulf %703, %705 : vector<16x16xf32>
    %707 = arith.addf %701, %706 : vector<16x16xf32>
    %c2_364 = arith.constant 2 : index
    %c2_365 = arith.constant 2 : index
    %c2_366 = arith.constant 2 : index
    %708 = vector.load %arg9[%c2_364, %c2_365, %c2_366] : memref<4x22x22xf32, #tpu.memory_space<vmem>>, vector<1x16x16xf32>
    %709 = vector.shape_cast %708 : vector<1x16x16xf32> to vector<16x16xf32>
    %c114 = arith.constant 114 : index
    %710 = memref.load %arg2[%c114] : memref<196xf32, #tpu.memory_space<smem>>
    %711 = vector.broadcast %710 : f32 to vector<16x16xf32>
    %712 = arith.mulf %709, %711 : vector<16x16xf32>
    %713 = arith.addf %707, %712 : vector<16x16xf32>
    %c2_367 = arith.constant 2 : index
    %c2_368 = arith.constant 2 : index
    %c3_369 = arith.constant 3 : index
    %714 = vector.load %arg9[%c2_367, %c2_368, %c3_369] : memref<4x22x22xf32, #tpu.memory_space<vmem>>, vector<1x16x16xf32>
    %715 = vector.shape_cast %714 : vector<1x16x16xf32> to vector<16x16xf32>
    %c115 = arith.constant 115 : index
    %716 = memref.load %arg2[%c115] : memref<196xf32, #tpu.memory_space<smem>>
    %717 = vector.broadcast %716 : f32 to vector<16x16xf32>
    %718 = arith.mulf %715, %717 : vector<16x16xf32>
    %719 = arith.addf %713, %718 : vector<16x16xf32>
    %c2_370 = arith.constant 2 : index
    %c2_371 = arith.constant 2 : index
    %c4_372 = arith.constant 4 : index
    %720 = vector.load %arg9[%c2_370, %c2_371, %c4_372] : memref<4x22x22xf32, #tpu.memory_space<vmem>>, vector<1x16x16xf32>
    %721 = vector.shape_cast %720 : vector<1x16x16xf32> to vector<16x16xf32>
    %c116 = arith.constant 116 : index
    %722 = memref.load %arg2[%c116] : memref<196xf32, #tpu.memory_space<smem>>
    %723 = vector.broadcast %722 : f32 to vector<16x16xf32>
    %724 = arith.mulf %721, %723 : vector<16x16xf32>
    %725 = arith.addf %719, %724 : vector<16x16xf32>
    %c2_373 = arith.constant 2 : index
    %c2_374 = arith.constant 2 : index
    %c5_375 = arith.constant 5 : index
    %726 = vector.load %arg9[%c2_373, %c2_374, %c5_375] : memref<4x22x22xf32, #tpu.memory_space<vmem>>, vector<1x16x16xf32>
    %727 = vector.shape_cast %726 : vector<1x16x16xf32> to vector<16x16xf32>
    %c117 = arith.constant 117 : index
    %728 = memref.load %arg2[%c117] : memref<196xf32, #tpu.memory_space<smem>>
    %729 = vector.broadcast %728 : f32 to vector<16x16xf32>
    %730 = arith.mulf %727, %729 : vector<16x16xf32>
    %731 = arith.addf %725, %730 : vector<16x16xf32>
    %c2_376 = arith.constant 2 : index
    %c2_377 = arith.constant 2 : index
    %c6_378 = arith.constant 6 : index
    %732 = vector.load %arg9[%c2_376, %c2_377, %c6_378] : memref<4x22x22xf32, #tpu.memory_space<vmem>>, vector<1x16x16xf32>
    %733 = vector.shape_cast %732 : vector<1x16x16xf32> to vector<16x16xf32>
    %c118 = arith.constant 118 : index
    %734 = memref.load %arg2[%c118] : memref<196xf32, #tpu.memory_space<smem>>
    %735 = vector.broadcast %734 : f32 to vector<16x16xf32>
    %736 = arith.mulf %733, %735 : vector<16x16xf32>
    %737 = arith.addf %731, %736 : vector<16x16xf32>
    %c2_379 = arith.constant 2 : index
    %c3_380 = arith.constant 3 : index
    %c0_381 = arith.constant 0 : index
    %738 = vector.load %arg9[%c2_379, %c3_380, %c0_381] : memref<4x22x22xf32, #tpu.memory_space<vmem>>, vector<1x16x16xf32>
    %739 = vector.shape_cast %738 : vector<1x16x16xf32> to vector<16x16xf32>
    %c119 = arith.constant 119 : index
    %740 = memref.load %arg2[%c119] : memref<196xf32, #tpu.memory_space<smem>>
    %741 = vector.broadcast %740 : f32 to vector<16x16xf32>
    %742 = arith.mulf %739, %741 : vector<16x16xf32>
    %743 = arith.addf %737, %742 : vector<16x16xf32>
    %c2_382 = arith.constant 2 : index
    %c3_383 = arith.constant 3 : index
    %c1_384 = arith.constant 1 : index
    %744 = vector.load %arg9[%c2_382, %c3_383, %c1_384] : memref<4x22x22xf32, #tpu.memory_space<vmem>>, vector<1x16x16xf32>
    %745 = vector.shape_cast %744 : vector<1x16x16xf32> to vector<16x16xf32>
    %c120 = arith.constant 120 : index
    %746 = memref.load %arg2[%c120] : memref<196xf32, #tpu.memory_space<smem>>
    %747 = vector.broadcast %746 : f32 to vector<16x16xf32>
    %748 = arith.mulf %745, %747 : vector<16x16xf32>
    %749 = arith.addf %743, %748 : vector<16x16xf32>
    %c2_385 = arith.constant 2 : index
    %c3_386 = arith.constant 3 : index
    %c2_387 = arith.constant 2 : index
    %750 = vector.load %arg9[%c2_385, %c3_386, %c2_387] : memref<4x22x22xf32, #tpu.memory_space<vmem>>, vector<1x16x16xf32>
    %751 = vector.shape_cast %750 : vector<1x16x16xf32> to vector<16x16xf32>
    %c121 = arith.constant 121 : index
    %752 = memref.load %arg2[%c121] : memref<196xf32, #tpu.memory_space<smem>>
    %753 = vector.broadcast %752 : f32 to vector<16x16xf32>
    %754 = arith.mulf %751, %753 : vector<16x16xf32>
    %755 = arith.addf %749, %754 : vector<16x16xf32>
    %c2_388 = arith.constant 2 : index
    %c3_389 = arith.constant 3 : index
    %c3_390 = arith.constant 3 : index
    %756 = vector.load %arg9[%c2_388, %c3_389, %c3_390] : memref<4x22x22xf32, #tpu.memory_space<vmem>>, vector<1x16x16xf32>
    %757 = vector.shape_cast %756 : vector<1x16x16xf32> to vector<16x16xf32>
    %c122 = arith.constant 122 : index
    %758 = memref.load %arg2[%c122] : memref<196xf32, #tpu.memory_space<smem>>
    %759 = vector.broadcast %758 : f32 to vector<16x16xf32>
    %760 = arith.mulf %757, %759 : vector<16x16xf32>
    %761 = arith.addf %755, %760 : vector<16x16xf32>
    %c2_391 = arith.constant 2 : index
    %c3_392 = arith.constant 3 : index
    %c4_393 = arith.constant 4 : index
    %762 = vector.load %arg9[%c2_391, %c3_392, %c4_393] : memref<4x22x22xf32, #tpu.memory_space<vmem>>, vector<1x16x16xf32>
    %763 = vector.shape_cast %762 : vector<1x16x16xf32> to vector<16x16xf32>
    %c123 = arith.constant 123 : index
    %764 = memref.load %arg2[%c123] : memref<196xf32, #tpu.memory_space<smem>>
    %765 = vector.broadcast %764 : f32 to vector<16x16xf32>
    %766 = arith.mulf %763, %765 : vector<16x16xf32>
    %767 = arith.addf %761, %766 : vector<16x16xf32>
    %c2_394 = arith.constant 2 : index
    %c3_395 = arith.constant 3 : index
    %c5_396 = arith.constant 5 : index
    %768 = vector.load %arg9[%c2_394, %c3_395, %c5_396] : memref<4x22x22xf32, #tpu.memory_space<vmem>>, vector<1x16x16xf32>
    %769 = vector.shape_cast %768 : vector<1x16x16xf32> to vector<16x16xf32>
    %c124 = arith.constant 124 : index
    %770 = memref.load %arg2[%c124] : memref<196xf32, #tpu.memory_space<smem>>
    %771 = vector.broadcast %770 : f32 to vector<16x16xf32>
    %772 = arith.mulf %769, %771 : vector<16x16xf32>
    %773 = arith.addf %767, %772 : vector<16x16xf32>
    %c2_397 = arith.constant 2 : index
    %c3_398 = arith.constant 3 : index
    %c6_399 = arith.constant 6 : index
    %774 = vector.load %arg9[%c2_397, %c3_398, %c6_399] : memref<4x22x22xf32, #tpu.memory_space<vmem>>, vector<1x16x16xf32>
    %775 = vector.shape_cast %774 : vector<1x16x16xf32> to vector<16x16xf32>
    %c125 = arith.constant 125 : index
    %776 = memref.load %arg2[%c125] : memref<196xf32, #tpu.memory_space<smem>>
    %777 = vector.broadcast %776 : f32 to vector<16x16xf32>
    %778 = arith.mulf %775, %777 : vector<16x16xf32>
    %779 = arith.addf %773, %778 : vector<16x16xf32>
    %c2_400 = arith.constant 2 : index
    %c4_401 = arith.constant 4 : index
    %c0_402 = arith.constant 0 : index
    %780 = vector.load %arg9[%c2_400, %c4_401, %c0_402] : memref<4x22x22xf32, #tpu.memory_space<vmem>>, vector<1x16x16xf32>
    %781 = vector.shape_cast %780 : vector<1x16x16xf32> to vector<16x16xf32>
    %c126 = arith.constant 126 : index
    %782 = memref.load %arg2[%c126] : memref<196xf32, #tpu.memory_space<smem>>
    %783 = vector.broadcast %782 : f32 to vector<16x16xf32>
    %784 = arith.mulf %781, %783 : vector<16x16xf32>
    %785 = arith.addf %779, %784 : vector<16x16xf32>
    %c2_403 = arith.constant 2 : index
    %c4_404 = arith.constant 4 : index
    %c1_405 = arith.constant 1 : index
    %786 = vector.load %arg9[%c2_403, %c4_404, %c1_405] : memref<4x22x22xf32, #tpu.memory_space<vmem>>, vector<1x16x16xf32>
    %787 = vector.shape_cast %786 : vector<1x16x16xf32> to vector<16x16xf32>
    %c127 = arith.constant 127 : index
    %788 = memref.load %arg2[%c127] : memref<196xf32, #tpu.memory_space<smem>>
    %789 = vector.broadcast %788 : f32 to vector<16x16xf32>
    %790 = arith.mulf %787, %789 : vector<16x16xf32>
    %791 = arith.addf %785, %790 : vector<16x16xf32>
    %c2_406 = arith.constant 2 : index
    %c4_407 = arith.constant 4 : index
    %c2_408 = arith.constant 2 : index
    %792 = vector.load %arg9[%c2_406, %c4_407, %c2_408] : memref<4x22x22xf32, #tpu.memory_space<vmem>>, vector<1x16x16xf32>
    %793 = vector.shape_cast %792 : vector<1x16x16xf32> to vector<16x16xf32>
    %c128 = arith.constant 128 : index
    %794 = memref.load %arg2[%c128] : memref<196xf32, #tpu.memory_space<smem>>
    %795 = vector.broadcast %794 : f32 to vector<16x16xf32>
    %796 = arith.mulf %793, %795 : vector<16x16xf32>
    %797 = arith.addf %791, %796 : vector<16x16xf32>
    %c2_409 = arith.constant 2 : index
    %c4_410 = arith.constant 4 : index
    %c3_411 = arith.constant 3 : index
    %798 = vector.load %arg9[%c2_409, %c4_410, %c3_411] : memref<4x22x22xf32, #tpu.memory_space<vmem>>, vector<1x16x16xf32>
    %799 = vector.shape_cast %798 : vector<1x16x16xf32> to vector<16x16xf32>
    %c129 = arith.constant 129 : index
    %800 = memref.load %arg2[%c129] : memref<196xf32, #tpu.memory_space<smem>>
    %801 = vector.broadcast %800 : f32 to vector<16x16xf32>
    %802 = arith.mulf %799, %801 : vector<16x16xf32>
    %803 = arith.addf %797, %802 : vector<16x16xf32>
    %c2_412 = arith.constant 2 : index
    %c4_413 = arith.constant 4 : index
    %c4_414 = arith.constant 4 : index
    %804 = vector.load %arg9[%c2_412, %c4_413, %c4_414] : memref<4x22x22xf32, #tpu.memory_space<vmem>>, vector<1x16x16xf32>
    %805 = vector.shape_cast %804 : vector<1x16x16xf32> to vector<16x16xf32>
    %c130 = arith.constant 130 : index
    %806 = memref.load %arg2[%c130] : memref<196xf32, #tpu.memory_space<smem>>
    %807 = vector.broadcast %806 : f32 to vector<16x16xf32>
    %808 = arith.mulf %805, %807 : vector<16x16xf32>
    %809 = arith.addf %803, %808 : vector<16x16xf32>
    %c2_415 = arith.constant 2 : index
    %c4_416 = arith.constant 4 : index
    %c5_417 = arith.constant 5 : index
    %810 = vector.load %arg9[%c2_415, %c4_416, %c5_417] : memref<4x22x22xf32, #tpu.memory_space<vmem>>, vector<1x16x16xf32>
    %811 = vector.shape_cast %810 : vector<1x16x16xf32> to vector<16x16xf32>
    %c131 = arith.constant 131 : index
    %812 = memref.load %arg2[%c131] : memref<196xf32, #tpu.memory_space<smem>>
    %813 = vector.broadcast %812 : f32 to vector<16x16xf32>
    %814 = arith.mulf %811, %813 : vector<16x16xf32>
    %815 = arith.addf %809, %814 : vector<16x16xf32>
    %c2_418 = arith.constant 2 : index
    %c4_419 = arith.constant 4 : index
    %c6_420 = arith.constant 6 : index
    %816 = vector.load %arg9[%c2_418, %c4_419, %c6_420] : memref<4x22x22xf32, #tpu.memory_space<vmem>>, vector<1x16x16xf32>
    %817 = vector.shape_cast %816 : vector<1x16x16xf32> to vector<16x16xf32>
    %c132 = arith.constant 132 : index
    %818 = memref.load %arg2[%c132] : memref<196xf32, #tpu.memory_space<smem>>
    %819 = vector.broadcast %818 : f32 to vector<16x16xf32>
    %820 = arith.mulf %817, %819 : vector<16x16xf32>
    %821 = arith.addf %815, %820 : vector<16x16xf32>
    %c2_421 = arith.constant 2 : index
    %c5_422 = arith.constant 5 : index
    %c0_423 = arith.constant 0 : index
    %822 = vector.load %arg9[%c2_421, %c5_422, %c0_423] : memref<4x22x22xf32, #tpu.memory_space<vmem>>, vector<1x16x16xf32>
    %823 = vector.shape_cast %822 : vector<1x16x16xf32> to vector<16x16xf32>
    %c133 = arith.constant 133 : index
    %824 = memref.load %arg2[%c133] : memref<196xf32, #tpu.memory_space<smem>>
    %825 = vector.broadcast %824 : f32 to vector<16x16xf32>
    %826 = arith.mulf %823, %825 : vector<16x16xf32>
    %827 = arith.addf %821, %826 : vector<16x16xf32>
    %c2_424 = arith.constant 2 : index
    %c5_425 = arith.constant 5 : index
    %c1_426 = arith.constant 1 : index
    %828 = vector.load %arg9[%c2_424, %c5_425, %c1_426] : memref<4x22x22xf32, #tpu.memory_space<vmem>>, vector<1x16x16xf32>
    %829 = vector.shape_cast %828 : vector<1x16x16xf32> to vector<16x16xf32>
    %c134 = arith.constant 134 : index
    %830 = memref.load %arg2[%c134] : memref<196xf32, #tpu.memory_space<smem>>
    %831 = vector.broadcast %830 : f32 to vector<16x16xf32>
    %832 = arith.mulf %829, %831 : vector<16x16xf32>
    %833 = arith.addf %827, %832 : vector<16x16xf32>
    %c2_427 = arith.constant 2 : index
    %c5_428 = arith.constant 5 : index
    %c2_429 = arith.constant 2 : index
    %834 = vector.load %arg9[%c2_427, %c5_428, %c2_429] : memref<4x22x22xf32, #tpu.memory_space<vmem>>, vector<1x16x16xf32>
    %835 = vector.shape_cast %834 : vector<1x16x16xf32> to vector<16x16xf32>
    %c135 = arith.constant 135 : index
    %836 = memref.load %arg2[%c135] : memref<196xf32, #tpu.memory_space<smem>>
    %837 = vector.broadcast %836 : f32 to vector<16x16xf32>
    %838 = arith.mulf %835, %837 : vector<16x16xf32>
    %839 = arith.addf %833, %838 : vector<16x16xf32>
    %c2_430 = arith.constant 2 : index
    %c5_431 = arith.constant 5 : index
    %c3_432 = arith.constant 3 : index
    %840 = vector.load %arg9[%c2_430, %c5_431, %c3_432] : memref<4x22x22xf32, #tpu.memory_space<vmem>>, vector<1x16x16xf32>
    %841 = vector.shape_cast %840 : vector<1x16x16xf32> to vector<16x16xf32>
    %c136 = arith.constant 136 : index
    %842 = memref.load %arg2[%c136] : memref<196xf32, #tpu.memory_space<smem>>
    %843 = vector.broadcast %842 : f32 to vector<16x16xf32>
    %844 = arith.mulf %841, %843 : vector<16x16xf32>
    %845 = arith.addf %839, %844 : vector<16x16xf32>
    %c2_433 = arith.constant 2 : index
    %c5_434 = arith.constant 5 : index
    %c4_435 = arith.constant 4 : index
    %846 = vector.load %arg9[%c2_433, %c5_434, %c4_435] : memref<4x22x22xf32, #tpu.memory_space<vmem>>, vector<1x16x16xf32>
    %847 = vector.shape_cast %846 : vector<1x16x16xf32> to vector<16x16xf32>
    %c137 = arith.constant 137 : index
    %848 = memref.load %arg2[%c137] : memref<196xf32, #tpu.memory_space<smem>>
    %849 = vector.broadcast %848 : f32 to vector<16x16xf32>
    %850 = arith.mulf %847, %849 : vector<16x16xf32>
    %851 = arith.addf %845, %850 : vector<16x16xf32>
    %c2_436 = arith.constant 2 : index
    %c5_437 = arith.constant 5 : index
    %c5_438 = arith.constant 5 : index
    %852 = vector.load %arg9[%c2_436, %c5_437, %c5_438] : memref<4x22x22xf32, #tpu.memory_space<vmem>>, vector<1x16x16xf32>
    %853 = vector.shape_cast %852 : vector<1x16x16xf32> to vector<16x16xf32>
    %c138 = arith.constant 138 : index
    %854 = memref.load %arg2[%c138] : memref<196xf32, #tpu.memory_space<smem>>
    %855 = vector.broadcast %854 : f32 to vector<16x16xf32>
    %856 = arith.mulf %853, %855 : vector<16x16xf32>
    %857 = arith.addf %851, %856 : vector<16x16xf32>
    %c2_439 = arith.constant 2 : index
    %c5_440 = arith.constant 5 : index
    %c6_441 = arith.constant 6 : index
    %858 = vector.load %arg9[%c2_439, %c5_440, %c6_441] : memref<4x22x22xf32, #tpu.memory_space<vmem>>, vector<1x16x16xf32>
    %859 = vector.shape_cast %858 : vector<1x16x16xf32> to vector<16x16xf32>
    %c139 = arith.constant 139 : index
    %860 = memref.load %arg2[%c139] : memref<196xf32, #tpu.memory_space<smem>>
    %861 = vector.broadcast %860 : f32 to vector<16x16xf32>
    %862 = arith.mulf %859, %861 : vector<16x16xf32>
    %863 = arith.addf %857, %862 : vector<16x16xf32>
    %c2_442 = arith.constant 2 : index
    %c6_443 = arith.constant 6 : index
    %c0_444 = arith.constant 0 : index
    %864 = vector.load %arg9[%c2_442, %c6_443, %c0_444] : memref<4x22x22xf32, #tpu.memory_space<vmem>>, vector<1x16x16xf32>
    %865 = vector.shape_cast %864 : vector<1x16x16xf32> to vector<16x16xf32>
    %c140 = arith.constant 140 : index
    %866 = memref.load %arg2[%c140] : memref<196xf32, #tpu.memory_space<smem>>
    %867 = vector.broadcast %866 : f32 to vector<16x16xf32>
    %868 = arith.mulf %865, %867 : vector<16x16xf32>
    %869 = arith.addf %863, %868 : vector<16x16xf32>
    %c2_445 = arith.constant 2 : index
    %c6_446 = arith.constant 6 : index
    %c1_447 = arith.constant 1 : index
    %870 = vector.load %arg9[%c2_445, %c6_446, %c1_447] : memref<4x22x22xf32, #tpu.memory_space<vmem>>, vector<1x16x16xf32>
    %871 = vector.shape_cast %870 : vector<1x16x16xf32> to vector<16x16xf32>
    %c141 = arith.constant 141 : index
    %872 = memref.load %arg2[%c141] : memref<196xf32, #tpu.memory_space<smem>>
    %873 = vector.broadcast %872 : f32 to vector<16x16xf32>
    %874 = arith.mulf %871, %873 : vector<16x16xf32>
    %875 = arith.addf %869, %874 : vector<16x16xf32>
    %c2_448 = arith.constant 2 : index
    %c6_449 = arith.constant 6 : index
    %c2_450 = arith.constant 2 : index
    %876 = vector.load %arg9[%c2_448, %c6_449, %c2_450] : memref<4x22x22xf32, #tpu.memory_space<vmem>>, vector<1x16x16xf32>
    %877 = vector.shape_cast %876 : vector<1x16x16xf32> to vector<16x16xf32>
    %c142 = arith.constant 142 : index
    %878 = memref.load %arg2[%c142] : memref<196xf32, #tpu.memory_space<smem>>
    %879 = vector.broadcast %878 : f32 to vector<16x16xf32>
    %880 = arith.mulf %877, %879 : vector<16x16xf32>
    %881 = arith.addf %875, %880 : vector<16x16xf32>
    %c2_451 = arith.constant 2 : index
    %c6_452 = arith.constant 6 : index
    %c3_453 = arith.constant 3 : index
    %882 = vector.load %arg9[%c2_451, %c6_452, %c3_453] : memref<4x22x22xf32, #tpu.memory_space<vmem>>, vector<1x16x16xf32>
    %883 = vector.shape_cast %882 : vector<1x16x16xf32> to vector<16x16xf32>
    %c143 = arith.constant 143 : index
    %884 = memref.load %arg2[%c143] : memref<196xf32, #tpu.memory_space<smem>>
    %885 = vector.broadcast %884 : f32 to vector<16x16xf32>
    %886 = arith.mulf %883, %885 : vector<16x16xf32>
    %887 = arith.addf %881, %886 : vector<16x16xf32>
    %c2_454 = arith.constant 2 : index
    %c6_455 = arith.constant 6 : index
    %c4_456 = arith.constant 4 : index
    %888 = vector.load %arg9[%c2_454, %c6_455, %c4_456] : memref<4x22x22xf32, #tpu.memory_space<vmem>>, vector<1x16x16xf32>
    %889 = vector.shape_cast %888 : vector<1x16x16xf32> to vector<16x16xf32>
    %c144 = arith.constant 144 : index
    %890 = memref.load %arg2[%c144] : memref<196xf32, #tpu.memory_space<smem>>
    %891 = vector.broadcast %890 : f32 to vector<16x16xf32>
    %892 = arith.mulf %889, %891 : vector<16x16xf32>
    %893 = arith.addf %887, %892 : vector<16x16xf32>
    %c2_457 = arith.constant 2 : index
    %c6_458 = arith.constant 6 : index
    %c5_459 = arith.constant 5 : index
    %894 = vector.load %arg9[%c2_457, %c6_458, %c5_459] : memref<4x22x22xf32, #tpu.memory_space<vmem>>, vector<1x16x16xf32>
    %895 = vector.shape_cast %894 : vector<1x16x16xf32> to vector<16x16xf32>
    %c145 = arith.constant 145 : index
    %896 = memref.load %arg2[%c145] : memref<196xf32, #tpu.memory_space<smem>>
    %897 = vector.broadcast %896 : f32 to vector<16x16xf32>
    %898 = arith.mulf %895, %897 : vector<16x16xf32>
    %899 = arith.addf %893, %898 : vector<16x16xf32>
    %c2_460 = arith.constant 2 : index
    %c6_461 = arith.constant 6 : index
    %c6_462 = arith.constant 6 : index
    %900 = vector.load %arg9[%c2_460, %c6_461, %c6_462] : memref<4x22x22xf32, #tpu.memory_space<vmem>>, vector<1x16x16xf32>
    %901 = vector.shape_cast %900 : vector<1x16x16xf32> to vector<16x16xf32>
    %c146 = arith.constant 146 : index
    %902 = memref.load %arg2[%c146] : memref<196xf32, #tpu.memory_space<smem>>
    %903 = vector.broadcast %902 : f32 to vector<16x16xf32>
    %904 = arith.mulf %901, %903 : vector<16x16xf32>
    %905 = arith.addf %899, %904 : vector<16x16xf32>
    %c2_463 = arith.constant 2 : index
    %906 = memref.load %arg3[%c2_463] : memref<4xf32, #tpu.memory_space<smem>>
    %907 = vector.broadcast %906 : f32 to vector<16x16xf32>
    %908 = arith.mulf %905, %907 : vector<16x16xf32>
    %c2_464 = arith.constant 2 : index
    %909 = memref.load %arg4[%c2_464] : memref<4xf32, #tpu.memory_space<smem>>
    %910 = vector.broadcast %909 : f32 to vector<16x16xf32>
    %911 = arith.addf %908, %910 : vector<16x16xf32>
    %cst_465 = arith.constant 0.000000e+00 : f32
    %912 = vector.broadcast %cst_465 : f32 to vector<16x16xf32>
    %913 = arith.maximumf %911, %912 : vector<16x16xf32>
    %c2_466 = arith.constant 2 : index
    %c0_467 = arith.constant 0 : index
    %c0_468 = arith.constant 0 : index
    %914 = vector.load %arg10[%c2_466, %c0_467, %c0_468] : memref<4x16x16xf32, #tpu.memory_space<vmem>>, vector<1x16x16xf32>
    %915 = vector.shape_cast %914 : vector<1x16x16xf32> to vector<16x16xf32>
    %916 = vector.shape_cast %913 : vector<16x16xf32> to vector<1x16x16xf32>
    tpu.vector_store %arg10[%c2_466, %c0_467, %c0_468], %916 {strides = array<i32>} : memref<4x16x16xf32, #tpu.memory_space<vmem>>, vector<1x16x16xf32>,
    %c3_469 = arith.constant 3 : index
    %c0_470 = arith.constant 0 : index
    %c0_471 = arith.constant 0 : index
    %917 = vector.load %arg9[%c3_469, %c0_470, %c0_471] : memref<4x22x22xf32, #tpu.memory_space<vmem>>, vector<1x16x16xf32>
    %918 = vector.shape_cast %917 : vector<1x16x16xf32> to vector<16x16xf32>
    %c147 = arith.constant 147 : index
    %919 = memref.load %arg2[%c147] : memref<196xf32, #tpu.memory_space<smem>>
    %920 = vector.broadcast %919 : f32 to vector<16x16xf32>
    %921 = arith.mulf %918, %920 : vector<16x16xf32>
    %c3_472 = arith.constant 3 : index
    %c0_473 = arith.constant 0 : index
    %c1_474 = arith.constant 1 : index
    %922 = vector.load %arg9[%c3_472, %c0_473, %c1_474] : memref<4x22x22xf32, #tpu.memory_space<vmem>>, vector<1x16x16xf32>
    %923 = vector.shape_cast %922 : vector<1x16x16xf32> to vector<16x16xf32>
    %c148 = arith.constant 148 : index
    %924 = memref.load %arg2[%c148] : memref<196xf32, #tpu.memory_space<smem>>
    %925 = vector.broadcast %924 : f32 to vector<16x16xf32>
    %926 = arith.mulf %923, %925 : vector<16x16xf32>
    %927 = arith.addf %921, %926 : vector<16x16xf32>
    %c3_475 = arith.constant 3 : index
    %c0_476 = arith.constant 0 : index
    %c2_477 = arith.constant 2 : index
    %928 = vector.load %arg9[%c3_475, %c0_476, %c2_477] : memref<4x22x22xf32, #tpu.memory_space<vmem>>, vector<1x16x16xf32>
    %929 = vector.shape_cast %928 : vector<1x16x16xf32> to vector<16x16xf32>
    %c149 = arith.constant 149 : index
    %930 = memref.load %arg2[%c149] : memref<196xf32, #tpu.memory_space<smem>>
    %931 = vector.broadcast %930 : f32 to vector<16x16xf32>
    %932 = arith.mulf %929, %931 : vector<16x16xf32>
    %933 = arith.addf %927, %932 : vector<16x16xf32>
    %c3_478 = arith.constant 3 : index
    %c0_479 = arith.constant 0 : index
    %c3_480 = arith.constant 3 : index
    %934 = vector.load %arg9[%c3_478, %c0_479, %c3_480] : memref<4x22x22xf32, #tpu.memory_space<vmem>>, vector<1x16x16xf32>
    %935 = vector.shape_cast %934 : vector<1x16x16xf32> to vector<16x16xf32>
    %c150 = arith.constant 150 : index
    %936 = memref.load %arg2[%c150] : memref<196xf32, #tpu.memory_space<smem>>
    %937 = vector.broadcast %936 : f32 to vector<16x16xf32>
    %938 = arith.mulf %935, %937 : vector<16x16xf32>
    %939 = arith.addf %933, %938 : vector<16x16xf32>
    %c3_481 = arith.constant 3 : index
    %c0_482 = arith.constant 0 : index
    %c4_483 = arith.constant 4 : index
    %940 = vector.load %arg9[%c3_481, %c0_482, %c4_483] : memref<4x22x22xf32, #tpu.memory_space<vmem>>, vector<1x16x16xf32>
    %941 = vector.shape_cast %940 : vector<1x16x16xf32> to vector<16x16xf32>
    %c151 = arith.constant 151 : index
    %942 = memref.load %arg2[%c151] : memref<196xf32, #tpu.memory_space<smem>>
    %943 = vector.broadcast %942 : f32 to vector<16x16xf32>
    %944 = arith.mulf %941, %943 : vector<16x16xf32>
    %945 = arith.addf %939, %944 : vector<16x16xf32>
    %c3_484 = arith.constant 3 : index
    %c0_485 = arith.constant 0 : index
    %c5_486 = arith.constant 5 : index
    %946 = vector.load %arg9[%c3_484, %c0_485, %c5_486] : memref<4x22x22xf32, #tpu.memory_space<vmem>>, vector<1x16x16xf32>
    %947 = vector.shape_cast %946 : vector<1x16x16xf32> to vector<16x16xf32>
    %c152 = arith.constant 152 : index
    %948 = memref.load %arg2[%c152] : memref<196xf32, #tpu.memory_space<smem>>
    %949 = vector.broadcast %948 : f32 to vector<16x16xf32>
    %950 = arith.mulf %947, %949 : vector<16x16xf32>
    %951 = arith.addf %945, %950 : vector<16x16xf32>
    %c3_487 = arith.constant 3 : index
    %c0_488 = arith.constant 0 : index
    %c6_489 = arith.constant 6 : index
    %952 = vector.load %arg9[%c3_487, %c0_488, %c6_489] : memref<4x22x22xf32, #tpu.memory_space<vmem>>, vector<1x16x16xf32>
    %953 = vector.shape_cast %952 : vector<1x16x16xf32> to vector<16x16xf32>
    %c153 = arith.constant 153 : index
    %954 = memref.load %arg2[%c153] : memref<196xf32, #tpu.memory_space<smem>>
    %955 = vector.broadcast %954 : f32 to vector<16x16xf32>
    %956 = arith.mulf %953, %955 : vector<16x16xf32>
    %957 = arith.addf %951, %956 : vector<16x16xf32>
    %c3_490 = arith.constant 3 : index
    %c1_491 = arith.constant 1 : index
    %c0_492 = arith.constant 0 : index
    %958 = vector.load %arg9[%c3_490, %c1_491, %c0_492] : memref<4x22x22xf32, #tpu.memory_space<vmem>>, vector<1x16x16xf32>
    %959 = vector.shape_cast %958 : vector<1x16x16xf32> to vector<16x16xf32>
    %c154 = arith.constant 154 : index
    %960 = memref.load %arg2[%c154] : memref<196xf32, #tpu.memory_space<smem>>
    %961 = vector.broadcast %960 : f32 to vector<16x16xf32>
    %962 = arith.mulf %959, %961 : vector<16x16xf32>
    %963 = arith.addf %957, %962 : vector<16x16xf32>
    %c3_493 = arith.constant 3 : index
    %c1_494 = arith.constant 1 : index
    %c1_495 = arith.constant 1 : index
    %964 = vector.load %arg9[%c3_493, %c1_494, %c1_495] : memref<4x22x22xf32, #tpu.memory_space<vmem>>, vector<1x16x16xf32>
    %965 = vector.shape_cast %964 : vector<1x16x16xf32> to vector<16x16xf32>
    %c155 = arith.constant 155 : index
    %966 = memref.load %arg2[%c155] : memref<196xf32, #tpu.memory_space<smem>>
    %967 = vector.broadcast %966 : f32 to vector<16x16xf32>
    %968 = arith.mulf %965, %967 : vector<16x16xf32>
    %969 = arith.addf %963, %968 : vector<16x16xf32>
    %c3_496 = arith.constant 3 : index
    %c1_497 = arith.constant 1 : index
    %c2_498 = arith.constant 2 : index
    %970 = vector.load %arg9[%c3_496, %c1_497, %c2_498] : memref<4x22x22xf32, #tpu.memory_space<vmem>>, vector<1x16x16xf32>
    %971 = vector.shape_cast %970 : vector<1x16x16xf32> to vector<16x16xf32>
    %c156 = arith.constant 156 : index
    %972 = memref.load %arg2[%c156] : memref<196xf32, #tpu.memory_space<smem>>
    %973 = vector.broadcast %972 : f32 to vector<16x16xf32>
    %974 = arith.mulf %971, %973 : vector<16x16xf32>
    %975 = arith.addf %969, %974 : vector<16x16xf32>
    %c3_499 = arith.constant 3 : index
    %c1_500 = arith.constant 1 : index
    %c3_501 = arith.constant 3 : index
    %976 = vector.load %arg9[%c3_499, %c1_500, %c3_501] : memref<4x22x22xf32, #tpu.memory_space<vmem>>, vector<1x16x16xf32>
    %977 = vector.shape_cast %976 : vector<1x16x16xf32> to vector<16x16xf32>
    %c157 = arith.constant 157 : index
    %978 = memref.load %arg2[%c157] : memref<196xf32, #tpu.memory_space<smem>>
    %979 = vector.broadcast %978 : f32 to vector<16x16xf32>
    %980 = arith.mulf %977, %979 : vector<16x16xf32>
    %981 = arith.addf %975, %980 : vector<16x16xf32>
    %c3_502 = arith.constant 3 : index
    %c1_503 = arith.constant 1 : index
    %c4_504 = arith.constant 4 : index
    %982 = vector.load %arg9[%c3_502, %c1_503, %c4_504] : memref<4x22x22xf32, #tpu.memory_space<vmem>>, vector<1x16x16xf32>
    %983 = vector.shape_cast %982 : vector<1x16x16xf32> to vector<16x16xf32>
    %c158 = arith.constant 158 : index
    %984 = memref.load %arg2[%c158] : memref<196xf32, #tpu.memory_space<smem>>
    %985 = vector.broadcast %984 : f32 to vector<16x16xf32>
    %986 = arith.mulf %983, %985 : vector<16x16xf32>
    %987 = arith.addf %981, %986 : vector<16x16xf32>
    %c3_505 = arith.constant 3 : index
    %c1_506 = arith.constant 1 : index
    %c5_507 = arith.constant 5 : index
    %988 = vector.load %arg9[%c3_505, %c1_506, %c5_507] : memref<4x22x22xf32, #tpu.memory_space<vmem>>, vector<1x16x16xf32>
    %989 = vector.shape_cast %988 : vector<1x16x16xf32> to vector<16x16xf32>
    %c159 = arith.constant 159 : index
    %990 = memref.load %arg2[%c159] : memref<196xf32, #tpu.memory_space<smem>>
    %991 = vector.broadcast %990 : f32 to vector<16x16xf32>
    %992 = arith.mulf %989, %991 : vector<16x16xf32>
    %993 = arith.addf %987, %992 : vector<16x16xf32>
    %c3_508 = arith.constant 3 : index
    %c1_509 = arith.constant 1 : index
    %c6_510 = arith.constant 6 : index
    %994 = vector.load %arg9[%c3_508, %c1_509, %c6_510] : memref<4x22x22xf32, #tpu.memory_space<vmem>>, vector<1x16x16xf32>
    %995 = vector.shape_cast %994 : vector<1x16x16xf32> to vector<16x16xf32>
    %c160 = arith.constant 160 : index
    %996 = memref.load %arg2[%c160] : memref<196xf32, #tpu.memory_space<smem>>
    %997 = vector.broadcast %996 : f32 to vector<16x16xf32>
    %998 = arith.mulf %995, %997 : vector<16x16xf32>
    %999 = arith.addf %993, %998 : vector<16x16xf32>
    %c3_511 = arith.constant 3 : index
    %c2_512 = arith.constant 2 : index
    %c0_513 = arith.constant 0 : index
    %1000 = vector.load %arg9[%c3_511, %c2_512, %c0_513] : memref<4x22x22xf32, #tpu.memory_space<vmem>>, vector<1x16x16xf32>
    %1001 = vector.shape_cast %1000 : vector<1x16x16xf32> to vector<16x16xf32>
    %c161 = arith.constant 161 : index
    %1002 = memref.load %arg2[%c161] : memref<196xf32, #tpu.memory_space<smem>>
    %1003 = vector.broadcast %1002 : f32 to vector<16x16xf32>
    %1004 = arith.mulf %1001, %1003 : vector<16x16xf32>
    %1005 = arith.addf %999, %1004 : vector<16x16xf32>
    %c3_514 = arith.constant 3 : index
    %c2_515 = arith.constant 2 : index
    %c1_516 = arith.constant 1 : index
    %1006 = vector.load %arg9[%c3_514, %c2_515, %c1_516] : memref<4x22x22xf32, #tpu.memory_space<vmem>>, vector<1x16x16xf32>
    %1007 = vector.shape_cast %1006 : vector<1x16x16xf32> to vector<16x16xf32>
    %c162 = arith.constant 162 : index
    %1008 = memref.load %arg2[%c162] : memref<196xf32, #tpu.memory_space<smem>>
    %1009 = vector.broadcast %1008 : f32 to vector<16x16xf32>
    %1010 = arith.mulf %1007, %1009 : vector<16x16xf32>
    %1011 = arith.addf %1005, %1010 : vector<16x16xf32>
    %c3_517 = arith.constant 3 : index
    %c2_518 = arith.constant 2 : index
    %c2_519 = arith.constant 2 : index
    %1012 = vector.load %arg9[%c3_517, %c2_518, %c2_519] : memref<4x22x22xf32, #tpu.memory_space<vmem>>, vector<1x16x16xf32>
    %1013 = vector.shape_cast %1012 : vector<1x16x16xf32> to vector<16x16xf32>
    %c163 = arith.constant 163 : index
    %1014 = memref.load %arg2[%c163] : memref<196xf32, #tpu.memory_space<smem>>
    %1015 = vector.broadcast %1014 : f32 to vector<16x16xf32>
    %1016 = arith.mulf %1013, %1015 : vector<16x16xf32>
    %1017 = arith.addf %1011, %1016 : vector<16x16xf32>
    %c3_520 = arith.constant 3 : index
    %c2_521 = arith.constant 2 : index
    %c3_522 = arith.constant 3 : index
    %1018 = vector.load %arg9[%c3_520, %c2_521, %c3_522] : memref<4x22x22xf32, #tpu.memory_space<vmem>>, vector<1x16x16xf32>
    %1019 = vector.shape_cast %1018 : vector<1x16x16xf32> to vector<16x16xf32>
    %c164 = arith.constant 164 : index
    %1020 = memref.load %arg2[%c164] : memref<196xf32, #tpu.memory_space<smem>>
    %1021 = vector.broadcast %1020 : f32 to vector<16x16xf32>
    %1022 = arith.mulf %1019, %1021 : vector<16x16xf32>
    %1023 = arith.addf %1017, %1022 : vector<16x16xf32>
    %c3_523 = arith.constant 3 : index
    %c2_524 = arith.constant 2 : index
    %c4_525 = arith.constant 4 : index
    %1024 = vector.load %arg9[%c3_523, %c2_524, %c4_525] : memref<4x22x22xf32, #tpu.memory_space<vmem>>, vector<1x16x16xf32>
    %1025 = vector.shape_cast %1024 : vector<1x16x16xf32> to vector<16x16xf32>
    %c165 = arith.constant 165 : index
    %1026 = memref.load %arg2[%c165] : memref<196xf32, #tpu.memory_space<smem>>
    %1027 = vector.broadcast %1026 : f32 to vector<16x16xf32>
    %1028 = arith.mulf %1025, %1027 : vector<16x16xf32>
    %1029 = arith.addf %1023, %1028 : vector<16x16xf32>
    %c3_526 = arith.constant 3 : index
    %c2_527 = arith.constant 2 : index
    %c5_528 = arith.constant 5 : index
    %1030 = vector.load %arg9[%c3_526, %c2_527, %c5_528] : memref<4x22x22xf32, #tpu.memory_space<vmem>>, vector<1x16x16xf32>
    %1031 = vector.shape_cast %1030 : vector<1x16x16xf32> to vector<16x16xf32>
    %c166 = arith.constant 166 : index
    %1032 = memref.load %arg2[%c166] : memref<196xf32, #tpu.memory_space<smem>>
    %1033 = vector.broadcast %1032 : f32 to vector<16x16xf32>
    %1034 = arith.mulf %1031, %1033 : vector<16x16xf32>
    %1035 = arith.addf %1029, %1034 : vector<16x16xf32>
    %c3_529 = arith.constant 3 : index
    %c2_530 = arith.constant 2 : index
    %c6_531 = arith.constant 6 : index
    %1036 = vector.load %arg9[%c3_529, %c2_530, %c6_531] : memref<4x22x22xf32, #tpu.memory_space<vmem>>, vector<1x16x16xf32>
    %1037 = vector.shape_cast %1036 : vector<1x16x16xf32> to vector<16x16xf32>
    %c167 = arith.constant 167 : index
    %1038 = memref.load %arg2[%c167] : memref<196xf32, #tpu.memory_space<smem>>
    %1039 = vector.broadcast %1038 : f32 to vector<16x16xf32>
    %1040 = arith.mulf %1037, %1039 : vector<16x16xf32>
    %1041 = arith.addf %1035, %1040 : vector<16x16xf32>
    %c3_532 = arith.constant 3 : index
    %c3_533 = arith.constant 3 : index
    %c0_534 = arith.constant 0 : index
    %1042 = vector.load %arg9[%c3_532, %c3_533, %c0_534] : memref<4x22x22xf32, #tpu.memory_space<vmem>>, vector<1x16x16xf32>
    %1043 = vector.shape_cast %1042 : vector<1x16x16xf32> to vector<16x16xf32>
    %c168 = arith.constant 168 : index
    %1044 = memref.load %arg2[%c168] : memref<196xf32, #tpu.memory_space<smem>>
    %1045 = vector.broadcast %1044 : f32 to vector<16x16xf32>
    %1046 = arith.mulf %1043, %1045 : vector<16x16xf32>
    %1047 = arith.addf %1041, %1046 : vector<16x16xf32>
    %c3_535 = arith.constant 3 : index
    %c3_536 = arith.constant 3 : index
    %c1_537 = arith.constant 1 : index
    %1048 = vector.load %arg9[%c3_535, %c3_536, %c1_537] : memref<4x22x22xf32, #tpu.memory_space<vmem>>, vector<1x16x16xf32>
    %1049 = vector.shape_cast %1048 : vector<1x16x16xf32> to vector<16x16xf32>
    %c169 = arith.constant 169 : index
    %1050 = memref.load %arg2[%c169] : memref<196xf32, #tpu.memory_space<smem>>
    %1051 = vector.broadcast %1050 : f32 to vector<16x16xf32>
    %1052 = arith.mulf %1049, %1051 : vector<16x16xf32>
    %1053 = arith.addf %1047, %1052 : vector<16x16xf32>
    %c3_538 = arith.constant 3 : index
    %c3_539 = arith.constant 3 : index
    %c2_540 = arith.constant 2 : index
    %1054 = vector.load %arg9[%c3_538, %c3_539, %c2_540] : memref<4x22x22xf32, #tpu.memory_space<vmem>>, vector<1x16x16xf32>
    %1055 = vector.shape_cast %1054 : vector<1x16x16xf32> to vector<16x16xf32>
    %c170 = arith.constant 170 : index
    %1056 = memref.load %arg2[%c170] : memref<196xf32, #tpu.memory_space<smem>>
    %1057 = vector.broadcast %1056 : f32 to vector<16x16xf32>
    %1058 = arith.mulf %1055, %1057 : vector<16x16xf32>
    %1059 = arith.addf %1053, %1058 : vector<16x16xf32>
    %c3_541 = arith.constant 3 : index
    %c3_542 = arith.constant 3 : index
    %c3_543 = arith.constant 3 : index
    %1060 = vector.load %arg9[%c3_541, %c3_542, %c3_543] : memref<4x22x22xf32, #tpu.memory_space<vmem>>, vector<1x16x16xf32>
    %1061 = vector.shape_cast %1060 : vector<1x16x16xf32> to vector<16x16xf32>
    %c171 = arith.constant 171 : index
    %1062 = memref.load %arg2[%c171] : memref<196xf32, #tpu.memory_space<smem>>
    %1063 = vector.broadcast %1062 : f32 to vector<16x16xf32>
    %1064 = arith.mulf %1061, %1063 : vector<16x16xf32>
    %1065 = arith.addf %1059, %1064 : vector<16x16xf32>
    %c3_544 = arith.constant 3 : index
    %c3_545 = arith.constant 3 : index
    %c4_546 = arith.constant 4 : index
    %1066 = vector.load %arg9[%c3_544, %c3_545, %c4_546] : memref<4x22x22xf32, #tpu.memory_space<vmem>>, vector<1x16x16xf32>
    %1067 = vector.shape_cast %1066 : vector<1x16x16xf32> to vector<16x16xf32>
    %c172 = arith.constant 172 : index
    %1068 = memref.load %arg2[%c172] : memref<196xf32, #tpu.memory_space<smem>>
    %1069 = vector.broadcast %1068 : f32 to vector<16x16xf32>
    %1070 = arith.mulf %1067, %1069 : vector<16x16xf32>
    %1071 = arith.addf %1065, %1070 : vector<16x16xf32>
    %c3_547 = arith.constant 3 : index
    %c3_548 = arith.constant 3 : index
    %c5_549 = arith.constant 5 : index
    %1072 = vector.load %arg9[%c3_547, %c3_548, %c5_549] : memref<4x22x22xf32, #tpu.memory_space<vmem>>, vector<1x16x16xf32>
    %1073 = vector.shape_cast %1072 : vector<1x16x16xf32> to vector<16x16xf32>
    %c173 = arith.constant 173 : index
    %1074 = memref.load %arg2[%c173] : memref<196xf32, #tpu.memory_space<smem>>
    %1075 = vector.broadcast %1074 : f32 to vector<16x16xf32>
    %1076 = arith.mulf %1073, %1075 : vector<16x16xf32>
    %1077 = arith.addf %1071, %1076 : vector<16x16xf32>
    %c3_550 = arith.constant 3 : index
    %c3_551 = arith.constant 3 : index
    %c6_552 = arith.constant 6 : index
    %1078 = vector.load %arg9[%c3_550, %c3_551, %c6_552] : memref<4x22x22xf32, #tpu.memory_space<vmem>>, vector<1x16x16xf32>
    %1079 = vector.shape_cast %1078 : vector<1x16x16xf32> to vector<16x16xf32>
    %c174 = arith.constant 174 : index
    %1080 = memref.load %arg2[%c174] : memref<196xf32, #tpu.memory_space<smem>>
    %1081 = vector.broadcast %1080 : f32 to vector<16x16xf32>
    %1082 = arith.mulf %1079, %1081 : vector<16x16xf32>
    %1083 = arith.addf %1077, %1082 : vector<16x16xf32>
    %c3_553 = arith.constant 3 : index
    %c4_554 = arith.constant 4 : index
    %c0_555 = arith.constant 0 : index
    %1084 = vector.load %arg9[%c3_553, %c4_554, %c0_555] : memref<4x22x22xf32, #tpu.memory_space<vmem>>, vector<1x16x16xf32>
    %1085 = vector.shape_cast %1084 : vector<1x16x16xf32> to vector<16x16xf32>
    %c175 = arith.constant 175 : index
    %1086 = memref.load %arg2[%c175] : memref<196xf32, #tpu.memory_space<smem>>
    %1087 = vector.broadcast %1086 : f32 to vector<16x16xf32>
    %1088 = arith.mulf %1085, %1087 : vector<16x16xf32>
    %1089 = arith.addf %1083, %1088 : vector<16x16xf32>
    %c3_556 = arith.constant 3 : index
    %c4_557 = arith.constant 4 : index
    %c1_558 = arith.constant 1 : index
    %1090 = vector.load %arg9[%c3_556, %c4_557, %c1_558] : memref<4x22x22xf32, #tpu.memory_space<vmem>>, vector<1x16x16xf32>
    %1091 = vector.shape_cast %1090 : vector<1x16x16xf32> to vector<16x16xf32>
    %c176 = arith.constant 176 : index
    %1092 = memref.load %arg2[%c176] : memref<196xf32, #tpu.memory_space<smem>>
    %1093 = vector.broadcast %1092 : f32 to vector<16x16xf32>
    %1094 = arith.mulf %1091, %1093 : vector<16x16xf32>
    %1095 = arith.addf %1089, %1094 : vector<16x16xf32>
    %c3_559 = arith.constant 3 : index
    %c4_560 = arith.constant 4 : index
    %c2_561 = arith.constant 2 : index
    %1096 = vector.load %arg9[%c3_559, %c4_560, %c2_561] : memref<4x22x22xf32, #tpu.memory_space<vmem>>, vector<1x16x16xf32>
    %1097 = vector.shape_cast %1096 : vector<1x16x16xf32> to vector<16x16xf32>
    %c177 = arith.constant 177 : index
    %1098 = memref.load %arg2[%c177] : memref<196xf32, #tpu.memory_space<smem>>
    %1099 = vector.broadcast %1098 : f32 to vector<16x16xf32>
    %1100 = arith.mulf %1097, %1099 : vector<16x16xf32>
    %1101 = arith.addf %1095, %1100 : vector<16x16xf32>
    %c3_562 = arith.constant 3 : index
    %c4_563 = arith.constant 4 : index
    %c3_564 = arith.constant 3 : index
    %1102 = vector.load %arg9[%c3_562, %c4_563, %c3_564] : memref<4x22x22xf32, #tpu.memory_space<vmem>>, vector<1x16x16xf32>
    %1103 = vector.shape_cast %1102 : vector<1x16x16xf32> to vector<16x16xf32>
    %c178 = arith.constant 178 : index
    %1104 = memref.load %arg2[%c178] : memref<196xf32, #tpu.memory_space<smem>>
    %1105 = vector.broadcast %1104 : f32 to vector<16x16xf32>
    %1106 = arith.mulf %1103, %1105 : vector<16x16xf32>
    %1107 = arith.addf %1101, %1106 : vector<16x16xf32>
    %c3_565 = arith.constant 3 : index
    %c4_566 = arith.constant 4 : index
    %c4_567 = arith.constant 4 : index
    %1108 = vector.load %arg9[%c3_565, %c4_566, %c4_567] : memref<4x22x22xf32, #tpu.memory_space<vmem>>, vector<1x16x16xf32>
    %1109 = vector.shape_cast %1108 : vector<1x16x16xf32> to vector<16x16xf32>
    %c179 = arith.constant 179 : index
    %1110 = memref.load %arg2[%c179] : memref<196xf32, #tpu.memory_space<smem>>
    %1111 = vector.broadcast %1110 : f32 to vector<16x16xf32>
    %1112 = arith.mulf %1109, %1111 : vector<16x16xf32>
    %1113 = arith.addf %1107, %1112 : vector<16x16xf32>
    %c3_568 = arith.constant 3 : index
    %c4_569 = arith.constant 4 : index
    %c5_570 = arith.constant 5 : index
    %1114 = vector.load %arg9[%c3_568, %c4_569, %c5_570] : memref<4x22x22xf32, #tpu.memory_space<vmem>>, vector<1x16x16xf32>
    %1115 = vector.shape_cast %1114 : vector<1x16x16xf32> to vector<16x16xf32>
    %c180 = arith.constant 180 : index
    %1116 = memref.load %arg2[%c180] : memref<196xf32, #tpu.memory_space<smem>>
    %1117 = vector.broadcast %1116 : f32 to vector<16x16xf32>
    %1118 = arith.mulf %1115, %1117 : vector<16x16xf32>
    %1119 = arith.addf %1113, %1118 : vector<16x16xf32>
    %c3_571 = arith.constant 3 : index
    %c4_572 = arith.constant 4 : index
    %c6_573 = arith.constant 6 : index
    %1120 = vector.load %arg9[%c3_571, %c4_572, %c6_573] : memref<4x22x22xf32, #tpu.memory_space<vmem>>, vector<1x16x16xf32>
    %1121 = vector.shape_cast %1120 : vector<1x16x16xf32> to vector<16x16xf32>
    %c181 = arith.constant 181 : index
    %1122 = memref.load %arg2[%c181] : memref<196xf32, #tpu.memory_space<smem>>
    %1123 = vector.broadcast %1122 : f32 to vector<16x16xf32>
    %1124 = arith.mulf %1121, %1123 : vector<16x16xf32>
    %1125 = arith.addf %1119, %1124 : vector<16x16xf32>
    %c3_574 = arith.constant 3 : index
    %c5_575 = arith.constant 5 : index
    %c0_576 = arith.constant 0 : index
    %1126 = vector.load %arg9[%c3_574, %c5_575, %c0_576] : memref<4x22x22xf32, #tpu.memory_space<vmem>>, vector<1x16x16xf32>
    %1127 = vector.shape_cast %1126 : vector<1x16x16xf32> to vector<16x16xf32>
    %c182 = arith.constant 182 : index
    %1128 = memref.load %arg2[%c182] : memref<196xf32, #tpu.memory_space<smem>>
    %1129 = vector.broadcast %1128 : f32 to vector<16x16xf32>
    %1130 = arith.mulf %1127, %1129 : vector<16x16xf32>
    %1131 = arith.addf %1125, %1130 : vector<16x16xf32>
    %c3_577 = arith.constant 3 : index
    %c5_578 = arith.constant 5 : index
    %c1_579 = arith.constant 1 : index
    %1132 = vector.load %arg9[%c3_577, %c5_578, %c1_579] : memref<4x22x22xf32, #tpu.memory_space<vmem>>, vector<1x16x16xf32>
    %1133 = vector.shape_cast %1132 : vector<1x16x16xf32> to vector<16x16xf32>
    %c183 = arith.constant 183 : index
    %1134 = memref.load %arg2[%c183] : memref<196xf32, #tpu.memory_space<smem>>
    %1135 = vector.broadcast %1134 : f32 to vector<16x16xf32>
    %1136 = arith.mulf %1133, %1135 : vector<16x16xf32>
    %1137 = arith.addf %1131, %1136 : vector<16x16xf32>
    %c3_580 = arith.constant 3 : index
    %c5_581 = arith.constant 5 : index
    %c2_582 = arith.constant 2 : index
    %1138 = vector.load %arg9[%c3_580, %c5_581, %c2_582] : memref<4x22x22xf32, #tpu.memory_space<vmem>>, vector<1x16x16xf32>
    %1139 = vector.shape_cast %1138 : vector<1x16x16xf32> to vector<16x16xf32>
    %c184 = arith.constant 184 : index
    %1140 = memref.load %arg2[%c184] : memref<196xf32, #tpu.memory_space<smem>>
    %1141 = vector.broadcast %1140 : f32 to vector<16x16xf32>
    %1142 = arith.mulf %1139, %1141 : vector<16x16xf32>
    %1143 = arith.addf %1137, %1142 : vector<16x16xf32>
    %c3_583 = arith.constant 3 : index
    %c5_584 = arith.constant 5 : index
    %c3_585 = arith.constant 3 : index
    %1144 = vector.load %arg9[%c3_583, %c5_584, %c3_585] : memref<4x22x22xf32, #tpu.memory_space<vmem>>, vector<1x16x16xf32>
    %1145 = vector.shape_cast %1144 : vector<1x16x16xf32> to vector<16x16xf32>
    %c185 = arith.constant 185 : index
    %1146 = memref.load %arg2[%c185] : memref<196xf32, #tpu.memory_space<smem>>
    %1147 = vector.broadcast %1146 : f32 to vector<16x16xf32>
    %1148 = arith.mulf %1145, %1147 : vector<16x16xf32>
    %1149 = arith.addf %1143, %1148 : vector<16x16xf32>
    %c3_586 = arith.constant 3 : index
    %c5_587 = arith.constant 5 : index
    %c4_588 = arith.constant 4 : index
    %1150 = vector.load %arg9[%c3_586, %c5_587, %c4_588] : memref<4x22x22xf32, #tpu.memory_space<vmem>>, vector<1x16x16xf32>
    %1151 = vector.shape_cast %1150 : vector<1x16x16xf32> to vector<16x16xf32>
    %c186 = arith.constant 186 : index
    %1152 = memref.load %arg2[%c186] : memref<196xf32, #tpu.memory_space<smem>>
    %1153 = vector.broadcast %1152 : f32 to vector<16x16xf32>
    %1154 = arith.mulf %1151, %1153 : vector<16x16xf32>
    %1155 = arith.addf %1149, %1154 : vector<16x16xf32>
    %c3_589 = arith.constant 3 : index
    %c5_590 = arith.constant 5 : index
    %c5_591 = arith.constant 5 : index
    %1156 = vector.load %arg9[%c3_589, %c5_590, %c5_591] : memref<4x22x22xf32, #tpu.memory_space<vmem>>, vector<1x16x16xf32>
    %1157 = vector.shape_cast %1156 : vector<1x16x16xf32> to vector<16x16xf32>
    %c187 = arith.constant 187 : index
    %1158 = memref.load %arg2[%c187] : memref<196xf32, #tpu.memory_space<smem>>
    %1159 = vector.broadcast %1158 : f32 to vector<16x16xf32>
    %1160 = arith.mulf %1157, %1159 : vector<16x16xf32>
    %1161 = arith.addf %1155, %1160 : vector<16x16xf32>
    %c3_592 = arith.constant 3 : index
    %c5_593 = arith.constant 5 : index
    %c6_594 = arith.constant 6 : index
    %1162 = vector.load %arg9[%c3_592, %c5_593, %c6_594] : memref<4x22x22xf32, #tpu.memory_space<vmem>>, vector<1x16x16xf32>
    %1163 = vector.shape_cast %1162 : vector<1x16x16xf32> to vector<16x16xf32>
    %c188 = arith.constant 188 : index
    %1164 = memref.load %arg2[%c188] : memref<196xf32, #tpu.memory_space<smem>>
    %1165 = vector.broadcast %1164 : f32 to vector<16x16xf32>
    %1166 = arith.mulf %1163, %1165 : vector<16x16xf32>
    %1167 = arith.addf %1161, %1166 : vector<16x16xf32>
    %c3_595 = arith.constant 3 : index
    %c6_596 = arith.constant 6 : index
    %c0_597 = arith.constant 0 : index
    %1168 = vector.load %arg9[%c3_595, %c6_596, %c0_597] : memref<4x22x22xf32, #tpu.memory_space<vmem>>, vector<1x16x16xf32>
    %1169 = vector.shape_cast %1168 : vector<1x16x16xf32> to vector<16x16xf32>
    %c189 = arith.constant 189 : index
    %1170 = memref.load %arg2[%c189] : memref<196xf32, #tpu.memory_space<smem>>
    %1171 = vector.broadcast %1170 : f32 to vector<16x16xf32>
    %1172 = arith.mulf %1169, %1171 : vector<16x16xf32>
    %1173 = arith.addf %1167, %1172 : vector<16x16xf32>
    %c3_598 = arith.constant 3 : index
    %c6_599 = arith.constant 6 : index
    %c1_600 = arith.constant 1 : index
    %1174 = vector.load %arg9[%c3_598, %c6_599, %c1_600] : memref<4x22x22xf32, #tpu.memory_space<vmem>>, vector<1x16x16xf32>
    %1175 = vector.shape_cast %1174 : vector<1x16x16xf32> to vector<16x16xf32>
    %c190 = arith.constant 190 : index
    %1176 = memref.load %arg2[%c190] : memref<196xf32, #tpu.memory_space<smem>>
    %1177 = vector.broadcast %1176 : f32 to vector<16x16xf32>
    %1178 = arith.mulf %1175, %1177 : vector<16x16xf32>
    %1179 = arith.addf %1173, %1178 : vector<16x16xf32>
    %c3_601 = arith.constant 3 : index
    %c6_602 = arith.constant 6 : index
    %c2_603 = arith.constant 2 : index
    %1180 = vector.load %arg9[%c3_601, %c6_602, %c2_603] : memref<4x22x22xf32, #tpu.memory_space<vmem>>, vector<1x16x16xf32>
    %1181 = vector.shape_cast %1180 : vector<1x16x16xf32> to vector<16x16xf32>
    %c191 = arith.constant 191 : index
    %1182 = memref.load %arg2[%c191] : memref<196xf32, #tpu.memory_space<smem>>
    %1183 = vector.broadcast %1182 : f32 to vector<16x16xf32>
    %1184 = arith.mulf %1181, %1183 : vector<16x16xf32>
    %1185 = arith.addf %1179, %1184 : vector<16x16xf32>
    %c3_604 = arith.constant 3 : index
    %c6_605 = arith.constant 6 : index
    %c3_606 = arith.constant 3 : index
    %1186 = vector.load %arg9[%c3_604, %c6_605, %c3_606] : memref<4x22x22xf32, #tpu.memory_space<vmem>>, vector<1x16x16xf32>
    %1187 = vector.shape_cast %1186 : vector<1x16x16xf32> to vector<16x16xf32>
    %c192 = arith.constant 192 : index
    %1188 = memref.load %arg2[%c192] : memref<196xf32, #tpu.memory_space<smem>>
    %1189 = vector.broadcast %1188 : f32 to vector<16x16xf32>
    %1190 = arith.mulf %1187, %1189 : vector<16x16xf32>
    %1191 = arith.addf %1185, %1190 : vector<16x16xf32>
    %c3_607 = arith.constant 3 : index
    %c6_608 = arith.constant 6 : index
    %c4_609 = arith.constant 4 : index
    %1192 = vector.load %arg9[%c3_607, %c6_608, %c4_609] : memref<4x22x22xf32, #tpu.memory_space<vmem>>, vector<1x16x16xf32>
    %1193 = vector.shape_cast %1192 : vector<1x16x16xf32> to vector<16x16xf32>
    %c193 = arith.constant 193 : index
    %1194 = memref.load %arg2[%c193] : memref<196xf32, #tpu.memory_space<smem>>
    %1195 = vector.broadcast %1194 : f32 to vector<16x16xf32>
    %1196 = arith.mulf %1193, %1195 : vector<16x16xf32>
    %1197 = arith.addf %1191, %1196 : vector<16x16xf32>
    %c3_610 = arith.constant 3 : index
    %c6_611 = arith.constant 6 : index
    %c5_612 = arith.constant 5 : index
    %1198 = vector.load %arg9[%c3_610, %c6_611, %c5_612] : memref<4x22x22xf32, #tpu.memory_space<vmem>>, vector<1x16x16xf32>
    %1199 = vector.shape_cast %1198 : vector<1x16x16xf32> to vector<16x16xf32>
    %c194 = arith.constant 194 : index
    %1200 = memref.load %arg2[%c194] : memref<196xf32, #tpu.memory_space<smem>>
    %1201 = vector.broadcast %1200 : f32 to vector<16x16xf32>
    %1202 = arith.mulf %1199, %1201 : vector<16x16xf32>
    %1203 = arith.addf %1197, %1202 : vector<16x16xf32>
    %c3_613 = arith.constant 3 : index
    %c6_614 = arith.constant 6 : index
    %c6_615 = arith.constant 6 : index
    %1204 = vector.load %arg9[%c3_613, %c6_614, %c6_615] : memref<4x22x22xf32, #tpu.memory_space<vmem>>, vector<1x16x16xf32>
    %1205 = vector.shape_cast %1204 : vector<1x16x16xf32> to vector<16x16xf32>
    %c195 = arith.constant 195 : index
    %1206 = memref.load %arg2[%c195] : memref<196xf32, #tpu.memory_space<smem>>
    %1207 = vector.broadcast %1206 : f32 to vector<16x16xf32>
    %1208 = arith.mulf %1205, %1207 : vector<16x16xf32>
    %1209 = arith.addf %1203, %1208 : vector<16x16xf32>
    %c3_616 = arith.constant 3 : index
    %1210 = memref.load %arg3[%c3_616] : memref<4xf32, #tpu.memory_space<smem>>
    %1211 = vector.broadcast %1210 : f32 to vector<16x16xf32>
    %1212 = arith.mulf %1209, %1211 : vector<16x16xf32>
    %c3_617 = arith.constant 3 : index
    %1213 = memref.load %arg4[%c3_617] : memref<4xf32, #tpu.memory_space<smem>>
    %1214 = vector.broadcast %1213 : f32 to vector<16x16xf32>
    %1215 = arith.addf %1212, %1214 : vector<16x16xf32>
    %cst_618 = arith.constant 0.000000e+00 : f32
    %1216 = vector.broadcast %cst_618 : f32 to vector<16x16xf32>
    %1217 = arith.maximumf %1215, %1216 : vector<16x16xf32>
    %c3_619 = arith.constant 3 : index
    %c0_620 = arith.constant 0 : index
    %c0_621 = arith.constant 0 : index
    %1218 = vector.load %arg10[%c3_619, %c0_620, %c0_621] : memref<4x16x16xf32, #tpu.memory_space<vmem>>, vector<1x16x16xf32>
    %1219 = vector.shape_cast %1218 : vector<1x16x16xf32> to vector<16x16xf32>
    %1220 = vector.shape_cast %1217 : vector<16x16xf32> to vector<1x16x16xf32>
    tpu.vector_store %arg10[%c3_619, %c0_620, %c0_621], %1220 {strides = array<i32>} : memref<4x16x16xf32, #tpu.memory_space<vmem>>, vector<1x16x16xf32>,
    %c0_622 = arith.constant 0 : index
    %c0_623 = arith.constant 0 : index
    %c0_624 = arith.constant 0 : index
    %1221 = vector.load %arg10[%c0_622, %c0_623, %c0_624] : memref<4x16x16xf32, #tpu.memory_space<vmem>>, vector<1x16x16xf32>
    %1222 = vector.shape_cast %1221 : vector<1x16x16xf32> to vector<16x16xf32>
    %c0_625 = arith.constant 0 : index
    %1223 = memref.load %arg5[%c0_625] : memref<32xf32, #tpu.memory_space<smem>>
    %1224 = vector.broadcast %1223 : f32 to vector<16x16xf32>
    %1225 = arith.mulf %1222, %1224 : vector<16x16xf32>
    %c1_626 = arith.constant 1 : index
    %c0_627 = arith.constant 0 : index
    %c0_628 = arith.constant 0 : index
    %1226 = vector.load %arg10[%c1_626, %c0_627, %c0_628] : memref<4x16x16xf32, #tpu.memory_space<vmem>>, vector<1x16x16xf32>
    %1227 = vector.shape_cast %1226 : vector<1x16x16xf32> to vector<16x16xf32>
    %c1_629 = arith.constant 1 : index
    %1228 = memref.load %arg5[%c1_629] : memref<32xf32, #tpu.memory_space<smem>>
    %1229 = vector.broadcast %1228 : f32 to vector<16x16xf32>
    %1230 = arith.mulf %1227, %1229 : vector<16x16xf32>
    %1231 = arith.addf %1225, %1230 : vector<16x16xf32>
    %c2_630 = arith.constant 2 : index
    %c0_631 = arith.constant 0 : index
    %c0_632 = arith.constant 0 : index
    %1232 = vector.load %arg10[%c2_630, %c0_631, %c0_632] : memref<4x16x16xf32, #tpu.memory_space<vmem>>, vector<1x16x16xf32>
    %1233 = vector.shape_cast %1232 : vector<1x16x16xf32> to vector<16x16xf32>
    %c2_633 = arith.constant 2 : index
    %1234 = memref.load %arg5[%c2_633] : memref<32xf32, #tpu.memory_space<smem>>
    %1235 = vector.broadcast %1234 : f32 to vector<16x16xf32>
    %1236 = arith.mulf %1233, %1235 : vector<16x16xf32>
    %1237 = arith.addf %1231, %1236 : vector<16x16xf32>
    %c3_634 = arith.constant 3 : index
    %c0_635 = arith.constant 0 : index
    %c0_636 = arith.constant 0 : index
    %1238 = vector.load %arg10[%c3_634, %c0_635, %c0_636] : memref<4x16x16xf32, #tpu.memory_space<vmem>>, vector<1x16x16xf32>
    %1239 = vector.shape_cast %1238 : vector<1x16x16xf32> to vector<16x16xf32>
    %c3_637 = arith.constant 3 : index
    %1240 = memref.load %arg5[%c3_637] : memref<32xf32, #tpu.memory_space<smem>>
    %1241 = vector.broadcast %1240 : f32 to vector<16x16xf32>
    %1242 = arith.mulf %1239, %1241 : vector<16x16xf32>
    %1243 = arith.addf %1237, %1242 : vector<16x16xf32>
    %c0_638 = arith.constant 0 : index
    %1244 = memref.load %arg6[%c0_638] : memref<8xf32, #tpu.memory_space<smem>>
    %1245 = vector.broadcast %1244 : f32 to vector<16x16xf32>
    %1246 = arith.mulf %1243, %1245 : vector<16x16xf32>
    %c0_639 = arith.constant 0 : index
    %1247 = memref.load %arg7[%c0_639] : memref<8xf32, #tpu.memory_space<smem>>
    %1248 = vector.broadcast %1247 : f32 to vector<16x16xf32>
    %1249 = arith.addf %1246, %1248 : vector<16x16xf32>
    %cst_640 = arith.constant 0.000000e+00 : f32
    %1250 = vector.broadcast %cst_640 : f32 to vector<16x16xf32>
    %1251 = arith.maximumf %1249, %1250 : vector<16x16xf32>
    %c0_641 = arith.constant 0 : index
    %c0_642 = arith.constant 0 : index
    %c0_643 = arith.constant 0 : index
    %c0_644 = arith.constant 0 : index
    %1252 = vector.load %arg8[%c0_641, %c0_642, %c0_643, %c0_644] : memref<1x8x16x16xf32, #tpu.memory_space<vmem>>, vector<1x1x16x16xf32>
    %1253 = vector.shape_cast %1252 : vector<1x1x16x16xf32> to vector<16x16xf32>
    %1254 = vector.shape_cast %1251 : vector<16x16xf32> to vector<1x1x16x16xf32>
    tpu.vector_store %arg8[%c0_641, %c0_642, %c0_643, %c0_644], %1254 {strides = array<i32>} : memref<1x8x16x16xf32, #tpu.memory_space<vmem>>, vector<1x1x16x16xf32>,
    %c0_645 = arith.constant 0 : index
    %c0_646 = arith.constant 0 : index
    %c0_647 = arith.constant 0 : index
    %1255 = vector.load %arg10[%c0_645, %c0_646, %c0_647] : memref<4x16x16xf32, #tpu.memory_space<vmem>>, vector<1x16x16xf32>
    %1256 = vector.shape_cast %1255 : vector<1x16x16xf32> to vector<16x16xf32>
    %c4_648 = arith.constant 4 : index
    %1257 = memref.load %arg5[%c4_648] : memref<32xf32, #tpu.memory_space<smem>>
    %1258 = vector.broadcast %1257 : f32 to vector<16x16xf32>
    %1259 = arith.mulf %1256, %1258 : vector<16x16xf32>
    %c1_649 = arith.constant 1 : index
    %c0_650 = arith.constant 0 : index
    %c0_651 = arith.constant 0 : index
    %1260 = vector.load %arg10[%c1_649, %c0_650, %c0_651] : memref<4x16x16xf32, #tpu.memory_space<vmem>>, vector<1x16x16xf32>
    %1261 = vector.shape_cast %1260 : vector<1x16x16xf32> to vector<16x16xf32>
    %c5_652 = arith.constant 5 : index
    %1262 = memref.load %arg5[%c5_652] : memref<32xf32, #tpu.memory_space<smem>>
    %1263 = vector.broadcast %1262 : f32 to vector<16x16xf32>
    %1264 = arith.mulf %1261, %1263 : vector<16x16xf32>
    %1265 = arith.addf %1259, %1264 : vector<16x16xf32>
    %c2_653 = arith.constant 2 : index
    %c0_654 = arith.constant 0 : index
    %c0_655 = arith.constant 0 : index
    %1266 = vector.load %arg10[%c2_653, %c0_654, %c0_655] : memref<4x16x16xf32, #tpu.memory_space<vmem>>, vector<1x16x16xf32>
    %1267 = vector.shape_cast %1266 : vector<1x16x16xf32> to vector<16x16xf32>
    %c6_656 = arith.constant 6 : index
    %1268 = memref.load %arg5[%c6_656] : memref<32xf32, #tpu.memory_space<smem>>
    %1269 = vector.broadcast %1268 : f32 to vector<16x16xf32>
    %1270 = arith.mulf %1267, %1269 : vector<16x16xf32>
    %1271 = arith.addf %1265, %1270 : vector<16x16xf32>
    %c3_657 = arith.constant 3 : index
    %c0_658 = arith.constant 0 : index
    %c0_659 = arith.constant 0 : index
    %1272 = vector.load %arg10[%c3_657, %c0_658, %c0_659] : memref<4x16x16xf32, #tpu.memory_space<vmem>>, vector<1x16x16xf32>
    %1273 = vector.shape_cast %1272 : vector<1x16x16xf32> to vector<16x16xf32>
    %c7_660 = arith.constant 7 : index
    %1274 = memref.load %arg5[%c7_660] : memref<32xf32, #tpu.memory_space<smem>>
    %1275 = vector.broadcast %1274 : f32 to vector<16x16xf32>
    %1276 = arith.mulf %1273, %1275 : vector<16x16xf32>
    %1277 = arith.addf %1271, %1276 : vector<16x16xf32>
    %c1_661 = arith.constant 1 : index
    %1278 = memref.load %arg6[%c1_661] : memref<8xf32, #tpu.memory_space<smem>>
    %1279 = vector.broadcast %1278 : f32 to vector<16x16xf32>
    %1280 = arith.mulf %1277, %1279 : vector<16x16xf32>
    %c1_662 = arith.constant 1 : index
    %1281 = memref.load %arg7[%c1_662] : memref<8xf32, #tpu.memory_space<smem>>
    %1282 = vector.broadcast %1281 : f32 to vector<16x16xf32>
    %1283 = arith.addf %1280, %1282 : vector<16x16xf32>
    %cst_663 = arith.constant 0.000000e+00 : f32
    %1284 = vector.broadcast %cst_663 : f32 to vector<16x16xf32>
    %1285 = arith.maximumf %1283, %1284 : vector<16x16xf32>
    %c0_664 = arith.constant 0 : index
    %c1_665 = arith.constant 1 : index
    %c0_666 = arith.constant 0 : index
    %c0_667 = arith.constant 0 : index
    %1286 = vector.load %arg8[%c0_664, %c1_665, %c0_666, %c0_667] : memref<1x8x16x16xf32, #tpu.memory_space<vmem>>, vector<1x1x16x16xf32>
    %1287 = vector.shape_cast %1286 : vector<1x1x16x16xf32> to vector<16x16xf32>
    %1288 = vector.shape_cast %1285 : vector<16x16xf32> to vector<1x1x16x16xf32>
    tpu.vector_store %arg8[%c0_664, %c1_665, %c0_666, %c0_667], %1288 {strides = array<i32>} : memref<1x8x16x16xf32, #tpu.memory_space<vmem>>, vector<1x1x16x16xf32>,
    %c0_668 = arith.constant 0 : index
    %c0_669 = arith.constant 0 : index
    %c0_670 = arith.constant 0 : index
    %1289 = vector.load %arg10[%c0_668, %c0_669, %c0_670] : memref<4x16x16xf32, #tpu.memory_space<vmem>>, vector<1x16x16xf32>
    %1290 = vector.shape_cast %1289 : vector<1x16x16xf32> to vector<16x16xf32>
    %c8_671 = arith.constant 8 : index
    %1291 = memref.load %arg5[%c8_671] : memref<32xf32, #tpu.memory_space<smem>>
    %1292 = vector.broadcast %1291 : f32 to vector<16x16xf32>
    %1293 = arith.mulf %1290, %1292 : vector<16x16xf32>
    %c1_672 = arith.constant 1 : index
    %c0_673 = arith.constant 0 : index
    %c0_674 = arith.constant 0 : index
    %1294 = vector.load %arg10[%c1_672, %c0_673, %c0_674] : memref<4x16x16xf32, #tpu.memory_space<vmem>>, vector<1x16x16xf32>
    %1295 = vector.shape_cast %1294 : vector<1x16x16xf32> to vector<16x16xf32>
    %c9_675 = arith.constant 9 : index
    %1296 = memref.load %arg5[%c9_675] : memref<32xf32, #tpu.memory_space<smem>>
    %1297 = vector.broadcast %1296 : f32 to vector<16x16xf32>
    %1298 = arith.mulf %1295, %1297 : vector<16x16xf32>
    %1299 = arith.addf %1293, %1298 : vector<16x16xf32>
    %c2_676 = arith.constant 2 : index
    %c0_677 = arith.constant 0 : index
    %c0_678 = arith.constant 0 : index
    %1300 = vector.load %arg10[%c2_676, %c0_677, %c0_678] : memref<4x16x16xf32, #tpu.memory_space<vmem>>, vector<1x16x16xf32>
    %1301 = vector.shape_cast %1300 : vector<1x16x16xf32> to vector<16x16xf32>
    %c10_679 = arith.constant 10 : index
    %1302 = memref.load %arg5[%c10_679] : memref<32xf32, #tpu.memory_space<smem>>
    %1303 = vector.broadcast %1302 : f32 to vector<16x16xf32>
    %1304 = arith.mulf %1301, %1303 : vector<16x16xf32>
    %1305 = arith.addf %1299, %1304 : vector<16x16xf32>
    %c3_680 = arith.constant 3 : index
    %c0_681 = arith.constant 0 : index
    %c0_682 = arith.constant 0 : index
    %1306 = vector.load %arg10[%c3_680, %c0_681, %c0_682] : memref<4x16x16xf32, #tpu.memory_space<vmem>>, vector<1x16x16xf32>
    %1307 = vector.shape_cast %1306 : vector<1x16x16xf32> to vector<16x16xf32>
    %c11_683 = arith.constant 11 : index
    %1308 = memref.load %arg5[%c11_683] : memref<32xf32, #tpu.memory_space<smem>>
    %1309 = vector.broadcast %1308 : f32 to vector<16x16xf32>
    %1310 = arith.mulf %1307, %1309 : vector<16x16xf32>
    %1311 = arith.addf %1305, %1310 : vector<16x16xf32>
    %c2_684 = arith.constant 2 : index
    %1312 = memref.load %arg6[%c2_684] : memref<8xf32, #tpu.memory_space<smem>>
    %1313 = vector.broadcast %1312 : f32 to vector<16x16xf32>
    %1314 = arith.mulf %1311, %1313 : vector<16x16xf32>
    %c2_685 = arith.constant 2 : index
    %1315 = memref.load %arg7[%c2_685] : memref<8xf32, #tpu.memory_space<smem>>
    %1316 = vector.broadcast %1315 : f32 to vector<16x16xf32>
    %1317 = arith.addf %1314, %1316 : vector<16x16xf32>
    %cst_686 = arith.constant 0.000000e+00 : f32
    %1318 = vector.broadcast %cst_686 : f32 to vector<16x16xf32>
    %1319 = arith.maximumf %1317, %1318 : vector<16x16xf32>
    %c0_687 = arith.constant 0 : index
    %c2_688 = arith.constant 2 : index
    %c0_689 = arith.constant 0 : index
    %c0_690 = arith.constant 0 : index
    %1320 = vector.load %arg8[%c0_687, %c2_688, %c0_689, %c0_690] : memref<1x8x16x16xf32, #tpu.memory_space<vmem>>, vector<1x1x16x16xf32>
    %1321 = vector.shape_cast %1320 : vector<1x1x16x16xf32> to vector<16x16xf32>
    %1322 = vector.shape_cast %1319 : vector<16x16xf32> to vector<1x1x16x16xf32>
    tpu.vector_store %arg8[%c0_687, %c2_688, %c0_689, %c0_690], %1322 {strides = array<i32>} : memref<1x8x16x16xf32, #tpu.memory_space<vmem>>, vector<1x1x16x16xf32>,
    %c0_691 = arith.constant 0 : index
    %c0_692 = arith.constant 0 : index
    %c0_693 = arith.constant 0 : index
    %1323 = vector.load %arg10[%c0_691, %c0_692, %c0_693] : memref<4x16x16xf32, #tpu.memory_space<vmem>>, vector<1x16x16xf32>
    %1324 = vector.shape_cast %1323 : vector<1x16x16xf32> to vector<16x16xf32>
    %c12_694 = arith.constant 12 : index
    %1325 = memref.load %arg5[%c12_694] : memref<32xf32, #tpu.memory_space<smem>>
    %1326 = vector.broadcast %1325 : f32 to vector<16x16xf32>
    %1327 = arith.mulf %1324, %1326 : vector<16x16xf32>
    %c1_695 = arith.constant 1 : index
    %c0_696 = arith.constant 0 : index
    %c0_697 = arith.constant 0 : index
    %1328 = vector.load %arg10[%c1_695, %c0_696, %c0_697] : memref<4x16x16xf32, #tpu.memory_space<vmem>>, vector<1x16x16xf32>
    %1329 = vector.shape_cast %1328 : vector<1x16x16xf32> to vector<16x16xf32>
    %c13_698 = arith.constant 13 : index
    %1330 = memref.load %arg5[%c13_698] : memref<32xf32, #tpu.memory_space<smem>>
    %1331 = vector.broadcast %1330 : f32 to vector<16x16xf32>
    %1332 = arith.mulf %1329, %1331 : vector<16x16xf32>
    %1333 = arith.addf %1327, %1332 : vector<16x16xf32>
    %c2_699 = arith.constant 2 : index
    %c0_700 = arith.constant 0 : index
    %c0_701 = arith.constant 0 : index
    %1334 = vector.load %arg10[%c2_699, %c0_700, %c0_701] : memref<4x16x16xf32, #tpu.memory_space<vmem>>, vector<1x16x16xf32>
    %1335 = vector.shape_cast %1334 : vector<1x16x16xf32> to vector<16x16xf32>
    %c14_702 = arith.constant 14 : index
    %1336 = memref.load %arg5[%c14_702] : memref<32xf32, #tpu.memory_space<smem>>
    %1337 = vector.broadcast %1336 : f32 to vector<16x16xf32>
    %1338 = arith.mulf %1335, %1337 : vector<16x16xf32>
    %1339 = arith.addf %1333, %1338 : vector<16x16xf32>
    %c3_703 = arith.constant 3 : index
    %c0_704 = arith.constant 0 : index
    %c0_705 = arith.constant 0 : index
    %1340 = vector.load %arg10[%c3_703, %c0_704, %c0_705] : memref<4x16x16xf32, #tpu.memory_space<vmem>>, vector<1x16x16xf32>
    %1341 = vector.shape_cast %1340 : vector<1x16x16xf32> to vector<16x16xf32>
    %c15_706 = arith.constant 15 : index
    %1342 = memref.load %arg5[%c15_706] : memref<32xf32, #tpu.memory_space<smem>>
    %1343 = vector.broadcast %1342 : f32 to vector<16x16xf32>
    %1344 = arith.mulf %1341, %1343 : vector<16x16xf32>
    %1345 = arith.addf %1339, %1344 : vector<16x16xf32>
    %c3_707 = arith.constant 3 : index
    %1346 = memref.load %arg6[%c3_707] : memref<8xf32, #tpu.memory_space<smem>>
    %1347 = vector.broadcast %1346 : f32 to vector<16x16xf32>
    %1348 = arith.mulf %1345, %1347 : vector<16x16xf32>
    %c3_708 = arith.constant 3 : index
    %1349 = memref.load %arg7[%c3_708] : memref<8xf32, #tpu.memory_space<smem>>
    %1350 = vector.broadcast %1349 : f32 to vector<16x16xf32>
    %1351 = arith.addf %1348, %1350 : vector<16x16xf32>
    %cst_709 = arith.constant 0.000000e+00 : f32
    %1352 = vector.broadcast %cst_709 : f32 to vector<16x16xf32>
    %1353 = arith.maximumf %1351, %1352 : vector<16x16xf32>
    %c0_710 = arith.constant 0 : index
    %c3_711 = arith.constant 3 : index
    %c0_712 = arith.constant 0 : index
    %c0_713 = arith.constant 0 : index
    %1354 = vector.load %arg8[%c0_710, %c3_711, %c0_712, %c0_713] : memref<1x8x16x16xf32, #tpu.memory_space<vmem>>, vector<1x1x16x16xf32>
    %1355 = vector.shape_cast %1354 : vector<1x1x16x16xf32> to vector<16x16xf32>
    %1356 = vector.shape_cast %1353 : vector<16x16xf32> to vector<1x1x16x16xf32>
    tpu.vector_store %arg8[%c0_710, %c3_711, %c0_712, %c0_713], %1356 {strides = array<i32>} : memref<1x8x16x16xf32, #tpu.memory_space<vmem>>, vector<1x1x16x16xf32>,
    %c0_714 = arith.constant 0 : index
    %c0_715 = arith.constant 0 : index
    %c0_716 = arith.constant 0 : index
    %1357 = vector.load %arg10[%c0_714, %c0_715, %c0_716] : memref<4x16x16xf32, #tpu.memory_space<vmem>>, vector<1x16x16xf32>
    %1358 = vector.shape_cast %1357 : vector<1x16x16xf32> to vector<16x16xf32>
    %c16_717 = arith.constant 16 : index
    %1359 = memref.load %arg5[%c16_717] : memref<32xf32, #tpu.memory_space<smem>>
    %1360 = vector.broadcast %1359 : f32 to vector<16x16xf32>
    %1361 = arith.mulf %1358, %1360 : vector<16x16xf32>
    %c1_718 = arith.constant 1 : index
    %c0_719 = arith.constant 0 : index
    %c0_720 = arith.constant 0 : index
    %1362 = vector.load %arg10[%c1_718, %c0_719, %c0_720] : memref<4x16x16xf32, #tpu.memory_space<vmem>>, vector<1x16x16xf32>
    %1363 = vector.shape_cast %1362 : vector<1x16x16xf32> to vector<16x16xf32>
    %c17_721 = arith.constant 17 : index
    %1364 = memref.load %arg5[%c17_721] : memref<32xf32, #tpu.memory_space<smem>>
    %1365 = vector.broadcast %1364 : f32 to vector<16x16xf32>
    %1366 = arith.mulf %1363, %1365 : vector<16x16xf32>
    %1367 = arith.addf %1361, %1366 : vector<16x16xf32>
    %c2_722 = arith.constant 2 : index
    %c0_723 = arith.constant 0 : index
    %c0_724 = arith.constant 0 : index
    %1368 = vector.load %arg10[%c2_722, %c0_723, %c0_724] : memref<4x16x16xf32, #tpu.memory_space<vmem>>, vector<1x16x16xf32>
    %1369 = vector.shape_cast %1368 : vector<1x16x16xf32> to vector<16x16xf32>
    %c18_725 = arith.constant 18 : index
    %1370 = memref.load %arg5[%c18_725] : memref<32xf32, #tpu.memory_space<smem>>
    %1371 = vector.broadcast %1370 : f32 to vector<16x16xf32>
    %1372 = arith.mulf %1369, %1371 : vector<16x16xf32>
    %1373 = arith.addf %1367, %1372 : vector<16x16xf32>
    %c3_726 = arith.constant 3 : index
    %c0_727 = arith.constant 0 : index
    %c0_728 = arith.constant 0 : index
    %1374 = vector.load %arg10[%c3_726, %c0_727, %c0_728] : memref<4x16x16xf32, #tpu.memory_space<vmem>>, vector<1x16x16xf32>
    %1375 = vector.shape_cast %1374 : vector<1x16x16xf32> to vector<16x16xf32>
    %c19_729 = arith.constant 19 : index
    %1376 = memref.load %arg5[%c19_729] : memref<32xf32, #tpu.memory_space<smem>>
    %1377 = vector.broadcast %1376 : f32 to vector<16x16xf32>
    %1378 = arith.mulf %1375, %1377 : vector<16x16xf32>
    %1379 = arith.addf %1373, %1378 : vector<16x16xf32>
    %c4_730 = arith.constant 4 : index
    %1380 = memref.load %arg6[%c4_730] : memref<8xf32, #tpu.memory_space<smem>>
    %1381 = vector.broadcast %1380 : f32 to vector<16x16xf32>
    %1382 = arith.mulf %1379, %1381 : vector<16x16xf32>
    %c4_731 = arith.constant 4 : index
    %1383 = memref.load %arg7[%c4_731] : memref<8xf32, #tpu.memory_space<smem>>
    %1384 = vector.broadcast %1383 : f32 to vector<16x16xf32>
    %1385 = arith.addf %1382, %1384 : vector<16x16xf32>
    %cst_732 = arith.constant 0.000000e+00 : f32
    %1386 = vector.broadcast %cst_732 : f32 to vector<16x16xf32>
    %1387 = arith.maximumf %1385, %1386 : vector<16x16xf32>
    %c0_733 = arith.constant 0 : index
    %c4_734 = arith.constant 4 : index
    %c0_735 = arith.constant 0 : index
    %c0_736 = arith.constant 0 : index
    %1388 = vector.load %arg8[%c0_733, %c4_734, %c0_735, %c0_736] : memref<1x8x16x16xf32, #tpu.memory_space<vmem>>, vector<1x1x16x16xf32>
    %1389 = vector.shape_cast %1388 : vector<1x1x16x16xf32> to vector<16x16xf32>
    %1390 = vector.shape_cast %1387 : vector<16x16xf32> to vector<1x1x16x16xf32>
    tpu.vector_store %arg8[%c0_733, %c4_734, %c0_735, %c0_736], %1390 {strides = array<i32>} : memref<1x8x16x16xf32, #tpu.memory_space<vmem>>, vector<1x1x16x16xf32>,
    %c0_737 = arith.constant 0 : index
    %c0_738 = arith.constant 0 : index
    %c0_739 = arith.constant 0 : index
    %1391 = vector.load %arg10[%c0_737, %c0_738, %c0_739] : memref<4x16x16xf32, #tpu.memory_space<vmem>>, vector<1x16x16xf32>
    %1392 = vector.shape_cast %1391 : vector<1x16x16xf32> to vector<16x16xf32>
    %c20_740 = arith.constant 20 : index
    %1393 = memref.load %arg5[%c20_740] : memref<32xf32, #tpu.memory_space<smem>>
    %1394 = vector.broadcast %1393 : f32 to vector<16x16xf32>
    %1395 = arith.mulf %1392, %1394 : vector<16x16xf32>
    %c1_741 = arith.constant 1 : index
    %c0_742 = arith.constant 0 : index
    %c0_743 = arith.constant 0 : index
    %1396 = vector.load %arg10[%c1_741, %c0_742, %c0_743] : memref<4x16x16xf32, #tpu.memory_space<vmem>>, vector<1x16x16xf32>
    %1397 = vector.shape_cast %1396 : vector<1x16x16xf32> to vector<16x16xf32>
    %c21_744 = arith.constant 21 : index
    %1398 = memref.load %arg5[%c21_744] : memref<32xf32, #tpu.memory_space<smem>>
    %1399 = vector.broadcast %1398 : f32 to vector<16x16xf32>
    %1400 = arith.mulf %1397, %1399 : vector<16x16xf32>
    %1401 = arith.addf %1395, %1400 : vector<16x16xf32>
    %c2_745 = arith.constant 2 : index
    %c0_746 = arith.constant 0 : index
    %c0_747 = arith.constant 0 : index
    %1402 = vector.load %arg10[%c2_745, %c0_746, %c0_747] : memref<4x16x16xf32, #tpu.memory_space<vmem>>, vector<1x16x16xf32>
    %1403 = vector.shape_cast %1402 : vector<1x16x16xf32> to vector<16x16xf32>
    %c22_748 = arith.constant 22 : index
    %1404 = memref.load %arg5[%c22_748] : memref<32xf32, #tpu.memory_space<smem>>
    %1405 = vector.broadcast %1404 : f32 to vector<16x16xf32>
    %1406 = arith.mulf %1403, %1405 : vector<16x16xf32>
    %1407 = arith.addf %1401, %1406 : vector<16x16xf32>
    %c3_749 = arith.constant 3 : index
    %c0_750 = arith.constant 0 : index
    %c0_751 = arith.constant 0 : index
    %1408 = vector.load %arg10[%c3_749, %c0_750, %c0_751] : memref<4x16x16xf32, #tpu.memory_space<vmem>>, vector<1x16x16xf32>
    %1409 = vector.shape_cast %1408 : vector<1x16x16xf32> to vector<16x16xf32>
    %c23_752 = arith.constant 23 : index
    %1410 = memref.load %arg5[%c23_752] : memref<32xf32, #tpu.memory_space<smem>>
    %1411 = vector.broadcast %1410 : f32 to vector<16x16xf32>
    %1412 = arith.mulf %1409, %1411 : vector<16x16xf32>
    %1413 = arith.addf %1407, %1412 : vector<16x16xf32>
    %c5_753 = arith.constant 5 : index
    %1414 = memref.load %arg6[%c5_753] : memref<8xf32, #tpu.memory_space<smem>>
    %1415 = vector.broadcast %1414 : f32 to vector<16x16xf32>
    %1416 = arith.mulf %1413, %1415 : vector<16x16xf32>
    %c5_754 = arith.constant 5 : index
    %1417 = memref.load %arg7[%c5_754] : memref<8xf32, #tpu.memory_space<smem>>
    %1418 = vector.broadcast %1417 : f32 to vector<16x16xf32>
    %1419 = arith.addf %1416, %1418 : vector<16x16xf32>
    %cst_755 = arith.constant 0.000000e+00 : f32
    %1420 = vector.broadcast %cst_755 : f32 to vector<16x16xf32>
    %1421 = arith.maximumf %1419, %1420 : vector<16x16xf32>
    %c0_756 = arith.constant 0 : index
    %c5_757 = arith.constant 5 : index
    %c0_758 = arith.constant 0 : index
    %c0_759 = arith.constant 0 : index
    %1422 = vector.load %arg8[%c0_756, %c5_757, %c0_758, %c0_759] : memref<1x8x16x16xf32, #tpu.memory_space<vmem>>, vector<1x1x16x16xf32>
    %1423 = vector.shape_cast %1422 : vector<1x1x16x16xf32> to vector<16x16xf32>
    %1424 = vector.shape_cast %1421 : vector<16x16xf32> to vector<1x1x16x16xf32>
    tpu.vector_store %arg8[%c0_756, %c5_757, %c0_758, %c0_759], %1424 {strides = array<i32>} : memref<1x8x16x16xf32, #tpu.memory_space<vmem>>, vector<1x1x16x16xf32>,
    %c0_760 = arith.constant 0 : index
    %c0_761 = arith.constant 0 : index
    %c0_762 = arith.constant 0 : index
    %1425 = vector.load %arg10[%c0_760, %c0_761, %c0_762] : memref<4x16x16xf32, #tpu.memory_space<vmem>>, vector<1x16x16xf32>
    %1426 = vector.shape_cast %1425 : vector<1x16x16xf32> to vector<16x16xf32>
    %c24_763 = arith.constant 24 : index
    %1427 = memref.load %arg5[%c24_763] : memref<32xf32, #tpu.memory_space<smem>>
    %1428 = vector.broadcast %1427 : f32 to vector<16x16xf32>
    %1429 = arith.mulf %1426, %1428 : vector<16x16xf32>
    %c1_764 = arith.constant 1 : index
    %c0_765 = arith.constant 0 : index
    %c0_766 = arith.constant 0 : index
    %1430 = vector.load %arg10[%c1_764, %c0_765, %c0_766] : memref<4x16x16xf32, #tpu.memory_space<vmem>>, vector<1x16x16xf32>
    %1431 = vector.shape_cast %1430 : vector<1x16x16xf32> to vector<16x16xf32>
    %c25_767 = arith.constant 25 : index
    %1432 = memref.load %arg5[%c25_767] : memref<32xf32, #tpu.memory_space<smem>>
    %1433 = vector.broadcast %1432 : f32 to vector<16x16xf32>
    %1434 = arith.mulf %1431, %1433 : vector<16x16xf32>
    %1435 = arith.addf %1429, %1434 : vector<16x16xf32>
    %c2_768 = arith.constant 2 : index
    %c0_769 = arith.constant 0 : index
    %c0_770 = arith.constant 0 : index
    %1436 = vector.load %arg10[%c2_768, %c0_769, %c0_770] : memref<4x16x16xf32, #tpu.memory_space<vmem>>, vector<1x16x16xf32>
    %1437 = vector.shape_cast %1436 : vector<1x16x16xf32> to vector<16x16xf32>
    %c26_771 = arith.constant 26 : index
    %1438 = memref.load %arg5[%c26_771] : memref<32xf32, #tpu.memory_space<smem>>
    %1439 = vector.broadcast %1438 : f32 to vector<16x16xf32>
    %1440 = arith.mulf %1437, %1439 : vector<16x16xf32>
    %1441 = arith.addf %1435, %1440 : vector<16x16xf32>
    %c3_772 = arith.constant 3 : index
    %c0_773 = arith.constant 0 : index
    %c0_774 = arith.constant 0 : index
    %1442 = vector.load %arg10[%c3_772, %c0_773, %c0_774] : memref<4x16x16xf32, #tpu.memory_space<vmem>>, vector<1x16x16xf32>
    %1443 = vector.shape_cast %1442 : vector<1x16x16xf32> to vector<16x16xf32>
    %c27_775 = arith.constant 27 : index
    %1444 = memref.load %arg5[%c27_775] : memref<32xf32, #tpu.memory_space<smem>>
    %1445 = vector.broadcast %1444 : f32 to vector<16x16xf32>
    %1446 = arith.mulf %1443, %1445 : vector<16x16xf32>
    %1447 = arith.addf %1441, %1446 : vector<16x16xf32>
    %c6_776 = arith.constant 6 : index
    %1448 = memref.load %arg6[%c6_776] : memref<8xf32, #tpu.memory_space<smem>>
    %1449 = vector.broadcast %1448 : f32 to vector<16x16xf32>
    %1450 = arith.mulf %1447, %1449 : vector<16x16xf32>
    %c6_777 = arith.constant 6 : index
    %1451 = memref.load %arg7[%c6_777] : memref<8xf32, #tpu.memory_space<smem>>
    %1452 = vector.broadcast %1451 : f32 to vector<16x16xf32>
    %1453 = arith.addf %1450, %1452 : vector<16x16xf32>
    %cst_778 = arith.constant 0.000000e+00 : f32
    %1454 = vector.broadcast %cst_778 : f32 to vector<16x16xf32>
    %1455 = arith.maximumf %1453, %1454 : vector<16x16xf32>
    %c0_779 = arith.constant 0 : index
    %c6_780 = arith.constant 6 : index
    %c0_781 = arith.constant 0 : index
    %c0_782 = arith.constant 0 : index
    %1456 = vector.load %arg8[%c0_779, %c6_780, %c0_781, %c0_782] : memref<1x8x16x16xf32, #tpu.memory_space<vmem>>, vector<1x1x16x16xf32>
    %1457 = vector.shape_cast %1456 : vector<1x1x16x16xf32> to vector<16x16xf32>
    %1458 = vector.shape_cast %1455 : vector<16x16xf32> to vector<1x1x16x16xf32>
    tpu.vector_store %arg8[%c0_779, %c6_780, %c0_781, %c0_782], %1458 {strides = array<i32>} : memref<1x8x16x16xf32, #tpu.memory_space<vmem>>, vector<1x1x16x16xf32>,
    %c0_783 = arith.constant 0 : index
    %c0_784 = arith.constant 0 : index
    %c0_785 = arith.constant 0 : index
    %1459 = vector.load %arg10[%c0_783, %c0_784, %c0_785] : memref<4x16x16xf32, #tpu.memory_space<vmem>>, vector<1x16x16xf32>
    %1460 = vector.shape_cast %1459 : vector<1x16x16xf32> to vector<16x16xf32>
    %c28_786 = arith.constant 28 : index
    %1461 = memref.load %arg5[%c28_786] : memref<32xf32, #tpu.memory_space<smem>>
    %1462 = vector.broadcast %1461 : f32 to vector<16x16xf32>
    %1463 = arith.mulf %1460, %1462 : vector<16x16xf32>
    %c1_787 = arith.constant 1 : index
    %c0_788 = arith.constant 0 : index
    %c0_789 = arith.constant 0 : index
    %1464 = vector.load %arg10[%c1_787, %c0_788, %c0_789] : memref<4x16x16xf32, #tpu.memory_space<vmem>>, vector<1x16x16xf32>
    %1465 = vector.shape_cast %1464 : vector<1x16x16xf32> to vector<16x16xf32>
    %c29_790 = arith.constant 29 : index
    %1466 = memref.load %arg5[%c29_790] : memref<32xf32, #tpu.memory_space<smem>>
    %1467 = vector.broadcast %1466 : f32 to vector<16x16xf32>
    %1468 = arith.mulf %1465, %1467 : vector<16x16xf32>
    %1469 = arith.addf %1463, %1468 : vector<16x16xf32>
    %c2_791 = arith.constant 2 : index
    %c0_792 = arith.constant 0 : index
    %c0_793 = arith.constant 0 : index
    %1470 = vector.load %arg10[%c2_791, %c0_792, %c0_793] : memref<4x16x16xf32, #tpu.memory_space<vmem>>, vector<1x16x16xf32>
    %1471 = vector.shape_cast %1470 : vector<1x16x16xf32> to vector<16x16xf32>
    %c30_794 = arith.constant 30 : index
    %1472 = memref.load %arg5[%c30_794] : memref<32xf32, #tpu.memory_space<smem>>
    %1473 = vector.broadcast %1472 : f32 to vector<16x16xf32>
    %1474 = arith.mulf %1471, %1473 : vector<16x16xf32>
    %1475 = arith.addf %1469, %1474 : vector<16x16xf32>
    %c3_795 = arith.constant 3 : index
    %c0_796 = arith.constant 0 : index
    %c0_797 = arith.constant 0 : index
    %1476 = vector.load %arg10[%c3_795, %c0_796, %c0_797] : memref<4x16x16xf32, #tpu.memory_space<vmem>>, vector<1x16x16xf32>
    %1477 = vector.shape_cast %1476 : vector<1x16x16xf32> to vector<16x16xf32>
    %c31_798 = arith.constant 31 : index
    %1478 = memref.load %arg5[%c31_798] : memref<32xf32, #tpu.memory_space<smem>>
    %1479 = vector.broadcast %1478 : f32 to vector<16x16xf32>
    %1480 = arith.mulf %1477, %1479 : vector<16x16xf32>
    %1481 = arith.addf %1475, %1480 : vector<16x16xf32>
    %c7_799 = arith.constant 7 : index
    %1482 = memref.load %arg6[%c7_799] : memref<8xf32, #tpu.memory_space<smem>>
    %1483 = vector.broadcast %1482 : f32 to vector<16x16xf32>
    %1484 = arith.mulf %1481, %1483 : vector<16x16xf32>
    %c7_800 = arith.constant 7 : index
    %1485 = memref.load %arg7[%c7_800] : memref<8xf32, #tpu.memory_space<smem>>
    %1486 = vector.broadcast %1485 : f32 to vector<16x16xf32>
    %1487 = arith.addf %1484, %1486 : vector<16x16xf32>
    %cst_801 = arith.constant 0.000000e+00 : f32
    %1488 = vector.broadcast %cst_801 : f32 to vector<16x16xf32>
    %1489 = arith.maximumf %1487, %1488 : vector<16x16xf32>
    %c0_802 = arith.constant 0 : index
    %c7_803 = arith.constant 7 : index
    %c0_804 = arith.constant 0 : index
    %c0_805 = arith.constant 0 : index
    %1490 = vector.load %arg8[%c0_802, %c7_803, %c0_804, %c0_805] : memref<1x8x16x16xf32, #tpu.memory_space<vmem>>, vector<1x1x16x16xf32>
    %1491 = vector.shape_cast %1490 : vector<1x1x16x16xf32> to vector<16x16xf32>
    %1492 = vector.shape_cast %1489 : vector<16x16xf32> to vector<1x1x16x16xf32>
    tpu.vector_store %arg8[%c0_802, %c7_803, %c0_804, %c0_805], %1492 {strides = array<i32>} : memref<1x8x16x16xf32, #tpu.memory_space<vmem>>, vector<1x1x16x16xf32>,
    return
  }
  func.func @transform_0(%arg0: i32) -> (i32, i32, i32, i32) {
    %c0_i32 = arith.constant 0 : i32
    %c0_i32_0 = arith.constant 0 : i32
    %c0_i32_1 = arith.constant 0 : i32
    %c0_i32_2 = arith.constant 0 : i32
    return %arg0, %c0_i32, %c0_i32_0, %c0_i32_1 : i32, i32, i32, i32
  }
  func.func @transform_1(%arg0: i32) -> i32 {
    %c0_i32 = arith.constant 0 : i32
    %c0_i32_0 = arith.constant 0 : i32
    return %c0_i32 : i32
  }
  func.func @transform_2(%arg0: i32) -> i32 {
    %c0_i32 = arith.constant 0 : i32
    %c0_i32_0 = arith.constant 0 : i32
    return %c0_i32 : i32
  }
  func.func @transform_3(%arg0: i32) -> i32 {
    %c0_i32 = arith.constant 0 : i32
    %c0_i32_0 = arith.constant 0 : i32
    return %c0_i32 : i32
  }
  func.func @transform_4(%arg0: i32) -> i32 {
    %c0_i32 = arith.constant 0 : i32
    %c0_i32_0 = arith.constant 0 : i32
    return %c0_i32 : i32
  }
  func.func @transform_5(%arg0: i32) -> i32 {
    %c0_i32 = arith.constant 0 : i32
    %c0_i32_0 = arith.constant 0 : i32
    return %c0_i32 : i32
  }
  func.func @transform_6(%arg0: i32) -> i32 {
    %c0_i32 = arith.constant 0 : i32
    %c0_i32_0 = arith.constant 0 : i32
    return %c0_i32 : i32
  }
  func.func @transform_7(%arg0: i32) -> (i32, i32, i32, i32) {
    %c0_i32 = arith.constant 0 : i32
    %c0_i32_0 = arith.constant 0 : i32
    %c0_i32_1 = arith.constant 0 : i32
    %c0_i32_2 = arith.constant 0 : i32
    return %arg0, %c0_i32, %c0_i32_0, %c0_i32_1 : i32, i32, i32, i32
  }
}

</mosaic_0001>

<llo_original>
// kernel: tpu_custom_call.1
$region0: #{tpu_custom_call.1}
  #allocation0 [shape = 'u32[]', space=smem, size = 0x4, offset = 0x4, fixed_abs, tag = 'smem constant byte address 0x4 - core index']
  #allocation1 [shape = 'u32[72,128]{1,0:T(1,128)}', space=vmem, size = 0x9000, scoped, tag = 'internal scratch']
  #allocation2 [shape = 'f32[4,22,22]{2,1,0:T(8,128)}', space=vmem, size = 0xc000, scoped, tag = 'scratch operand']
  #allocation3 [shape = 'f32[4,16,16]{2,1,0:T(8,128)}', space=vmem, size = 0x8000, scoped, tag = 'scratch operand']
  %s0 = inlined_call_operand.hbm [shape: f32[2,4,16,16], index: 0, kind: input, shape index: {}]
  %s1 = inlined_call_operand.hbm [shape: f32[196], index: 1, kind: input, shape index: {}]
  %s2 = inlined_call_operand.vmem [shape: f32[4], index: 2, kind: input, shape index: {}]
  %s3 = inlined_call_operand.vmem [shape: f32[4], index: 3, kind: input, shape index: {}]
  %s4 = inlined_call_operand.vmem [shape: f32[32], index: 4, kind: input, shape index: {}]
  %s5 = inlined_call_operand.vmem [shape: f32[8], index: 5, kind: input, shape index: {}]
  %s6 = inlined_call_operand.vmem [shape: f32[8], index: 6, kind: input, shape index: {}]
  %s7 = inlined_call_operand.hbm [shape: f32[2,8,16,16], index: 7, kind: output, shape index: {}]
  %s8 = sld [smem:[#allocation0]]
  $region89: #{tpu_custom_call.1} parent=0
    _
  %s10 = ssub.s32 1, %s8
  %s11 = scalar_select 0, %s10, %s8
  $region1: #{tpu_custom_call.1} parent=0
    #allocation4 [shape = 'u8[65536]{0}', space=vmem, size = 0x10000, scoped, tag = 'input window, operand 0']
    #allocation5 [shape = 's32[2]{0}', space=sflag, size = 0x8, scoped, tag = 'scoped memory for tpu_custom_call.1']
    #allocation6 [shape = 's32[2]{0}', space=sflag, size = 0x8, scoped, tag = 'scoped memory for tpu_custom_call.1']
    #allocation7 [shape = 's32[2]{0}', space=sflag, size = 0x8, scoped, tag = 'scoped memory for tpu_custom_call.1']
    #allocation8 [shape = 's32[2]{0}', space=sflag, size = 0x8, scoped, tag = 'scoped memory for tpu_custom_call.1']
    #allocation9 [shape = 'u8[1024]{0}', space=smem, size = 0x400, scoped, tag = 'input window, operand 1, single buffered']
    #allocation10 [shape = 'u8[512]{0}', space=smem, size = 0x200, scoped, tag = 'input window, operand 2, single buffered']
    #allocation11 [shape = 'u8[512]{0}', space=smem, size = 0x200, scoped, tag = 'input window, operand 3, single buffered']
    #allocation12 [shape = 's32[1]{0}', space=sflag, size = 0x4, scoped, tag = 'scoped memory for tpu_custom_call.1']
    #allocation13 [shape = 'u8[512]{0}', space=smem, size = 0x200, scoped, tag = 'input window, operand 4, single buffered']
    #allocation14 [shape = 'u8[512]{0}', space=smem, size = 0x200, scoped, tag = 'input window, operand 5, single buffered']
    #allocation15 [shape = 's32[1]{0}', space=sflag, size = 0x4, scoped, tag = 'scoped memory for tpu_custom_call.1']
    #allocation16 [shape = 'u8[512]{0}', space=smem, size = 0x200, scoped, tag = 'input window, operand 6, single buffered']
    #allocation17 [shape = 'u8[131072]{0}', space=vmem, size = 0x20000, scoped, tag = 'output window, operand 0']
    %12 = vsyncpa [#allocation5], 0
    %s13 = scalar_lea.sflag [#allocation5], 1
    %14 = vsyncpa %s13, 0
    %15 = vsyncpa [#allocation7], 0
    %16 = vsyncpa [#allocation8], 0
    %17 = vsyncpa [#allocation12], 0
    %18 = vsyncpa [#allocation15], 0
    %19 = vsyncpa [#allocation6], 0
    %s20 = scalar_lea.sflag [#allocation6], 1
    %21 = vsyncpa %s20, 0
    loop: start=0, step=1, limit=4
    $region2: #{tpu_custom_call.1} parent=1 // loop_pre_header
      _
    $region3: #{tpu_custom_call.1} parent=1 // loop_header
      %s23 = sphi 0, %s27
      %p24 = scmp.ge.s32.totalorder %s23, 4
      %s33 = sphi 0, %s35
      %s36 = sphi 0, %s33
      %s37 = sphi 0, %s36
      %s53 = sphi 0, %s37
      %s57 = sphi 0, %s57
      %s59 = sphi 0, %s57
      %s60 = sphi 0, %s59
      %s74 = sphi 0, %s60
      %s78 = sphi 0, %s78
      %s80 = sphi 0, %s78
      %s81 = sphi 0, %s80
      %s95 = sphi 0, %s81
      %s99 = sphi 0, %s99
      %s101 = sphi 0, %s99
      %s102 = sphi 0, %s101
      %s116 = sphi 0, %s102
      %s120 = sphi 0, %s120
      %s122 = sphi 0, %s120
      %s123 = sphi 0, %s122
      %s137 = sphi 0, %s123
      %s141 = sphi 0, %s141
      %s143 = sphi 0, %s141
      %s144 = sphi 0, %s143
      %s158 = sphi 0, %s144
      %s162 = sphi 0, %s162
      %s164 = sphi 0, %s162
      %s165 = sphi 0, %s164
      %s179 = sphi 0, %s165
      %s185 = sphi 0, %s187
      %s188 = sphi 0, %s185
      %s189 = sphi 0, %s188
      %s205 = sphi 0, %s189
    $region4: #{tpu_custom_call.1} parent=1 // loop_header_branch
      %26 = sbr.rel (%p24) target = $region8
    $region5: #{tpu_custom_call.1} parent=1 // loop_body
      %s28 = ssub.s32 %s23, 1
      %s29 = ssub.s32 %s23, 2
      %s30 = sadd.s32 %s23, 1
      %s31 = ssub.s32 %s23, %s30
      %p32 = scmp.eq.s32.totalorder %s31, 0
      %s34 = sadd.s32 %s33, 1
      %s35 = scalar_select %p32, %s33, %s34
      %p38 = pneg %p32
      %p39 = scmp.eq.s32.totalorder %s23, 1
      %p40 = por %p38, %p39
      %p41 = scmp.ne.s32.totalorder %s33, %s36
      %p42 = scmp.eq.s32.totalorder %s23, 0
      %p43 = por %p41, %p42
      %p44 = scmp.ne.s32.totalorder %s33, %s36
      %p45 = scmp.eq.s32.totalorder %s28, 1
      %p46 = por %p44, %p45
      %p47 = scmp.ne.s32.totalorder %s36, %s37
      %p48 = scmp.eq.s32.totalorder %s28, 0
      %p49 = por %p47, %p48
      %p50 = scmp.ne.s32.totalorder %s36, %s37
      %p51 = scmp.eq.s32.totalorder %s29, 1
      %p52 = por %p50, %p51
      %p54 = scmp.ne.s32.totalorder %s37, %s53
      %p55 = scmp.eq.s32.totalorder %s29, 0
      %p56 = por %p54, %p55
      %s58 = sadd.s32 %s57, 1
      %p61 = scmp.eq.s32.totalorder %s23, 1
      %p62 = scmp.ne.s32.totalorder %s57, %s59
      %p63 = scmp.eq.s32.totalorder %s23, 0
      %p64 = por %p62, %p63
      %p65 = scmp.ne.s32.totalorder %s57, %s59
      %p66 = scmp.eq.s32.totalorder %s28, 1
      %p67 = por %p65, %p66
      %p68 = scmp.ne.s32.totalorder %s59, %s60
      %p69 = scmp.eq.s32.totalorder %s28, 0
      %p70 = por %p68, %p69
      %p71 = scmp.ne.s32.totalorder %s59, %s60
      %p72 = scmp.eq.s32.totalorder %s29, 1
      %p73 = por %p71, %p72
      %p75 = scmp.ne.s32.totalorder %s60, %s74
      %p76 = scmp.eq.s32.totalorder %s29, 0
      %p77 = por %p75, %p76
      %s79 = sadd.s32 %s78, 1
      %p82 = scmp.eq.s32.totalorder %s23, 1
      %p83 = scmp.ne.s32.totalorder %s78, %s80
      %p84 = scmp.eq.s32.totalorder %s23, 0
      %p85 = por %p83, %p84
      %p86 = scmp.ne.s32.totalorder %s78, %s80
      %p87 = scmp.eq.s32.totalorder %s28, 1
      %p88 = por %p86, %p87
      %p89 = scmp.ne.s32.totalorder %s80, %s81
      %p90 = scmp.eq.s32.totalorder %s28, 0
      %p91 = por %p89, %p90
      %p92 = scmp.ne.s32.totalorder %s80, %s81
      %p93 = scmp.eq.s32.totalorder %s29, 1
      %p94 = por %p92, %p93
      %p96 = scmp.ne.s32.totalorder %s81, %s95
      %p97 = scmp.eq.s32.totalorder %s29, 0
      %p98 = por %p96, %p97
      %s100 = sadd.s32 %s99, 1
      %p103 = scmp.eq.s32.totalorder %s23, 1
      %p104 = scmp.ne.s32.totalorder %s99, %s101
      %p105 = scmp.eq.s32.totalorder %s23, 0
      %p106 = por %p104, %p105
      %p107 = scmp.ne.s32.totalorder %s99, %s101
      %p108 = scmp.eq.s32.totalorder %s28, 1
      %p109 = por %p107, %p108
      %p110 = scmp.ne.s32.totalorder %s101, %s102
      %p111 = scmp.eq.s32.totalorder %s28, 0
      %p112 = por %p110, %p111
      %p113 = scmp.ne.s32.totalorder %s101, %s102
      %p114 = scmp.eq.s32.totalorder %s29, 1
      %p115 = por %p113, %p114
      %p117 = scmp.ne.s32.totalorder %s102, %s116
      %p118 = scmp.eq.s32.totalorder %s29, 0
      %p119 = por %p117, %p118
      %s121 = sadd.s32 %s120, 1
      %p124 = scmp.eq.s32.totalorder %s23, 1
      %p125 = scmp.ne.s32.totalorder %s120, %s122
      %p126 = scmp.eq.s32.totalorder %s23, 0
      %p127 = por %p125, %p126
      %p128 = scmp.ne.s32.totalorder %s120, %s122
      %p129 = scmp.eq.s32.totalorder %s28, 1
      %p130 = por %p128, %p129
      %p131 = scmp.ne.s32.totalorder %s122, %s123
      %p132 = scmp.eq.s32.totalorder %s28, 0
      %p133 = por %p131, %p132
      %p134 = scmp.ne.s32.totalorder %s122, %s123
      %p135 = scmp.eq.s32.totalorder %s29, 1
      %p136 = por %p134, %p135
      %p138 = scmp.ne.s32.totalorder %s123, %s137
      %p139 = scmp.eq.s32.totalorder %s29, 0
      %p140 = por %p138, %p139
      %s142 = sadd.s32 %s141, 1
      %p145 = scmp.eq.s32.totalorder %s23, 1
      %p146 = scmp.ne.s32.totalorder %s141, %s143
      %p147 = scmp.eq.s32.totalorder %s23, 0
      %p148 = por %p146, %p147
      %p149 = scmp.ne.s32.totalorder %s141, %s143
      %p150 = scmp.eq.s32.totalorder %s28, 1
      %p151 = por %p149, %p150
      %p152 = scmp.ne.s32.totalorder %s143, %s144
      %p153 = scmp.eq.s32.totalorder %s28, 0
      %p154 = por %p152, %p153
      %p155 = scmp.ne.s32.totalorder %s143, %s144
      %p156 = scmp.eq.s32.totalorder %s29, 1
      %p157 = por %p155, %p156
      %p159 = scmp.ne.s32.totalorder %s144, %s158
      %p160 = scmp.eq.s32.totalorder %s29, 0
      %p161 = por %p159, %p160
      %s163 = sadd.s32 %s162, 1
      %p166 = scmp.eq.s32.totalorder %s23, 1
      %p167 = scmp.ne.s32.totalorder %s162, %s164
      %p168 = scmp.eq.s32.totalorder %s23, 0
      %p169 = por %p167, %p168
      %p170 = scmp.ne.s32.totalorder %s162, %s164
      %p171 = scmp.eq.s32.totalorder %s28, 1
      %p172 = por %p170, %p171
      %p173 = scmp.ne.s32.totalorder %s164, %s165
      %p174 = scmp.eq.s32.totalorder %s28, 0
      %p175 = por %p173, %p174
      %p176 = scmp.ne.s32.totalorder %s164, %s165
      %p177 = scmp.eq.s32.totalorder %s29, 1
      %p178 = por %p176, %p177
      %p180 = scmp.ne.s32.totalorder %s165, %s179
      %p181 = scmp.eq.s32.totalorder %s29, 0
      %p182 = por %p180, %p181
      %s183 = ssub.s32 %s23, %s30
      %p184 = scmp.eq.s32.totalorder %s183, 0
      %s186 = sadd.s32 %s185, 1
      %s187 = scalar_select %p184, %s185, %s186
      %p190 = pneg %p184
      %p191 = scmp.eq.s32.totalorder %s23, 1
      %p192 = por %p190, %p191
      %p193 = scmp.ne.s32.totalorder %s185, %s188
      %p194 = scmp.eq.s32.totalorder %s23, 0
      %p195 = por %p193, %p194
      %p196 = scmp.ne.s32.totalorder %s185, %s188
      %p197 = scmp.eq.s32.totalorder %s28, 1
      %p198 = por %p196, %p197
      %p199 = scmp.ne.s32.totalorder %s188, %s189
      %p200 = scmp.eq.s32.totalorder %s28, 0
      %p201 = por %p199, %p200
      %p202 = scmp.ne.s32.totalorder %s188, %s189
      %p203 = scmp.eq.s32.totalorder %s29, 1
      %p204 = por %p202, %p203
      %p206 = scmp.ne.s32.totalorder %s189, %s205
      %p207 = scmp.eq.s32.totalorder %s29, 0
      %p208 = por %p206, %p207
      %p209 = scmp.le.s32.totalorder 1, %s23
      %p210 = scmp.lt.s32.totalorder %s23, 3
      %p211 = pnand %p209, %p210
      %p212 = pneg %p211
      // Predicated region
      $region9: #{tpu_custom_call.1} parent=5 // pred_check
        _
      $region10: #{tpu_custom_call.1} parent=5 // pred_check_branch
        %214 = sbr.rel (%p211) target = $region12
      $region11: #{tpu_custom_call.1} parent=5 // pred_region
        %s215 = ssub.s32 %s23, 1
        // Predicated region
        $region13: #{tpu_custom_call.1} parent=11 // pred_check
          %p216 = pneg %p70
        $region14: #{tpu_custom_call.1} parent=11 // pred_check_branch
          %218 = sbr.rel (%p216) target = $region16
        $region15: #{tpu_custom_call.1} parent=11 // pred_region
          %220 = vsyncadd [#allocation7], 0
          %s222 = sshll.u32 %s1, 4
          %s223 = int_to_ptr.hbm [resolvable:$true] %s222
          %225 = dma.hbm_to_smem %s223, 32, [#allocation9], [#allocation7]
        $region16: #{tpu_custom_call.1} parent=11 // pred_fallthru
          _
        // Predicated region
        $region17: #{tpu_custom_call.1} parent=11 // pred_check
          %p226 = pneg %p91
        $region18: #{tpu_custom_call.1} parent=11 // pred_check_branch
          %228 = sbr.rel (%p226) target = $region20
        $region19: #{tpu_custom_call.1} parent=11 // pred_region
          %230 = vsyncadd [#allocation8], 0
          %s232 = sshll.u32 %s2, 4
          %s233 = int_to_ptr.vmem [resolvable:$true] %s232
          %235 = dma.vmem_to_smem %s233, 16, [#allocation10], [#allocation8]
        $region20: #{tpu_custom_call.1} parent=11 // pred_fallthru
          _
        // Predicated region
        $region21: #{tpu_custom_call.1} parent=11 // pred_check
          %p236 = pneg %p112
        $region22: #{tpu_custom_call.1} parent=11 // pred_check_branch
          %238 = sbr.rel (%p236) target = $region24
        $region23: #{tpu_custom_call.1} parent=11 // pred_region
          %240 = vsyncadd [#allocation12], 0
          %s242 = sshll.u32 %s3, 4
          %s243 = int_to_ptr.vmem [resolvable:$true] %s242
          %245 = dma.vmem_to_smem %s243, 16, [#allocation11], [#allocation12]
        $region24: #{tpu_custom_call.1} parent=11 // pred_fallthru
          _
        // Predicated region
        $region25: #{tpu_custom_call.1} parent=11 // pred_check
          %p246 = pneg %p133
        $region26: #{tpu_custom_call.1} parent=11 // pred_check_branch
          %248 = sbr.rel (%p246) target = $region28
        $region27: #{tpu_custom_call.1} parent=11 // pred_region
          %250 = vsyncadd [#allocation12], 0
          %s252 = sshll.u32 %s4, 4
          %s253 = int_to_ptr.vmem [resolvable:$true] %s252
          %255 = dma.vmem_to_smem %s253, 16, [#allocation13], [#allocation12]
        $region28: #{tpu_custom_call.1} parent=11 // pred_fallthru
          _
        // Predicated region
        $region29: #{tpu_custom_call.1} parent=11 // pred_check
          %p256 = pneg %p154
        $region30: #{tpu_custom_call.1} parent=11 // pred_check_branch
          %258 = sbr.rel (%p256) target = $region32
        $region31: #{tpu_custom_call.1} parent=11 // pred_region
          %260 = vsyncadd [#allocation15], 0
          %s262 = sshll.u32 %s5, 4
          %s263 = int_to_ptr.vmem [resolvable:$true] %s262
          %265 = dma.vmem_to_smem %s263, 16, [#allocation14], [#allocation15]
        $region32: #{tpu_custom_call.1} parent=11 // pred_fallthru
          _
        // Predicated region
        $region33: #{tpu_custom_call.1} parent=11 // pred_check
          %p266 = pneg %p175
        $region34: #{tpu_custom_call.1} parent=11 // pred_check_branch
          %268 = sbr.rel (%p266) target = $region36
        $region35: #{tpu_custom_call.1} parent=11 // pred_region
          %270 = vsyncadd [#allocation15], 0
          %s272 = sshll.u32 %s6, 4
          %s273 = int_to_ptr.vmem [resolvable:$true] %s272
          %275 = dma.vmem_to_smem %s273, 16, [#allocation16], [#allocation15]
        $region36: #{tpu_custom_call.1} parent=11 // pred_fallthru
          _
      $region12: #{tpu_custom_call.1} parent=5 // pred_fallthru
        _
      %p276 = scmp.lt.s32.totalorder %s23, 2
      // Predicated region
      $region37: #{tpu_custom_call.1} parent=5 // pred_check
        %p277 = pneg %p276
      $region38: #{tpu_custom_call.1} parent=5 // pred_check_branch
        %279 = sbr.rel (%p277) target = $region40
      $region39: #{tpu_custom_call.1} parent=5 // pred_region
        // Predicated region
        $region41: #{tpu_custom_call.1} parent=39 // pred_check
          %p280 = pneg %p43
        $region42: #{tpu_custom_call.1} parent=39 // pred_check_branch
          %282 = sbr.rel (%p280) target = $region44
        $region43: #{tpu_custom_call.1} parent=39 // pred_region
          %s283 = sand.u32 %s33, 1
          %s284 = scalar_lea.sflag [#allocation5], %s283
          %s285 = sand.u32 %s33, 1
          %s286 = smul.addr %s285, 64
          %s287 = scalar_lea.vmem [#allocation4], %s286
          %289 = vsyncadd %s284, 0
          %s290 = smul.addr %s23, 8
          %s291 = smul.addr %s290, 8
          %s292 = scalar_lea.hbm %s0, %s291
          %s293 = sshll.u32 %s292, 4
          %s294 = int_to_ptr.hbm [resolvable:$true] %s293
          %s295 = sshll.u32 %s287, 4
          %s296 = int_to_ptr.vmem [resolvable:$true] %s295
          %301 = dma.hbm_to_vmem [thread:$0]  %s294, 1024, %s296, %s284, 128, 128, 8
        $region44: #{tpu_custom_call.1} parent=39 // pred_fallthru
          _
      $region40: #{tpu_custom_call.1} parent=5 // pred_fallthru
        _
      %p302 = scmp.le.s32.totalorder 1, %s23
      %p303 = scmp.lt.s32.totalorder %s23, 3
      %p304 = pnand %p302, %p303
      %p305 = pneg %p304
      // Predicated region
      $region45: #{tpu_custom_call.1} parent=5 // pred_check
        _
      $region46: #{tpu_custom_call.1} parent=5 // pred_check_branch
        %307 = sbr.rel (%p304) target = $region48
      $region47: #{tpu_custom_call.1} parent=5 // pred_region
        %s308 = ssub.s32 %s23, 1
        %s309 = sand.u32 %s36, 1
        %s310 = scalar_lea.sflag [#allocation5], %s309
        %s311 = sand.u32 %s36, 1
        %s312 = smul.addr %s311, 64
        %s313 = scalar_lea.vmem [#allocation4], %s312
        // Predicated region
        $region49: #{tpu_custom_call.1} parent=47 // pred_check
          %p314 = pneg %p49
        $region50: #{tpu_custom_call.1} parent=47 // pred_check_branch
          %316 = sbr.rel (%p314) target = $region52
        $region51: #{tpu_custom_call.1} parent=47 // pred_region
          %318 = dma.done %s310, 1024
        $region52: #{tpu_custom_call.1} parent=47 // pred_fallthru
          _
        // Predicated region
        $region53: #{tpu_custom_call.1} parent=47 // pred_check
          %p319 = pneg %p70
        $region54: #{tpu_custom_call.1} parent=47 // pred_check_branch
          %321 = sbr.rel (%p319) target = $region56
        $region55: #{tpu_custom_call.1} parent=47 // pred_region
          %323 = dma.done [#allocation7], 32
        $region56: #{tpu_custom_call.1} parent=47 // pred_fallthru
          _
        // Predicated region
        $region57: #{tpu_custom_call.1} parent=47 // pred_check
          %p324 = pneg %p91
        $region58: #{tpu_custom_call.1} parent=47 // pred_check_branch
          %326 = sbr.rel (%p324) target = $region60
        $region59: #{tpu_custom_call.1} parent=47 // pred_region
          %328 = dma.done [#allocation8], 16
        $region60: #{tpu_custom_call.1} parent=47 // pred_fallthru
          _
        // Predicated region
        $region61: #{tpu_custom_call.1} parent=47 // pred_check
          %p329 = pneg %p112
        $region62: #{tpu_custom_call.1} parent=47 // pred_check_branch
          %331 = sbr.rel (%p329) target = $region64
        $region63: #{tpu_custom_call.1} parent=47 // pred_region
          %333 = dma.done [#allocation12], 16
        $region64: #{tpu_custom_call.1} parent=47 // pred_fallthru
          _
        // Predicated region
        $region65: #{tpu_custom_call.1} parent=47 // pred_check
          %p334 = pneg %p133
        $region66: #{tpu_custom_call.1} parent=47 // pred_check_branch
          %336 = sbr.rel (%p334) target = $region68
        $region67: #{tpu_custom_call.1} parent=47 // pred_region
          %338 = dma.done [#allocation12], 16
        $region68: #{tpu_custom_call.1} parent=47 // pred_fallthru
          _
        // Predicated region
        $region69: #{tpu_custom_call.1} parent=47 // pred_check
          %p339 = pneg %p154
        $region70: #{tpu_custom_call.1} parent=47 // pred_check_branch
          %341 = sbr.rel (%p339) target = $region72
        $region71: #{tpu_custom_call.1} parent=47 // pred_region
          %343 = dma.done [#allocation15], 16
        $region72: #{tpu_custom_call.1} parent=47 // pred_fallthru
          _
        // Predicated region
        $region73: #{tpu_custom_call.1} parent=47 // pred_check
          %p344 = pneg %p175
        $region74: #{tpu_custom_call.1} parent=47 // pred_check_branch
          %346 = sbr.rel (%p344) target = $region76
        $region75: #{tpu_custom_call.1} parent=47 // pred_region
          %348 = dma.done [#allocation15], 16
        $region76: #{tpu_custom_call.1} parent=47 // pred_fallthru
          _
        %349 = sfence
        %s350 = sand.u32 %s36, 1
        %s351 = scalar_lea.sflag [#allocation5], %s350
        %s352 = sand.u32 %s36, 1
        %s353 = smul.addr %s352, 64
        %s354 = scalar_lea.vmem [#allocation4], %s353
        %p355 = pneg %p49
        %p356 = pneg %p46
        %p357 = pneg %p70
        %p358 = pneg %p67
        %p359 = pneg %p91
        %p360 = pneg %p88
        %p361 = pneg %p112
        %p362 = pneg %p109
        %p363 = pneg %p133
        %p364 = pneg %p130
        %p365 = pneg %p154
        %p366 = pneg %p151
        %p367 = pneg %p175
        %p368 = pneg %p172
        %p369 = pneg %p201
        %p370 = pneg %p198
        %s371 = sand.u32 %s188, 1
        %s372 = scalar_lea.sflag [#allocation6], %s371
        %s373 = sand.u32 %s188, 1
        %s374 = smul.addr %s373, 128
        %s375 = scalar_lea.vmem [#allocation17], %s374
        %vm376 = vcmask 179200
        %377 = vst.msk [vmem:[#allocation2] sm:$0xff] %vm376, 0.0
        %378 = vst.msk [vmem:[#allocation2 + $0x8] sm:$0xff] %vm376, 0.0
        %vm379 = vcmask 177152
        %380 = vst.msk [vmem:[#allocation2 + $0x10] sm:$0x3f] %vm379, 0.0
        %381 = vst.msk [vmem:[#allocation2 + $0x18] sm:$0xff] %vm376, 0.0
        %382 = vst.msk [vmem:[#allocation2 + $0x20] sm:$0xff] %vm376, 0.0
        %383 = vst.msk [vmem:[#allocation2 + $0x28] sm:$0x3f] %vm379, 0.0
        %384 = vst.msk [vmem:[#allocation2 + $0x30] sm:$0xff] %vm376, 0.0
        %385 = vst.msk [vmem:[#allocation2 + $0x38] sm:$0xff] %vm376, 0.0
        %386 = vst.msk [vmem:[#allocation2 + $0x40] sm:$0x3f] %vm379, 0.0
        %387 = vst.msk [vmem:[#allocation2 + $0x48] sm:$0xff] %vm376, 0.0
        %388 = vst.msk [vmem:[#allocation2 + $0x50] sm:$0xff] %vm376, 0.0
        %389 = vst.msk [vmem:[#allocation2 + $0x58] sm:$0x3f] %vm379, 0.0
        %v390 = vld [vmem:[%s313] sm:$0xff]
        %v391 = vld [vmem:[%s313 + $0x8] sm:$0xff]
        %v392 = vld [vmem:[%s313 + $0x10] sm:$0xff]
        %v393 = vld [vmem:[%s313 + $0x18] sm:$0xff]
        %v394 = vld [vmem:[%s313 + $0x20] sm:$0xff]
        %v395 = vld [vmem:[%s313 + $0x28] sm:$0xff]
        %v396 = vld [vmem:[%s313 + $0x30] sm:$0xff]
        %v397 = vld [vmem:[%s313 + $0x38] sm:$0xff]
        %406 = vrot.lane.b32.xlu0 %v390, 3
        %v407 = vpop.permute.xlu0 %406
        %408 = vrot.lane.b32.xlu0 %v391, 3
        %v409 = vpop.permute.xlu0 %408
        %410 = vrot.lane.b32.xlu0 %v392, 3
        %v411 = vpop.permute.xlu0 %410
        %412 = vrot.lane.b32.xlu0 %v393, 3
        %v413 = vpop.permute.xlu0 %412
        %414 = vrot.lane.b32.xlu0 %v394, 3
        %v415 = vpop.permute.xlu0 %414
        %416 = vrot.lane.b32.xlu0 %v395, 3
        %v417 = vpop.permute.xlu0 %416
        %418 = vrot.lane.b32.xlu0 %v396, 3
        %v419 = vpop.permute.xlu0 %418
        %420 = vrot.lane.b32.xlu0 %v397, 3
        %v421 = vpop.permute.xlu0 %420
        %vm430 = vcmask 154648
        %431 = vst.msk [vmem:[#allocation2 + $0x3] sm:$0xff] %vm430, %v407
        %432 = vst.msk [vmem:[#allocation2 + $0xb] sm:$0xff] %vm430, %v409
        %433 = vst.msk [vmem:[#allocation2 + $0x1b] sm:$0xff] %vm430, %v411
        %434 = vst.msk [vmem:[#allocation2 + $0x23] sm:$0xff] %vm430, %v413
        %435 = vst.msk [vmem:[#allocation2 + $0x33] sm:$0xff] %vm430, %v415
        %436 = vst.msk [vmem:[#allocation2 + $0x3b] sm:$0xff] %vm430, %v417
        %437 = vst.msk [vmem:[#allocation2 + $0x4b] sm:$0xff] %vm430, %v419
        %438 = vst.msk [vmem:[#allocation2 + $0x53] sm:$0xff] %vm430, %v421
        %v439 = vld [vmem:[#allocation2] sm:$0xff]
        %v440 = vld [vmem:[#allocation2 + $0x8] sm:$0xff]
        %s441 = sld [smem:[#allocation9]]
        %v442 = vstv %s441
        %v443 = vmul.f32 %v439, %v442
        %v444 = vmul.f32 %v440, %v442
        %s445 = sld [smem:[#allocation9 + $0x1]]
        %v446 = vstv %s445
        %v447 = vmul.f32 %v439, %v446
        %v448 = vmul.f32 %v440, %v446
        %451 = vrot.lane.b32.xlu0 %v447, 127
        %v452 = vpop.permute.xlu0 %451
        %453 = vrot.lane.b32.xlu0 %v448, 127
        %v454 = vpop.permute.xlu0 %453
        %v457 = vadd.f32 %v443, %v452
        %v458 = vadd.f32 %v444, %v454
        %s459 = sld [smem:[#allocation9 + $0x2]]
        %v460 = vstv %s459
        %v461 = vmul.f32 %v439, %v460
        %v462 = vmul.f32 %v440, %v460
        %465 = vrot.lane.b32.xlu0 %v461, 126
        %v466 = vpop.permute.xlu0 %465
        %467 = vrot.lane.b32.xlu0 %v462, 126
        %v468 = vpop.permute.xlu0 %467
        %v471 = vadd.f32 %v457, %v466
        %v472 = vadd.f32 %v458, %v468
        %s473 = sld [smem:[#allocation9 + $0x3]]
        %v474 = vstv %s473
        %v475 = vmul.f32 %v439, %v474
        %v476 = vmul.f32 %v440, %v474
        %479 = vrot.lane.b32.xlu0 %v475, 125
        %v480 = vpop.permute.xlu0 %479
        %481 = vrot.lane.b32.xlu0 %v476, 125
        %v482 = vpop.permute.xlu0 %481
        %v485 = vadd.f32 %v471, %v480
        %v486 = vadd.f32 %v472, %v482
        %s487 = sld [smem:[#allocation9 + $0x4]]
        %v488 = vstv %s487
        %v489 = vmul.f32 %v439, %v488
        %v490 = vmul.f32 %v440, %v488
        %493 = vrot.lane.b32.xlu0 %v489, 124
        %v494 = vpop.permute.xlu0 %493
        %495 = vrot.lane.b32.xlu0 %v490, 124
        %v496 = vpop.permute.xlu0 %495
        %v499 = vadd.f32 %v485, %v494
        %v500 = vadd.f32 %v486, %v496
        %s501 = sld [smem:[#allocation9 + $0x5]]
        %v502 = vstv %s501
        %v503 = vmul.f32 %v439, %v502
        %v504 = vmul.f32 %v440, %v502
        %507 = vrot.lane.b32.xlu0 %v503, 123
        %v508 = vpop.permute.xlu0 %507
        %509 = vrot.lane.b32.xlu0 %v504, 123
        %v510 = vpop.permute.xlu0 %509
        %v513 = vadd.f32 %v499, %v508
        %v514 = vadd.f32 %v500, %v510
        %s515 = sld [smem:[#allocation9 + $0x6]]
        %v516 = vstv %s515
        %v517 = vmul.f32 %v439, %v516
        %v518 = vmul.f32 %v440, %v516
        %521 = vrot.lane.b32.xlu0 %v517, 122
        %v522 = vpop.permute.xlu0 %521
        %523 = vrot.lane.b32.xlu0 %v518, 122
        %v524 = vpop.permute.xlu0 %523
        %v527 = vadd.f32 %v513, %v522
        %v528 = vadd.f32 %v514, %v524
        %v529 = vld [vmem:[#allocation2 + $0x1] sm:$0xff]
        %v530 = vld [vmem:[#allocation2 + $0x9] sm:$0xff]
        %s531 = sld [smem:[#allocation9 + $0x7]]
        %v532 = vstv %s531
        %v533 = vmul.f32 %v529, %v532
        %v534 = vmul.f32 %v530, %v532
        %v535 = vadd.f32 %v527, %v533
        %v536 = vadd.f32 %v528, %v534
        %s537 = sld [smem:[#allocation9 + $0x8]]
        %v538 = vstv %s537
        %v539 = vmul.f32 %v529, %v538
        %v540 = vmul.f32 %v530, %v538
        %543 = vrot.lane.b32.xlu0 %v539, 127
        %v544 = vpop.permute.xlu0 %543
        %545 = vrot.lane.b32.xlu0 %v540, 127
        %v546 = vpop.permute.xlu0 %545
        %v549 = vadd.f32 %v535, %v544
        %v550 = vadd.f32 %v536, %v546
        %s551 = sld [smem:[#allocation9 + $0x9]]
        %v552 = vstv %s551
        %v553 = vmul.f32 %v529, %v552
        %v554 = vmul.f32 %v530, %v552
        %557 = vrot.lane.b32.xlu0 %v553, 126
        %v558 = vpop.permute.xlu0 %557
        %559 = vrot.lane.b32.xlu0 %v554, 126
        %v560 = vpop.permute.xlu0 %559
        %v563 = vadd.f32 %v549, %v558
        %v564 = vadd.f32 %v550, %v560
        %s565 = sld [smem:[#allocation9 + $0xa]]
        %v566 = vstv %s565
        %v567 = vmul.f32 %v529, %v566
        %v568 = vmul.f32 %v530, %v566
        %571 = vrot.lane.b32.xlu0 %v567, 125
        %v572 = vpop.permute.xlu0 %571
        %573 = vrot.lane.b32.xlu0 %v568, 125
        %v574 = vpop.permute.xlu0 %573
        %v577 = vadd.f32 %v563, %v572
        %v578 = vadd.f32 %v564, %v574
        %s579 = sld [smem:[#allocation9 + $0xb]]
        %v580 = vstv %s579
        %v581 = vmul.f32 %v529, %v580
        %v582 = vmul.f32 %v530, %v580
        %585 = vrot.lane.b32.xlu0 %v581, 124
        %v586 = vpop.permute.xlu0 %585
        %587 = vrot.lane.b32.xlu0 %v582, 124
        %v588 = vpop.permute.xlu0 %587
        %v591 = vadd.f32 %v577, %v586
        %v592 = vadd.f32 %v578, %v588
        %s593 = sld [smem:[#allocation9 + $0xc]]
        %v594 = vstv %s593
        %v595 = vmul.f32 %v529, %v594
        %v596 = vmul.f32 %v530, %v594
        %599 = vrot.lane.b32.xlu0 %v595, 123
        %v600 = vpop.permute.xlu0 %599
        %601 = vrot.lane.b32.xlu0 %v596, 123
        %v602 = vpop.permute.xlu0 %601
        %v605 = vadd.f32 %v591, %v600
        %v606 = vadd.f32 %v592, %v602
        %s607 = sld [smem:[#allocation9 + $0xd]]
        %v608 = vstv %s607
        %v609 = vmul.f32 %v529, %v608
        %v610 = vmul.f32 %v530, %v608
        %613 = vrot.lane.b32.xlu0 %v609, 122
        %v614 = vpop.permute.xlu0 %613
        %615 = vrot.lane.b32.xlu0 %v610, 122
        %v616 = vpop.permute.xlu0 %615
        %v619 = vadd.f32 %v605, %v614
        %v620 = vadd.f32 %v606, %v616
        %v621 = vld [vmem:[#allocation2 + $0x2] sm:$0xff]
        %v622 = vld [vmem:[#allocation2 + $0xa] sm:$0xff]
        %s623 = sld [smem:[#allocation9 + $0xe]]
        %v624 = vstv %s623
        %v625 = vmul.f32 %v621, %v624
        %v626 = vmul.f32 %v622, %v624
        %v627 = vadd.f32 %v619, %v625
        %v628 = vadd.f32 %v620, %v626
        %s629 = sld [smem:[#allocation9 + $0xf]]
        %v630 = vstv %s629
        %v631 = vmul.f32 %v621, %v630
        %v632 = vmul.f32 %v622, %v630
        %635 = vrot.lane.b32.xlu0 %v631, 127
        %v636 = vpop.permute.xlu0 %635
        %637 = vrot.lane.b32.xlu0 %v632, 127
        %v638 = vpop.permute.xlu0 %637
        %v641 = vadd.f32 %v627, %v636
        %v642 = vadd.f32 %v628, %v638
        %s643 = sld [smem:[#allocation9 + $0x10]]
        %v644 = vstv %s643
        %v645 = vmul.f32 %v621, %v644
        %v646 = vmul.f32 %v622, %v644
        %649 = vrot.lane.b32.xlu0 %v645, 126
        %v650 = vpop.permute.xlu0 %649
        %651 = vrot.lane.b32.xlu0 %v646, 126
        %v652 = vpop.permute.xlu0 %651
        %v655 = vadd.f32 %v641, %v650
        %v656 = vadd.f32 %v642, %v652
        %s657 = sld [smem:[#allocation9 + $0x11]]
        %v658 = vstv %s657
        %v659 = vmul.f32 %v621, %v658
        %v660 = vmul.f32 %v622, %v658
        %663 = vrot.lane.b32.xlu0 %v659, 125
        %v664 = vpop.permute.xlu0 %663
        %665 = vrot.lane.b32.xlu0 %v660, 125
        %v666 = vpop.permute.xlu0 %665
        %v669 = vadd.f32 %v655, %v664
        %v670 = vadd.f32 %v656, %v666
        %s671 = sld [smem:[#allocation9 + $0x12]]
        %v672 = vstv %s671
        %v673 = vmul.f32 %v621, %v672
        %v674 = vmul.f32 %v622, %v672
        %677 = vrot.lane.b32.xlu0 %v673, 124
        %v678 = vpop.permute.xlu0 %677
        %679 = vrot.lane.b32.xlu0 %v674, 124
        %v680 = vpop.permute.xlu0 %679
        %v683 = vadd.f32 %v669, %v678
        %v684 = vadd.f32 %v670, %v680
        %s685 = sld [smem:[#allocation9 + $0x13]]
        %v686 = vstv %s685
        %v687 = vmul.f32 %v621, %v686
        %v688 = vmul.f32 %v622, %v686
        %691 = vrot.lane.b32.xlu0 %v687, 123
        %v692 = vpop.permute.xlu0 %691
        %693 = vrot.lane.b32.xlu0 %v688, 123
        %v694 = vpop.permute.xlu0 %693
        %v697 = vadd.f32 %v683, %v692
        %v698 = vadd.f32 %v684, %v694
        %s699 = sld [smem:[#allocation9 + $0x14]]
        %v700 = vstv %s699
        %v701 = vmul.f32 %v621, %v700
        %v702 = vmul.f32 %v622, %v700
        %705 = vrot.lane.b32.xlu0 %v701, 122
        %v706 = vpop.permute.xlu0 %705
        %707 = vrot.lane.b32.xlu0 %v702, 122
        %v708 = vpop.permute.xlu0 %707
        %v711 = vadd.f32 %v697, %v706
        %v712 = vadd.f32 %v698, %v708
        %v713 = vld [vmem:[#allocation2 + $0x3] sm:$0xff]
        %v714 = vld [vmem:[#allocation2 + $0xb] sm:$0xff]
        %s715 = sld [smem:[#allocation9 + $0x15]]
        %v716 = vstv %s715
        %v717 = vmul.f32 %v713, %v716
        %v718 = vmul.f32 %v714, %v716
        %v719 = vadd.f32 %v711, %v717
        %v720 = vadd.f32 %v712, %v718
        %s721 = sld [smem:[#allocation9 + $0x16]]
        %v722 = vstv %s721
        %v723 = vmul.f32 %v713, %v722
        %v724 = vmul.f32 %v714, %v722
        %727 = vrot.lane.b32.xlu0 %v723, 127
        %v728 = vpop.permute.xlu0 %727
        %729 = vrot.lane.b32.xlu0 %v724, 127
        %v730 = vpop.permute.xlu0 %729
        %v733 = vadd.f32 %v719, %v728
        %v734 = vadd.f32 %v720, %v730
        %s735 = sld [smem:[#allocation9 + $0x17]]
        %v736 = vstv %s735
        %v737 = vmul.f32 %v713, %v736
        %v738 = vmul.f32 %v714, %v736
        %741 = vrot.lane.b32.xlu0 %v737, 126
        %v742 = vpop.permute.xlu0 %741
        %743 = vrot.lane.b32.xlu0 %v738, 126
        %v744 = vpop.permute.xlu0 %743
        %v747 = vadd.f32 %v733, %v742
        %v748 = vadd.f32 %v734, %v744
        %s749 = sld [smem:[#allocation9 + $0x18]]
        %v750 = vstv %s749
        %v751 = vmul.f32 %v713, %v750
        %v752 = vmul.f32 %v714, %v750
        %755 = vrot.lane.b32.xlu0 %v751, 125
        %v756 = vpop.permute.xlu0 %755
        %757 = vrot.lane.b32.xlu0 %v752, 125
        %v758 = vpop.permute.xlu0 %757
        %v761 = vadd.f32 %v747, %v756
        %v762 = vadd.f32 %v748, %v758
        %s763 = sld [smem:[#allocation9 + $0x19]]
        %v764 = vstv %s763
        %v765 = vmul.f32 %v713, %v764
        %v766 = vmul.f32 %v714, %v764
        %769 = vrot.lane.b32.xlu0 %v765, 124
        %v770 = vpop.permute.xlu0 %769
        %771 = vrot.lane.b32.xlu0 %v766, 124
        %v772 = vpop.permute.xlu0 %771
        %v775 = vadd.f32 %v761, %v770
        %v776 = vadd.f32 %v762, %v772
        %s777 = sld [smem:[#allocation9 + $0x1a]]
        %v778 = vstv %s777
        %v779 = vmul.f32 %v713, %v778
        %v780 = vmul.f32 %v714, %v778
        %783 = vrot.lane.b32.xlu0 %v779, 123
        %v784 = vpop.permute.xlu0 %783
        %785 = vrot.lane.b32.xlu0 %v780, 123
        %v786 = vpop.permute.xlu0 %785
        %v789 = vadd.f32 %v775, %v784
        %v790 = vadd.f32 %v776, %v786
        %s791 = sld [smem:[#allocation9 + $0x1b]]
        %v792 = vstv %s791
        %v793 = vmul.f32 %v713, %v792
        %v794 = vmul.f32 %v714, %v792
        %797 = vrot.lane.b32.xlu0 %v793, 122
        %v798 = vpop.permute.xlu0 %797
        %799 = vrot.lane.b32.xlu0 %v794, 122
        %v800 = vpop.permute.xlu0 %799
        %v803 = vadd.f32 %v789, %v798
        %v804 = vadd.f32 %v790, %v800
        %v805 = vld [vmem:[#allocation2 + $0x4] sm:$0xff]
        %v806 = vld [vmem:[#allocation2 + $0xc] sm:$0xff]
        %s807 = sld [smem:[#allocation9 + $0x1c]]
        %v808 = vstv %s807
        %v809 = vmul.f32 %v805, %v808
        %v810 = vmul.f32 %v806, %v808
        %v811 = vadd.f32 %v803, %v809
        %v812 = vadd.f32 %v804, %v810
        %s813 = sld [smem:[#allocation9 + $0x1d]]
        %v814 = vstv %s813
        %v815 = vmul.f32 %v805, %v814
        %v816 = vmul.f32 %v806, %v814
        %819 = vrot.lane.b32.xlu0 %v815, 127
        %v820 = vpop.permute.xlu0 %819
        %821 = vrot.lane.b32.xlu0 %v816, 127
        %v822 = vpop.permute.xlu0 %821
        %v825 = vadd.f32 %v811, %v820
        %v826 = vadd.f32 %v812, %v822
        %s827 = sld [smem:[#allocation9 + $0x1e]]
        %v828 = vstv %s827
        %v829 = vmul.f32 %v805, %v828
        %v830 = vmul.f32 %v806, %v828
        %833 = vrot.lane.b32.xlu0 %v829, 126
        %v834 = vpop.permute.xlu0 %833
        %835 = vrot.lane.b32.xlu0 %v830, 126
        %v836 = vpop.permute.xlu0 %835
        %v839 = vadd.f32 %v825, %v834
        %v840 = vadd.f32 %v826, %v836
        %s841 = sld [smem:[#allocation9 + $0x1f]]
        %v842 = vstv %s841
        %v843 = vmul.f32 %v805, %v842
        %v844 = vmul.f32 %v806, %v842
        %847 = vrot.lane.b32.xlu0 %v843, 125
        %v848 = vpop.permute.xlu0 %847
        %849 = vrot.lane.b32.xlu0 %v844, 125
        %v850 = vpop.permute.xlu0 %849
        %v853 = vadd.f32 %v839, %v848
        %v854 = vadd.f32 %v840, %v850
        %s855 = sld [smem:[#allocation9 + $0x20]]
        %v856 = vstv %s855
        %v857 = vmul.f32 %v805, %v856
        %v858 = vmul.f32 %v806, %v856
        %861 = vrot.lane.b32.xlu0 %v857, 124
        %v862 = vpop.permute.xlu0 %861
        %863 = vrot.lane.b32.xlu0 %v858, 124
        %v864 = vpop.permute.xlu0 %863
        %v867 = vadd.f32 %v853, %v862
        %v868 = vadd.f32 %v854, %v864
        %s869 = sld [smem:[#allocation9 + $0x21]]
        %v870 = vstv %s869
        %v871 = vmul.f32 %v805, %v870
        %v872 = vmul.f32 %v806, %v870
        %875 = vrot.lane.b32.xlu0 %v871, 123
        %v876 = vpop.permute.xlu0 %875
        %877 = vrot.lane.b32.xlu0 %v872, 123
        %v878 = vpop.permute.xlu0 %877
        %v881 = vadd.f32 %v867, %v876
        %v882 = vadd.f32 %v868, %v878
        %s883 = sld [smem:[#allocation9 + $0x22]]
        %v884 = vstv %s883
        %v885 = vmul.f32 %v805, %v884
        %v886 = vmul.f32 %v806, %v884
        %889 = vrot.lane.b32.xlu0 %v885, 122
        %v890 = vpop.permute.xlu0 %889
        %891 = vrot.lane.b32.xlu0 %v886, 122
        %v892 = vpop.permute.xlu0 %891
        %v895 = vadd.f32 %v881, %v890
        %v896 = vadd.f32 %v882, %v892
        %v897 = vld [vmem:[#allocation2 + $0x5] sm:$0xff]
        %v898 = vld [vmem:[#allocation2 + $0xd] sm:$0xff]
        %s899 = sld [smem:[#allocation9 + $0x23]]
        %v900 = vstv %s899
        %v901 = vmul.f32 %v897, %v900
        %v902 = vmul.f32 %v898, %v900
        %v903 = vadd.f32 %v895, %v901
        %v904 = vadd.f32 %v896, %v902
        %s905 = sld [smem:[#allocation9 + $0x24]]
        %v906 = vstv %s905
        %v907 = vmul.f32 %v897, %v906
        %v908 = vmul.f32 %v898, %v906
        %911 = vrot.lane.b32.xlu0 %v907, 127
        %v912 = vpop.permute.xlu0 %911
        %913 = vrot.lane.b32.xlu0 %v908, 127
        %v914 = vpop.permute.xlu0 %913
        %v917 = vadd.f32 %v903, %v912
        %v918 = vadd.f32 %v904, %v914
        %s919 = sld [smem:[#allocation9 + $0x25]]
        %v920 = vstv %s919
        %v921 = vmul.f32 %v897, %v920
        %v922 = vmul.f32 %v898, %v920
        %925 = vrot.lane.b32.xlu0 %v921, 126
        %v926 = vpop.permute.xlu0 %925
        %927 = vrot.lane.b32.xlu0 %v922, 126
        %v928 = vpop.permute.xlu0 %927
        %v931 = vadd.f32 %v917, %v926
        %v932 = vadd.f32 %v918, %v928
        %s933 = sld [smem:[#allocation9 + $0x26]]
        %v934 = vstv %s933
        %v935 = vmul.f32 %v897, %v934
        %v936 = vmul.f32 %v898, %v934
        %939 = vrot.lane.b32.xlu0 %v935, 125
        %v940 = vpop.permute.xlu0 %939
        %941 = vrot.lane.b32.xlu0 %v936, 125
        %v942 = vpop.permute.xlu0 %941
        %v945 = vadd.f32 %v931, %v940
        %v946 = vadd.f32 %v932, %v942
        %s947 = sld [smem:[#allocation9 + $0x27]]
        %v948 = vstv %s947
        %v949 = vmul.f32 %v897, %v948
        %v950 = vmul.f32 %v898, %v948
        %953 = vrot.lane.b32.xlu0 %v949, 124
        %v954 = vpop.permute.xlu0 %953
        %955 = vrot.lane.b32.xlu0 %v950, 124
        %v956 = vpop.permute.xlu0 %955
        %v959 = vadd.f32 %v945, %v954
        %v960 = vadd.f32 %v946, %v956
        %s961 = sld [smem:[#allocation9 + $0x28]]
        %v962 = vstv %s961
        %v963 = vmul.f32 %v897, %v962
        %v964 = vmul.f32 %v898, %v962
        %967 = vrot.lane.b32.xlu0 %v963, 123
        %v968 = vpop.permute.xlu0 %967
        %969 = vrot.lane.b32.xlu0 %v964, 123
        %v970 = vpop.permute.xlu0 %969
        %v973 = vadd.f32 %v959, %v968
        %v974 = vadd.f32 %v960, %v970
        %s975 = sld [smem:[#allocation9 + $0x29]]
        %v976 = vstv %s975
        %v977 = vmul.f32 %v897, %v976
        %v978 = vmul.f32 %v898, %v976
        %981 = vrot.lane.b32.xlu0 %v977, 122
        %v982 = vpop.permute.xlu0 %981
        %983 = vrot.lane.b32.xlu0 %v978, 122
        %v984 = vpop.permute.xlu0 %983
        %v987 = vadd.f32 %v973, %v982
        %v988 = vadd.f32 %v974, %v984
        %v989 = vld [vmem:[#allocation2 + $0x6] sm:$0xff]
        %v990 = vld [vmem:[#allocation2 + $0xe] sm:$0xff]
        %s991 = sld [smem:[#allocation9 + $0x2a]]
        %v992 = vstv %s991
        %v993 = vmul.f32 %v989, %v992
        %v994 = vmul.f32 %v990, %v992
        %v995 = vadd.f32 %v987, %v993
        %v996 = vadd.f32 %v988, %v994
        %s997 = sld [smem:[#allocation9 + $0x2b]]
        %v998 = vstv %s997
        %v999 = vmul.f32 %v989, %v998
        %v1000 = vmul.f32 %v990, %v998
        %1003 = vrot.lane.b32.xlu0 %v999, 127
        %v1004 = vpop.permute.xlu0 %1003
        %1005 = vrot.lane.b32.xlu0 %v1000, 127
        %v1006 = vpop.permute.xlu0 %1005
        %v1009 = vadd.f32 %v995, %v1004
        %v1010 = vadd.f32 %v996, %v1006
        %s1011 = sld [smem:[#allocation9 + $0x2c]]
        %v1012 = vstv %s1011
        %v1013 = vmul.f32 %v989, %v1012
        %v1014 = vmul.f32 %v990, %v1012
        %1017 = vrot.lane.b32.xlu0 %v1013, 126
        %v1018 = vpop.permute.xlu0 %1017
        %1019 = vrot.lane.b32.xlu0 %v1014, 126
        %v1020 = vpop.permute.xlu0 %1019
        %v1023 = vadd.f32 %v1009, %v1018
        %v1024 = vadd.f32 %v1010, %v1020
        %s1025 = sld [smem:[#allocation9 + $0x2d]]
        %v1026 = vstv %s1025
        %v1027 = vmul.f32 %v989, %v1026
        %v1028 = vmul.f32 %v990, %v1026
        %1031 = vrot.lane.b32.xlu0 %v1027, 125
        %v1032 = vpop.permute.xlu0 %1031
        %1033 = vrot.lane.b32.xlu0 %v1028, 125
        %v1034 = vpop.permute.xlu0 %1033
        %v1037 = vadd.f32 %v1023, %v1032
        %v1038 = vadd.f32 %v1024, %v1034
        %s1039 = sld [smem:[#allocation9 + $0x2e]]
        %v1040 = vstv %s1039
        %v1041 = vmul.f32 %v989, %v1040
        %v1042 = vmul.f32 %v990, %v1040
        %1045 = vrot.lane.b32.xlu0 %v1041, 124
        %v1046 = vpop.permute.xlu0 %1045
        %1047 = vrot.lane.b32.xlu0 %v1042, 124
        %v1048 = vpop.permute.xlu0 %1047
        %v1051 = vadd.f32 %v1037, %v1046
        %v1052 = vadd.f32 %v1038, %v1048
        %s1053 = sld [smem:[#allocation9 + $0x2f]]
        %v1054 = vstv %s1053
        %v1055 = vmul.f32 %v989, %v1054
        %v1056 = vmul.f32 %v990, %v1054
        %1059 = vrot.lane.b32.xlu0 %v1055, 123
        %v1060 = vpop.permute.xlu0 %1059
        %1061 = vrot.lane.b32.xlu0 %v1056, 123
        %v1062 = vpop.permute.xlu0 %1061
        %v1065 = vadd.f32 %v1051, %v1060
        %v1066 = vadd.f32 %v1052, %v1062
        %s1067 = sld [smem:[#allocation9 + $0x30]]
        %v1068 = vstv %s1067
        %v1069 = vmul.f32 %v989, %v1068
        %v1070 = vmul.f32 %v990, %v1068
        %1073 = vrot.lane.b32.xlu0 %v1069, 122
        %v1074 = vpop.permute.xlu0 %1073
        %1075 = vrot.lane.b32.xlu0 %v1070, 122
        %v1076 = vpop.permute.xlu0 %1075
        %v1079 = vadd.f32 %v1065, %v1074
        %v1080 = vadd.f32 %v1066, %v1076
        %s1081 = sld [smem:[#allocation10]]
        %v1082 = vstv %s1081
        %v1083 = vmul.f32 %v1079, %v1082
        %v1084 = vmul.f32 %v1080, %v1082
        %s1085 = sld [smem:[#allocation11]]
        %v1086 = vstv %s1085
        %v1087 = vadd.f32 %v1083, %v1086
        %v1088 = vadd.f32 %v1084, %v1086
        %v1089 = vmax.f32 %v1087, 0.0
        %v1090 = vmax.f32 %v1088, 0.0
        %vm1091 = vcmask 130048
        %1092 = vst.msk [vmem:[#allocation3] sm:$0xff] %vm1091, %v1089
        %1093 = vst.msk [vmem:[#allocation3 + $0x8] sm:$0xff] %vm1091, %v1090
        %s1094 = scalar_lea.vmem [#allocation2], 24
        %v1095 = vld [vmem:[%s1094] sm:$0xff]
        %v1096 = vld [vmem:[%s1094 + $0x8] sm:$0xff]
        %s1097 = sld [smem:[#allocation9 + $0x31]]
        %v1098 = vstv %s1097
        %v1099 = vmul.f32 %v1095, %v1098
        %v1100 = vmul.f32 %v1096, %v1098
        %s1101 = sld [smem:[#allocation9 + $0x32]]
        %v1102 = vstv %s1101
        %v1103 = vmul.f32 %v1095, %v1102
        %v1104 = vmul.f32 %v1096, %v1102
        %1107 = vrot.lane.b32.xlu0 %v1103, 127
        %v1108 = vpop.permute.xlu0 %1107
        %1109 = vrot.lane.b32.xlu0 %v1104, 127
        %v1110 = vpop.permute.xlu0 %1109
        %v1113 = vadd.f32 %v1099, %v1108
        %v1114 = vadd.f32 %v1100, %v1110
        %s1115 = sld [smem:[#allocation9 + $0x33]]
        %v1116 = vstv %s1115
        %v1117 = vmul.f32 %v1095, %v1116
        %v1118 = vmul.f32 %v1096, %v1116
        %1121 = vrot.lane.b32.xlu0 %v1117, 126
        %v1122 = vpop.permute.xlu0 %1121
        %1123 = vrot.lane.b32.xlu0 %v1118, 126
        %v1124 = vpop.permute.xlu0 %1123
        %v1127 = vadd.f32 %v1113, %v1122
        %v1128 = vadd.f32 %v1114, %v1124
        %s1129 = sld [smem:[#allocation9 + $0x34]]
        %v1130 = vstv %s1129
        %v1131 = vmul.f32 %v1095, %v1130
        %v1132 = vmul.f32 %v1096, %v1130
        %1135 = vrot.lane.b32.xlu0 %v1131, 125
        %v1136 = vpop.permute.xlu0 %1135
        %1137 = vrot.lane.b32.xlu0 %v1132, 125
        %v1138 = vpop.permute.xlu0 %1137
        %v1141 = vadd.f32 %v1127, %v1136
        %v1142 = vadd.f32 %v1128, %v1138
        %s1143 = sld [smem:[#allocation9 + $0x35]]
        %v1144 = vstv %s1143
        %v1145 = vmul.f32 %v1095, %v1144
        %v1146 = vmul.f32 %v1096, %v1144
        %1149 = vrot.lane.b32.xlu0 %v1145, 124
        %v1150 = vpop.permute.xlu0 %1149
        %1151 = vrot.lane.b32.xlu0 %v1146, 124
        %v1152 = vpop.permute.xlu0 %1151
        %v1155 = vadd.f32 %v1141, %v1150
        %v1156 = vadd.f32 %v1142, %v1152
        %s1157 = sld [smem:[#allocation9 + $0x36]]
        %v1158 = vstv %s1157
        %v1159 = vmul.f32 %v1095, %v1158
        %v1160 = vmul.f32 %v1096, %v1158
        %1163 = vrot.lane.b32.xlu0 %v1159, 123
        %v1164 = vpop.permute.xlu0 %1163
        %1165 = vrot.lane.b32.xlu0 %v1160, 123
        %v1166 = vpop.permute.xlu0 %1165
        %v1169 = vadd.f32 %v1155, %v1164
        %v1170 = vadd.f32 %v1156, %v1166
        %s1171 = sld [smem:[#allocation9 + $0x37]]
        %v1172 = vstv %s1171
        %v1173 = vmul.f32 %v1095, %v1172
        %v1174 = vmul.f32 %v1096, %v1172
        %1177 = vrot.lane.b32.xlu0 %v1173, 122
        %v1178 = vpop.permute.xlu0 %1177
        %1179 = vrot.lane.b32.xlu0 %v1174, 122
        %v1180 = vpop.permute.xlu0 %1179
        %v1183 = vadd.f32 %v1169, %v1178
        %v1184 = vadd.f32 %v1170, %v1180
        %v1185 = vld [vmem:[%s1094 + $0x1] sm:$0xff]
        %v1186 = vld [vmem:[%s1094 + $0x9] sm:$0xff]
        %s1187 = sld [smem:[#allocation9 + $0x38]]
        %v1188 = vstv %s1187
        %v1189 = vmul.f32 %v1185, %v1188
        %v1190 = vmul.f32 %v1186, %v1188
        %v1191 = vadd.f32 %v1183, %v1189
        %v1192 = vadd.f32 %v1184, %v1190
        %s1193 = sld [smem:[#allocation9 + $0x39]]
        %v1194 = vstv %s1193
        %v1195 = vmul.f32 %v1185, %v1194
        %v1196 = vmul.f32 %v1186, %v1194
        %1199 = vrot.lane.b32.xlu0 %v1195, 127
        %v1200 = vpop.permute.xlu0 %1199
        %1201 = vrot.lane.b32.xlu0 %v1196, 127
        %v1202 = vpop.permute.xlu0 %1201
        %v1205 = vadd.f32 %v1191, %v1200
        %v1206 = vadd.f32 %v1192, %v1202
        %s1207 = sld [smem:[#allocation9 + $0x3a]]
        %v1208 = vstv %s1207
        %v1209 = vmul.f32 %v1185, %v1208
        %v1210 = vmul.f32 %v1186, %v1208
        %1213 = vrot.lane.b32.xlu0 %v1209, 126
        %v1214 = vpop.permute.xlu0 %1213
        %1215 = vrot.lane.b32.xlu0 %v1210, 126
        %v1216 = vpop.permute.xlu0 %1215
        %v1219 = vadd.f32 %v1205, %v1214
        %v1220 = vadd.f32 %v1206, %v1216
        %s1221 = sld [smem:[#allocation9 + $0x3b]]
        %v1222 = vstv %s1221
        %v1223 = vmul.f32 %v1185, %v1222
        %v1224 = vmul.f32 %v1186, %v1222
        %1227 = vrot.lane.b32.xlu0 %v1223, 125
        %v1228 = vpop.permute.xlu0 %1227
        %1229 = vrot.lane.b32.xlu0 %v1224, 125
        %v1230 = vpop.permute.xlu0 %1229
        %v1233 = vadd.f32 %v1219, %v1228
        %v1234 = vadd.f32 %v1220, %v1230
        %s1235 = sld [smem:[#allocation9 + $0x3c]]
        %v1236 = vstv %s1235
        %v1237 = vmul.f32 %v1185, %v1236
        %v1238 = vmul.f32 %v1186, %v1236
        %1241 = vrot.lane.b32.xlu0 %v1237, 124
        %v1242 = vpop.permute.xlu0 %1241
        %1243 = vrot.lane.b32.xlu0 %v1238, 124
        %v1244 = vpop.permute.xlu0 %1243
        %v1247 = vadd.f32 %v1233, %v1242
        %v1248 = vadd.f32 %v1234, %v1244
        %s1249 = sld [smem:[#allocation9 + $0x3d]]
        %v1250 = vstv %s1249
        %v1251 = vmul.f32 %v1185, %v1250
        %v1252 = vmul.f32 %v1186, %v1250
        %1255 = vrot.lane.b32.xlu0 %v1251, 123
        %v1256 = vpop.permute.xlu0 %1255
        %1257 = vrot.lane.b32.xlu0 %v1252, 123
        %v1258 = vpop.permute.xlu0 %1257
        %v1261 = vadd.f32 %v1247, %v1256
        %v1262 = vadd.f32 %v1248, %v1258
        %s1263 = sld [smem:[#allocation9 + $0x3e]]
        %v1264 = vstv %s1263
        %v1265 = vmul.f32 %v1185, %v1264
        %v1266 = vmul.f32 %v1186, %v1264
        %1269 = vrot.lane.b32.xlu0 %v1265, 122
        %v1270 = vpop.permute.xlu0 %1269
        %1271 = vrot.lane.b32.xlu0 %v1266, 122
        %v1272 = vpop.permute.xlu0 %1271
        %v1275 = vadd.f32 %v1261, %v1270
        %v1276 = vadd.f32 %v1262, %v1272
        %v1277 = vld [vmem:[%s1094 + $0x2] sm:$0xff]
        %v1278 = vld [vmem:[%s1094 + $0xa] sm:$0xff]
        %s1279 = sld [smem:[#allocation9 + $0x3f]]
        %v1280 = vstv %s1279
        %v1281 = vmul.f32 %v1277, %v1280
        %v1282 = vmul.f32 %v1278, %v1280
        %v1283 = vadd.f32 %v1275, %v1281
        %v1284 = vadd.f32 %v1276, %v1282
        %s1285 = sld [smem:[#allocation9 + $0x40]]
        %v1286 = vstv %s1285
        %v1287 = vmul.f32 %v1277, %v1286
        %v1288 = vmul.f32 %v1278, %v1286
        %1291 = vrot.lane.b32.xlu0 %v1287, 127
        %v1292 = vpop.permute.xlu0 %1291
        %1293 = vrot.lane.b32.xlu0 %v1288, 127
        %v1294 = vpop.permute.xlu0 %1293
        %v1297 = vadd.f32 %v1283, %v1292
        %v1298 = vadd.f32 %v1284, %v1294
        %s1299 = sld [smem:[#allocation9 + $0x41]]
        %v1300 = vstv %s1299
        %v1301 = vmul.f32 %v1277, %v1300
        %v1302 = vmul.f32 %v1278, %v1300
        %1305 = vrot.lane.b32.xlu0 %v1301, 126
        %v1306 = vpop.permute.xlu0 %1305
        %1307 = vrot.lane.b32.xlu0 %v1302, 126
        %v1308 = vpop.permute.xlu0 %1307
        %v1311 = vadd.f32 %v1297, %v1306
        %v1312 = vadd.f32 %v1298, %v1308
        %s1313 = sld [smem:[#allocation9 + $0x42]]
        %v1314 = vstv %s1313
        %v1315 = vmul.f32 %v1277, %v1314
        %v1316 = vmul.f32 %v1278, %v1314
        %1319 = vrot.lane.b32.xlu0 %v1315, 125
        %v1320 = vpop.permute.xlu0 %1319
        %1321 = vrot.lane.b32.xlu0 %v1316, 125
        %v1322 = vpop.permute.xlu0 %1321
        %v1325 = vadd.f32 %v1311, %v1320
        %v1326 = vadd.f32 %v1312, %v1322
        %s1327 = sld [smem:[#allocation9 + $0x43]]
        %v1328 = vstv %s1327
        %v1329 = vmul.f32 %v1277, %v1328
        %v1330 = vmul.f32 %v1278, %v1328
        %1333 = vrot.lane.b32.xlu0 %v1329, 124
        %v1334 = vpop.permute.xlu0 %1333
        %1335 = vrot.lane.b32.xlu0 %v1330, 124
        %v1336 = vpop.permute.xlu0 %1335
        %v1339 = vadd.f32 %v1325, %v1334
        %v1340 = vadd.f32 %v1326, %v1336
        %s1341 = sld [smem:[#allocation9 + $0x44]]
        %v1342 = vstv %s1341
        %v1343 = vmul.f32 %v1277, %v1342
        %v1344 = vmul.f32 %v1278, %v1342
        %1347 = vrot.lane.b32.xlu0 %v1343, 123
        %v1348 = vpop.permute.xlu0 %1347
        %1349 = vrot.lane.b32.xlu0 %v1344, 123
        %v1350 = vpop.permute.xlu0 %1349
        %v1353 = vadd.f32 %v1339, %v1348
        %v1354 = vadd.f32 %v1340, %v1350
        %s1355 = sld [smem:[#allocation9 + $0x45]]
        %v1356 = vstv %s1355
        %v1357 = vmul.f32 %v1277, %v1356
        %v1358 = vmul.f32 %v1278, %v1356
        %1361 = vrot.lane.b32.xlu0 %v1357, 122
        %v1362 = vpop.permute.xlu0 %1361
        %1363 = vrot.lane.b32.xlu0 %v1358, 122
        %v1364 = vpop.permute.xlu0 %1363
        %v1367 = vadd.f32 %v1353, %v1362
        %v1368 = vadd.f32 %v1354, %v1364
        %v1369 = vld [vmem:[%s1094 + $0x3] sm:$0xff]
        %v1370 = vld [vmem:[%s1094 + $0xb] sm:$0xff]
        %s1371 = sld [smem:[#allocation9 + $0x46]]
        %v1372 = vstv %s1371
        %v1373 = vmul.f32 %v1369, %v1372
        %v1374 = vmul.f32 %v1370, %v1372
        %v1375 = vadd.f32 %v1367, %v1373
        %v1376 = vadd.f32 %v1368, %v1374
        %s1377 = sld [smem:[#allocation9 + $0x47]]
        %v1378 = vstv %s1377
        %v1379 = vmul.f32 %v1369, %v1378
        %v1380 = vmul.f32 %v1370, %v1378
        %1383 = vrot.lane.b32.xlu0 %v1379, 127
        %v1384 = vpop.permute.xlu0 %1383
        %1385 = vrot.lane.b32.xlu0 %v1380, 127
        %v1386 = vpop.permute.xlu0 %1385
        %v1389 = vadd.f32 %v1375, %v1384
        %v1390 = vadd.f32 %v1376, %v1386
        %s1391 = sld [smem:[#allocation9 + $0x48]]
        %v1392 = vstv %s1391
        %v1393 = vmul.f32 %v1369, %v1392
        %v1394 = vmul.f32 %v1370, %v1392
        %1397 = vrot.lane.b32.xlu0 %v1393, 126
        %v1398 = vpop.permute.xlu0 %1397
        %1399 = vrot.lane.b32.xlu0 %v1394, 126
        %v1400 = vpop.permute.xlu0 %1399
        %v1403 = vadd.f32 %v1389, %v1398
        %v1404 = vadd.f32 %v1390, %v1400
        %s1405 = sld [smem:[#allocation9 + $0x49]]
        %v1406 = vstv %s1405
        %v1407 = vmul.f32 %v1369, %v1406
        %v1408 = vmul.f32 %v1370, %v1406
        %1411 = vrot.lane.b32.xlu0 %v1407, 125
        %v1412 = vpop.permute.xlu0 %1411
        %1413 = vrot.lane.b32.xlu0 %v1408, 125
        %v1414 = vpop.permute.xlu0 %1413
        %v1417 = vadd.f32 %v1403, %v1412
        %v1418 = vadd.f32 %v1404, %v1414
        %s1419 = sld [smem:[#allocation9 + $0x4a]]
        %v1420 = vstv %s1419
        %v1421 = vmul.f32 %v1369, %v1420
        %v1422 = vmul.f32 %v1370, %v1420
        %1425 = vrot.lane.b32.xlu0 %v1421, 124
        %v1426 = vpop.permute.xlu0 %1425
        %1427 = vrot.lane.b32.xlu0 %v1422, 124
        %v1428 = vpop.permute.xlu0 %1427
        %v1431 = vadd.f32 %v1417, %v1426
        %v1432 = vadd.f32 %v1418, %v1428
        %s1433 = sld [smem:[#allocation9 + $0x4b]]
        %v1434 = vstv %s1433
        %v1435 = vmul.f32 %v1369, %v1434
        %v1436 = vmul.f32 %v1370, %v1434
        %1439 = vrot.lane.b32.xlu0 %v1435, 123
        %v1440 = vpop.permute.xlu0 %1439
        %1441 = vrot.lane.b32.xlu0 %v1436, 123
        %v1442 = vpop.permute.xlu0 %1441
        %v1445 = vadd.f32 %v1431, %v1440
        %v1446 = vadd.f32 %v1432, %v1442
        %s1447 = sld [smem:[#allocation9 + $0x4c]]
        %v1448 = vstv %s1447
        %v1449 = vmul.f32 %v1369, %v1448
        %v1450 = vmul.f32 %v1370, %v1448
        %1453 = vrot.lane.b32.xlu0 %v1449, 122
        %v1454 = vpop.permute.xlu0 %1453
        %1455 = vrot.lane.b32.xlu0 %v1450, 122
        %v1456 = vpop.permute.xlu0 %1455
        %v1459 = vadd.f32 %v1445, %v1454
        %v1460 = vadd.f32 %v1446, %v1456
        %v1461 = vld [vmem:[%s1094 + $0x4] sm:$0xff]
        %v1462 = vld [vmem:[%s1094 + $0xc] sm:$0xff]
        %s1463 = sld [smem:[#allocation9 + $0x4d]]
        %v1464 = vstv %s1463
        %v1465 = vmul.f32 %v1461, %v1464
        %v1466 = vmul.f32 %v1462, %v1464
        %v1467 = vadd.f32 %v1459, %v1465
        %v1468 = vadd.f32 %v1460, %v1466
        %s1469 = sld [smem:[#allocation9 + $0x4e]]
        %v1470 = vstv %s1469
        %v1471 = vmul.f32 %v1461, %v1470
        %v1472 = vmul.f32 %v1462, %v1470
        %1475 = vrot.lane.b32.xlu0 %v1471, 127
        %v1476 = vpop.permute.xlu0 %1475
        %1477 = vrot.lane.b32.xlu0 %v1472, 127
        %v1478 = vpop.permute.xlu0 %1477
        %v1481 = vadd.f32 %v1467, %v1476
        %v1482 = vadd.f32 %v1468, %v1478
        %s1483 = sld [smem:[#allocation9 + $0x4f]]
        %v1484 = vstv %s1483
        %v1485 = vmul.f32 %v1461, %v1484
        %v1486 = vmul.f32 %v1462, %v1484
        %1489 = vrot.lane.b32.xlu0 %v1485, 126
        %v1490 = vpop.permute.xlu0 %1489
        %1491 = vrot.lane.b32.xlu0 %v1486, 126
        %v1492 = vpop.permute.xlu0 %1491
        %v1495 = vadd.f32 %v1481, %v1490
        %v1496 = vadd.f32 %v1482, %v1492
        %s1497 = sld [smem:[#allocation9 + $0x50]]
        %v1498 = vstv %s1497
        %v1499 = vmul.f32 %v1461, %v1498
        %v1500 = vmul.f32 %v1462, %v1498
        %1503 = vrot.lane.b32.xlu0 %v1499, 125
        %v1504 = vpop.permute.xlu0 %1503
        %1505 = vrot.lane.b32.xlu0 %v1500, 125
        %v1506 = vpop.permute.xlu0 %1505
        %v1509 = vadd.f32 %v1495, %v1504
        %v1510 = vadd.f32 %v1496, %v1506
        %s1511 = sld [smem:[#allocation9 + $0x51]]
        %v1512 = vstv %s1511
        %v1513 = vmul.f32 %v1461, %v1512
        %v1514 = vmul.f32 %v1462, %v1512
        %1517 = vrot.lane.b32.xlu0 %v1513, 124
        %v1518 = vpop.permute.xlu0 %1517
        %1519 = vrot.lane.b32.xlu0 %v1514, 124
        %v1520 = vpop.permute.xlu0 %1519
        %v1523 = vadd.f32 %v1509, %v1518
        %v1524 = vadd.f32 %v1510, %v1520
        %s1525 = sld [smem:[#allocation9 + $0x52]]
        %v1526 = vstv %s1525
        %v1527 = vmul.f32 %v1461, %v1526
        %v1528 = vmul.f32 %v1462, %v1526
        %1531 = vrot.lane.b32.xlu0 %v1527, 123
        %v1532 = vpop.permute.xlu0 %1531
        %1533 = vrot.lane.b32.xlu0 %v1528, 123
        %v1534 = vpop.permute.xlu0 %1533
        %v1537 = vadd.f32 %v1523, %v1532
        %v1538 = vadd.f32 %v1524, %v1534
        %s1539 = sld [smem:[#allocation9 + $0x53]]
        %v1540 = vstv %s1539
        %v1541 = vmul.f32 %v1461, %v1540
        %v1542 = vmul.f32 %v1462, %v1540
        %1545 = vrot.lane.b32.xlu0 %v1541, 122
        %v1546 = vpop.permute.xlu0 %1545
        %1547 = vrot.lane.b32.xlu0 %v1542, 122
        %v1548 = vpop.permute.xlu0 %1547
        %v1551 = vadd.f32 %v1537, %v1546
        %v1552 = vadd.f32 %v1538, %v1548
        %v1553 = vld [vmem:[%s1094 + $0x5] sm:$0xff]
        %v1554 = vld [vmem:[%s1094 + $0xd] sm:$0xff]
        %s1555 = sld [smem:[#allocation9 + $0x54]]
        %v1556 = vstv %s1555
        %v1557 = vmul.f32 %v1553, %v1556
        %v1558 = vmul.f32 %v1554, %v1556
        %v1559 = vadd.f32 %v1551, %v1557
        %v1560 = vadd.f32 %v1552, %v1558
        %s1561 = sld [smem:[#allocation9 + $0x55]]
        %v1562 = vstv %s1561
        %v1563 = vmul.f32 %v1553, %v1562
        %v1564 = vmul.f32 %v1554, %v1562
        %1567 = vrot.lane.b32.xlu0 %v1563, 127
        %v1568 = vpop.permute.xlu0 %1567
        %1569 = vrot.lane.b32.xlu0 %v1564, 127
        %v1570 = vpop.permute.xlu0 %1569
        %v1573 = vadd.f32 %v1559, %v1568
        %v1574 = vadd.f32 %v1560, %v1570
        %s1575 = sld [smem:[#allocation9 + $0x56]]
        %v1576 = vstv %s1575
        %v1577 = vmul.f32 %v1553, %v1576
        %v1578 = vmul.f32 %v1554, %v1576
        %1581 = vrot.lane.b32.xlu0 %v1577, 126
        %v1582 = vpop.permute.xlu0 %1581
        %1583 = vrot.lane.b32.xlu0 %v1578, 126
        %v1584 = vpop.permute.xlu0 %1583
        %v1587 = vadd.f32 %v1573, %v1582
        %v1588 = vadd.f32 %v1574, %v1584
        %s1589 = sld [smem:[#allocation9 + $0x57]]
        %v1590 = vstv %s1589
        %v1591 = vmul.f32 %v1553, %v1590
        %v1592 = vmul.f32 %v1554, %v1590
        %1595 = vrot.lane.b32.xlu0 %v1591, 125
        %v1596 = vpop.permute.xlu0 %1595
        %1597 = vrot.lane.b32.xlu0 %v1592, 125
        %v1598 = vpop.permute.xlu0 %1597
        %v1601 = vadd.f32 %v1587, %v1596
        %v1602 = vadd.f32 %v1588, %v1598
        %s1603 = sld [smem:[#allocation9 + $0x58]]
        %v1604 = vstv %s1603
        %v1605 = vmul.f32 %v1553, %v1604
        %v1606 = vmul.f32 %v1554, %v1604
        %1609 = vrot.lane.b32.xlu0 %v1605, 124
        %v1610 = vpop.permute.xlu0 %1609
        %1611 = vrot.lane.b32.xlu0 %v1606, 124
        %v1612 = vpop.permute.xlu0 %1611
        %v1615 = vadd.f32 %v1601, %v1610
        %v1616 = vadd.f32 %v1602, %v1612
        %s1617 = sld [smem:[#allocation9 + $0x59]]
        %v1618 = vstv %s1617
        %v1619 = vmul.f32 %v1553, %v1618
        %v1620 = vmul.f32 %v1554, %v1618
        %1623 = vrot.lane.b32.xlu0 %v1619, 123
        %v1624 = vpop.permute.xlu0 %1623
        %1625 = vrot.lane.b32.xlu0 %v1620, 123
        %v1626 = vpop.permute.xlu0 %1625
        %v1629 = vadd.f32 %v1615, %v1624
        %v1630 = vadd.f32 %v1616, %v1626
        %s1631 = sld [smem:[#allocation9 + $0x5a]]
        %v1632 = vstv %s1631
        %v1633 = vmul.f32 %v1553, %v1632
        %v1634 = vmul.f32 %v1554, %v1632
        %1637 = vrot.lane.b32.xlu0 %v1633, 122
        %v1638 = vpop.permute.xlu0 %1637
        %1639 = vrot.lane.b32.xlu0 %v1634, 122
        %v1640 = vpop.permute.xlu0 %1639
        %v1643 = vadd.f32 %v1629, %v1638
        %v1644 = vadd.f32 %v1630, %v1640
        %v1645 = vld [vmem:[%s1094 + $0x6] sm:$0xff]
        %v1646 = vld [vmem:[%s1094 + $0xe] sm:$0xff]
        %s1647 = sld [smem:[#allocation9 + $0x5b]]
        %v1648 = vstv %s1647
        %v1649 = vmul.f32 %v1645, %v1648
        %v1650 = vmul.f32 %v1646, %v1648
        %v1651 = vadd.f32 %v1643, %v1649
        %v1652 = vadd.f32 %v1644, %v1650
        %s1653 = sld [smem:[#allocation9 + $0x5c]]
        %v1654 = vstv %s1653
        %v1655 = vmul.f32 %v1645, %v1654
        %v1656 = vmul.f32 %v1646, %v1654
        %1659 = vrot.lane.b32.xlu0 %v1655, 127
        %v1660 = vpop.permute.xlu0 %1659
        %1661 = vrot.lane.b32.xlu0 %v1656, 127
        %v1662 = vpop.permute.xlu0 %1661
        %v1665 = vadd.f32 %v1651, %v1660
        %v1666 = vadd.f32 %v1652, %v1662
        %s1667 = sld [smem:[#allocation9 + $0x5d]]
        %v1668 = vstv %s1667
        %v1669 = vmul.f32 %v1645, %v1668
        %v1670 = vmul.f32 %v1646, %v1668
        %1673 = vrot.lane.b32.xlu0 %v1669, 126
        %v1674 = vpop.permute.xlu0 %1673
        %1675 = vrot.lane.b32.xlu0 %v1670, 126
        %v1676 = vpop.permute.xlu0 %1675
        %v1679 = vadd.f32 %v1665, %v1674
        %v1680 = vadd.f32 %v1666, %v1676
        %s1681 = sld [smem:[#allocation9 + $0x5e]]
        %v1682 = vstv %s1681
        %v1683 = vmul.f32 %v1645, %v1682
        %v1684 = vmul.f32 %v1646, %v1682
        %1687 = vrot.lane.b32.xlu0 %v1683, 125
        %v1688 = vpop.permute.xlu0 %1687
        %1689 = vrot.lane.b32.xlu0 %v1684, 125
        %v1690 = vpop.permute.xlu0 %1689
        %v1693 = vadd.f32 %v1679, %v1688
        %v1694 = vadd.f32 %v1680, %v1690
        %s1695 = sld [smem:[#allocation9 + $0x5f]]
        %v1696 = vstv %s1695
        %v1697 = vmul.f32 %v1645, %v1696
        %v1698 = vmul.f32 %v1646, %v1696
        %1701 = vrot.lane.b32.xlu0 %v1697, 124
        %v1702 = vpop.permute.xlu0 %1701
        %1703 = vrot.lane.b32.xlu0 %v1698, 124
        %v1704 = vpop.permute.xlu0 %1703
        %v1707 = vadd.f32 %v1693, %v1702
        %v1708 = vadd.f32 %v1694, %v1704
        %s1709 = sld [smem:[#allocation9 + $0x60]]
        %v1710 = vstv %s1709
        %v1711 = vmul.f32 %v1645, %v1710
        %v1712 = vmul.f32 %v1646, %v1710
        %1715 = vrot.lane.b32.xlu0 %v1711, 123
        %v1716 = vpop.permute.xlu0 %1715
        %1717 = vrot.lane.b32.xlu0 %v1712, 123
        %v1718 = vpop.permute.xlu0 %1717
        %v1721 = vadd.f32 %v1707, %v1716
        %v1722 = vadd.f32 %v1708, %v1718
        %s1723 = sld [smem:[#allocation9 + $0x61]]
        %v1724 = vstv %s1723
        %v1725 = vmul.f32 %v1645, %v1724
        %v1726 = vmul.f32 %v1646, %v1724
        %1729 = vrot.lane.b32.xlu0 %v1725, 122
        %v1730 = vpop.permute.xlu0 %1729
        %1731 = vrot.lane.b32.xlu0 %v1726, 122
        %v1732 = vpop.permute.xlu0 %1731
        %v1735 = vadd.f32 %v1721, %v1730
        %v1736 = vadd.f32 %v1722, %v1732
        %s1737 = sld [smem:[#allocation10 + $0x1]]
        %v1738 = vstv %s1737
        %v1739 = vmul.f32 %v1735, %v1738
        %v1740 = vmul.f32 %v1736, %v1738
        %s1741 = sld [smem:[#allocation11 + $0x1]]
        %v1742 = vstv %s1741
        %v1743 = vadd.f32 %v1739, %v1742
        %v1744 = vadd.f32 %v1740, %v1742
        %v1745 = vmax.f32 %v1743, 0.0
        %v1746 = vmax.f32 %v1744, 0.0
        %s1747 = scalar_lea.vmem [#allocation3], 16
        %1748 = vst.msk [vmem:[%s1747] sm:$0xff] %vm1091, %v1745
        %1749 = vst.msk [vmem:[%s1747 + $0x8] sm:$0xff] %vm1091, %v1746
        %s1750 = scalar_lea.vmem [#allocation2], 48
        %v1751 = vld [vmem:[%s1750] sm:$0xff]
        %v1752 = vld [vmem:[%s1750 + $0x8] sm:$0xff]
        %s1753 = sld [smem:[#allocation9 + $0x62]]
        %v1754 = vstv %s1753
        %v1755 = vmul.f32 %v1751, %v1754
        %v1756 = vmul.f32 %v1752, %v1754
        %s1757 = sld [smem:[#allocation9 + $0x63]]
        %v1758 = vstv %s1757
        %v1759 = vmul.f32 %v1751, %v1758
        %v1760 = vmul.f32 %v1752, %v1758
        %1763 = vrot.lane.b32.xlu0 %v1759, 127
        %v1764 = vpop.permute.xlu0 %1763
        %1765 = vrot.lane.b32.xlu0 %v1760, 127
        %v1766 = vpop.permute.xlu0 %1765
        %v1769 = vadd.f32 %v1755, %v1764
        %v1770 = vadd.f32 %v1756, %v1766
        %s1771 = sld [smem:[#allocation9 + $0x64]]
        %v1772 = vstv %s1771
        %v1773 = vmul.f32 %v1751, %v1772
        %v1774 = vmul.f32 %v1752, %v1772
        %1777 = vrot.lane.b32.xlu0 %v1773, 126
        %v1778 = vpop.permute.xlu0 %1777
        %1779 = vrot.lane.b32.xlu0 %v1774, 126
        %v1780 = vpop.permute.xlu0 %1779
        %v1783 = vadd.f32 %v1769, %v1778
        %v1784 = vadd.f32 %v1770, %v1780
        %s1785 = sld [smem:[#allocation9 + $0x65]]
        %v1786 = vstv %s1785
        %v1787 = vmul.f32 %v1751, %v1786
        %v1788 = vmul.f32 %v1752, %v1786
        %1791 = vrot.lane.b32.xlu0 %v1787, 125
        %v1792 = vpop.permute.xlu0 %1791
        %1793 = vrot.lane.b32.xlu0 %v1788, 125
        %v1794 = vpop.permute.xlu0 %1793
        %v1797 = vadd.f32 %v1783, %v1792
        %v1798 = vadd.f32 %v1784, %v1794
        %s1799 = sld [smem:[#allocation9 + $0x66]]
        %v1800 = vstv %s1799
        %v1801 = vmul.f32 %v1751, %v1800
        %v1802 = vmul.f32 %v1752, %v1800
        %1805 = vrot.lane.b32.xlu0 %v1801, 124
        %v1806 = vpop.permute.xlu0 %1805
        %1807 = vrot.lane.b32.xlu0 %v1802, 124
        %v1808 = vpop.permute.xlu0 %1807
        %v1811 = vadd.f32 %v1797, %v1806
        %v1812 = vadd.f32 %v1798, %v1808
        %s1813 = sld [smem:[#allocation9 + $0x67]]
        %v1814 = vstv %s1813
        %v1815 = vmul.f32 %v1751, %v1814
        %v1816 = vmul.f32 %v1752, %v1814
        %1819 = vrot.lane.b32.xlu0 %v1815, 123
        %v1820 = vpop.permute.xlu0 %1819
        %1821 = vrot.lane.b32.xlu0 %v1816, 123
        %v1822 = vpop.permute.xlu0 %1821
        %v1825 = vadd.f32 %v1811, %v1820
        %v1826 = vadd.f32 %v1812, %v1822
        %s1827 = sld [smem:[#allocation9 + $0x68]]
        %v1828 = vstv %s1827
        %v1829 = vmul.f32 %v1751, %v1828
        %v1830 = vmul.f32 %v1752, %v1828
        %1833 = vrot.lane.b32.xlu0 %v1829, 122
        %v1834 = vpop.permute.xlu0 %1833
        %1835 = vrot.lane.b32.xlu0 %v1830, 122
        %v1836 = vpop.permute.xlu0 %1835
        %v1839 = vadd.f32 %v1825, %v1834
        %v1840 = vadd.f32 %v1826, %v1836
        %v1841 = vld [vmem:[%s1750 + $0x1] sm:$0xff]
        %v1842 = vld [vmem:[%s1750 + $0x9] sm:$0xff]
        %s1843 = sld [smem:[#allocation9 + $0x69]]
        %v1844 = vstv %s1843
        %v1845 = vmul.f32 %v1841, %v1844
        %v1846 = vmul.f32 %v1842, %v1844
        %v1847 = vadd.f32 %v1839, %v1845
        %v1848 = vadd.f32 %v1840, %v1846
        %s1849 = sld [smem:[#allocation9 + $0x6a]]
        %v1850 = vstv %s1849
        %v1851 = vmul.f32 %v1841, %v1850
        %v1852 = vmul.f32 %v1842, %v1850
        %1855 = vrot.lane.b32.xlu0 %v1851, 127
        %v1856 = vpop.permute.xlu0 %1855
        %1857 = vrot.lane.b32.xlu0 %v1852, 127
        %v1858 = vpop.permute.xlu0 %1857
        %v1861 = vadd.f32 %v1847, %v1856
        %v1862 = vadd.f32 %v1848, %v1858
        %s1863 = sld [smem:[#allocation9 + $0x6b]]
        %v1864 = vstv %s1863
        %v1865 = vmul.f32 %v1841, %v1864
        %v1866 = vmul.f32 %v1842, %v1864
        %1869 = vrot.lane.b32.xlu0 %v1865, 126
        %v1870 = vpop.permute.xlu0 %1869
        %1871 = vrot.lane.b32.xlu0 %v1866, 126
        %v1872 = vpop.permute.xlu0 %1871
        %v1875 = vadd.f32 %v1861, %v1870
        %v1876 = vadd.f32 %v1862, %v1872
        %s1877 = sld [smem:[#allocation9 + $0x6c]]
        %v1878 = vstv %s1877
        %v1879 = vmul.f32 %v1841, %v1878
        %v1880 = vmul.f32 %v1842, %v1878
        %1883 = vrot.lane.b32.xlu0 %v1879, 125
        %v1884 = vpop.permute.xlu0 %1883
        %1885 = vrot.lane.b32.xlu0 %v1880, 125
        %v1886 = vpop.permute.xlu0 %1885
        %v1889 = vadd.f32 %v1875, %v1884
        %v1890 = vadd.f32 %v1876, %v1886
        %s1891 = sld [smem:[#allocation9 + $0x6d]]
        %v1892 = vstv %s1891
        %v1893 = vmul.f32 %v1841, %v1892
        %v1894 = vmul.f32 %v1842, %v1892
        %1897 = vrot.lane.b32.xlu0 %v1893, 124
        %v1898 = vpop.permute.xlu0 %1897
        %1899 = vrot.lane.b32.xlu0 %v1894, 124
        %v1900 = vpop.permute.xlu0 %1899
        %v1903 = vadd.f32 %v1889, %v1898
        %v1904 = vadd.f32 %v1890, %v1900
        %s1905 = sld [smem:[#allocation9 + $0x6e]]
        %v1906 = vstv %s1905
        %v1907 = vmul.f32 %v1841, %v1906
        %v1908 = vmul.f32 %v1842, %v1906
        %1911 = vrot.lane.b32.xlu0 %v1907, 123
        %v1912 = vpop.permute.xlu0 %1911
        %1913 = vrot.lane.b32.xlu0 %v1908, 123
        %v1914 = vpop.permute.xlu0 %1913
        %v1917 = vadd.f32 %v1903, %v1912
        %v1918 = vadd.f32 %v1904, %v1914
        %s1919 = sld [smem:[#allocation9 + $0x6f]]
        %v1920 = vstv %s1919
        %v1921 = vmul.f32 %v1841, %v1920
        %v1922 = vmul.f32 %v1842, %v1920
        %1925 = vrot.lane.b32.xlu0 %v1921, 122
        %v1926 = vpop.permute.xlu0 %1925
        %1927 = vrot.lane.b32.xlu0 %v1922, 122
        %v1928 = vpop.permute.xlu0 %1927
        %v1931 = vadd.f32 %v1917, %v1926
        %v1932 = vadd.f32 %v1918, %v1928
        %v1933 = vld [vmem:[%s1750 + $0x2] sm:$0xff]
        %v1934 = vld [vmem:[%s1750 + $0xa] sm:$0xff]
        %s1935 = sld [smem:[#allocation9 + $0x70]]
        %v1936 = vstv %s1935
        %v1937 = vmul.f32 %v1933, %v1936
        %v1938 = vmul.f32 %v1934, %v1936
        %v1939 = vadd.f32 %v1931, %v1937
        %v1940 = vadd.f32 %v1932, %v1938
        %s1941 = sld [smem:[#allocation9 + $0x71]]
        %v1942 = vstv %s1941
        %v1943 = vmul.f32 %v1933, %v1942
        %v1944 = vmul.f32 %v1934, %v1942
        %1947 = vrot.lane.b32.xlu0 %v1943, 127
        %v1948 = vpop.permute.xlu0 %1947
        %1949 = vrot.lane.b32.xlu0 %v1944, 127
        %v1950 = vpop.permute.xlu0 %1949
        %v1953 = vadd.f32 %v1939, %v1948
        %v1954 = vadd.f32 %v1940, %v1950
        %s1955 = sld [smem:[#allocation9 + $0x72]]
        %v1956 = vstv %s1955
        %v1957 = vmul.f32 %v1933, %v1956
        %v1958 = vmul.f32 %v1934, %v1956
        %1961 = vrot.lane.b32.xlu0 %v1957, 126
        %v1962 = vpop.permute.xlu0 %1961
        %1963 = vrot.lane.b32.xlu0 %v1958, 126
        %v1964 = vpop.permute.xlu0 %1963
        %v1967 = vadd.f32 %v1953, %v1962
        %v1968 = vadd.f32 %v1954, %v1964
        %s1969 = sld [smem:[#allocation9 + $0x73]]
        %v1970 = vstv %s1969
        %v1971 = vmul.f32 %v1933, %v1970
        %v1972 = vmul.f32 %v1934, %v1970
        %1975 = vrot.lane.b32.xlu0 %v1971, 125
        %v1976 = vpop.permute.xlu0 %1975
        %1977 = vrot.lane.b32.xlu0 %v1972, 125
        %v1978 = vpop.permute.xlu0 %1977
        %v1981 = vadd.f32 %v1967, %v1976
        %v1982 = vadd.f32 %v1968, %v1978
        %s1983 = sld [smem:[#allocation9 + $0x74]]
        %v1984 = vstv %s1983
        %v1985 = vmul.f32 %v1933, %v1984
        %v1986 = vmul.f32 %v1934, %v1984
        %1989 = vrot.lane.b32.xlu0 %v1985, 124
        %v1990 = vpop.permute.xlu0 %1989
        %1991 = vrot.lane.b32.xlu0 %v1986, 124
        %v1992 = vpop.permute.xlu0 %1991
        %v1995 = vadd.f32 %v1981, %v1990
        %v1996 = vadd.f32 %v1982, %v1992
        %s1997 = sld [smem:[#allocation9 + $0x75]]
        %v1998 = vstv %s1997
        %v1999 = vmul.f32 %v1933, %v1998
        %v2000 = vmul.f32 %v1934, %v1998
        %2003 = vrot.lane.b32.xlu0 %v1999, 123
        %v2004 = vpop.permute.xlu0 %2003
        %2005 = vrot.lane.b32.xlu0 %v2000, 123
        %v2006 = vpop.permute.xlu0 %2005
        %v2009 = vadd.f32 %v1995, %v2004
        %v2010 = vadd.f32 %v1996, %v2006
        %s2011 = sld [smem:[#allocation9 + $0x76]]
        %v2012 = vstv %s2011
        %v2013 = vmul.f32 %v1933, %v2012
        %v2014 = vmul.f32 %v1934, %v2012
        %2017 = vrot.lane.b32.xlu0 %v2013, 122
        %v2018 = vpop.permute.xlu0 %2017
        %2019 = vrot.lane.b32.xlu0 %v2014, 122
        %v2020 = vpop.permute.xlu0 %2019
        %v2023 = vadd.f32 %v2009, %v2018
        %v2024 = vadd.f32 %v2010, %v2020
        %v2025 = vld [vmem:[%s1750 + $0x3] sm:$0xff]
        %v2026 = vld [vmem:[%s1750 + $0xb] sm:$0xff]
        %s2027 = sld [smem:[#allocation9 + $0x77]]
        %v2028 = vstv %s2027
        %v2029 = vmul.f32 %v2025, %v2028
        %v2030 = vmul.f32 %v2026, %v2028
        %v2031 = vadd.f32 %v2023, %v2029
        %v2032 = vadd.f32 %v2024, %v2030
        %s2033 = sld [smem:[#allocation9 + $0x78]]
        %v2034 = vstv %s2033
        %v2035 = vmul.f32 %v2025, %v2034
        %v2036 = vmul.f32 %v2026, %v2034
        %2039 = vrot.lane.b32.xlu0 %v2035, 127
        %v2040 = vpop.permute.xlu0 %2039
        %2041 = vrot.lane.b32.xlu0 %v2036, 127
        %v2042 = vpop.permute.xlu0 %2041
        %v2045 = vadd.f32 %v2031, %v2040
        %v2046 = vadd.f32 %v2032, %v2042
        %s2047 = sld [smem:[#allocation9 + $0x79]]
        %v2048 = vstv %s2047
        %v2049 = vmul.f32 %v2025, %v2048
        %v2050 = vmul.f32 %v2026, %v2048
        %2053 = vrot.lane.b32.xlu0 %v2049, 126
        %v2054 = vpop.permute.xlu0 %2053
        %2055 = vrot.lane.b32.xlu0 %v2050, 126
        %v2056 = vpop.permute.xlu0 %2055
        %v2059 = vadd.f32 %v2045, %v2054
        %v2060 = vadd.f32 %v2046, %v2056
        %s2061 = sld [smem:[#allocation9 + $0x7a]]
        %v2062 = vstv %s2061
        %v2063 = vmul.f32 %v2025, %v2062
        %v2064 = vmul.f32 %v2026, %v2062
        %2067 = vrot.lane.b32.xlu0 %v2063, 125
        %v2068 = vpop.permute.xlu0 %2067
        %2069 = vrot.lane.b32.xlu0 %v2064, 125
        %v2070 = vpop.permute.xlu0 %2069
        %v2073 = vadd.f32 %v2059, %v2068
        %v2074 = vadd.f32 %v2060, %v2070
        %s2075 = sld [smem:[#allocation9 + $0x7b]]
        %v2076 = vstv %s2075
        %v2077 = vmul.f32 %v2025, %v2076
        %v2078 = vmul.f32 %v2026, %v2076
        %2081 = vrot.lane.b32.xlu0 %v2077, 124
        %v2082 = vpop.permute.xlu0 %2081
        %2083 = vrot.lane.b32.xlu0 %v2078, 124
        %v2084 = vpop.permute.xlu0 %2083
        %v2087 = vadd.f32 %v2073, %v2082
        %v2088 = vadd.f32 %v2074, %v2084
        %s2089 = sld [smem:[#allocation9 + $0x7c]]
        %v2090 = vstv %s2089
        %v2091 = vmul.f32 %v2025, %v2090
        %v2092 = vmul.f32 %v2026, %v2090
        %2095 = vrot.lane.b32.xlu0 %v2091, 123
        %v2096 = vpop.permute.xlu0 %2095
        %2097 = vrot.lane.b32.xlu0 %v2092, 123
        %v2098 = vpop.permute.xlu0 %2097
        %v2101 = vadd.f32 %v2087, %v2096
        %v2102 = vadd.f32 %v2088, %v2098
        %s2103 = sld [smem:[#allocation9 + $0x7d]]
        %v2104 = vstv %s2103
        %v2105 = vmul.f32 %v2025, %v2104
        %v2106 = vmul.f32 %v2026, %v2104
        %2109 = vrot.lane.b32.xlu0 %v2105, 122
        %v2110 = vpop.permute.xlu0 %2109
        %2111 = vrot.lane.b32.xlu0 %v2106, 122
        %v2112 = vpop.permute.xlu0 %2111
        %v2115 = vadd.f32 %v2101, %v2110
        %v2116 = vadd.f32 %v2102, %v2112
        %v2117 = vld [vmem:[%s1750 + $0x4] sm:$0xff]
        %v2118 = vld [vmem:[%s1750 + $0xc] sm:$0xff]
        %s2119 = sld [smem:[#allocation9 + $0x7e]]
        %v2120 = vstv %s2119
        %v2121 = vmul.f32 %v2117, %v2120
        %v2122 = vmul.f32 %v2118, %v2120
        %v2123 = vadd.f32 %v2115, %v2121
        %v2124 = vadd.f32 %v2116, %v2122
        %s2125 = sld [smem:[#allocation9 + $0x7f]]
        %v2126 = vstv %s2125
        %v2127 = vmul.f32 %v2117, %v2126
        %v2128 = vmul.f32 %v2118, %v2126
        %2131 = vrot.lane.b32.xlu0 %v2127, 127
        %v2132 = vpop.permute.xlu0 %2131
        %2133 = vrot.lane.b32.xlu0 %v2128, 127
        %v2134 = vpop.permute.xlu0 %2133
        %v2137 = vadd.f32 %v2123, %v2132
        %v2138 = vadd.f32 %v2124, %v2134
        %s2139 = sld [smem:[#allocation9 + $0x80]]
        %v2140 = vstv %s2139
        %v2141 = vmul.f32 %v2117, %v2140
        %v2142 = vmul.f32 %v2118, %v2140
        %2145 = vrot.lane.b32.xlu0 %v2141, 126
        %v2146 = vpop.permute.xlu0 %2145
        %2147 = vrot.lane.b32.xlu0 %v2142, 126
        %v2148 = vpop.permute.xlu0 %2147
        %v2151 = vadd.f32 %v2137, %v2146
        %v2152 = vadd.f32 %v2138, %v2148
        %s2153 = sld [smem:[#allocation9 + $0x81]]
        %v2154 = vstv %s2153
        %v2155 = vmul.f32 %v2117, %v2154
        %v2156 = vmul.f32 %v2118, %v2154
        %2159 = vrot.lane.b32.xlu0 %v2155, 125
        %v2160 = vpop.permute.xlu0 %2159
        %2161 = vrot.lane.b32.xlu0 %v2156, 125
        %v2162 = vpop.permute.xlu0 %2161
        %v2165 = vadd.f32 %v2151, %v2160
        %v2166 = vadd.f32 %v2152, %v2162
        %s2167 = sld [smem:[#allocation9 + $0x82]]
        %v2168 = vstv %s2167
        %v2169 = vmul.f32 %v2117, %v2168
        %v2170 = vmul.f32 %v2118, %v2168
        %2173 = vrot.lane.b32.xlu0 %v2169, 124
        %v2174 = vpop.permute.xlu0 %2173
        %2175 = vrot.lane.b32.xlu0 %v2170, 124
        %v2176 = vpop.permute.xlu0 %2175
        %v2179 = vadd.f32 %v2165, %v2174
        %v2180 = vadd.f32 %v2166, %v2176
        %s2181 = sld [smem:[#allocation9 + $0x83]]
        %v2182 = vstv %s2181
        %v2183 = vmul.f32 %v2117, %v2182
        %v2184 = vmul.f32 %v2118, %v2182
        %2187 = vrot.lane.b32.xlu0 %v2183, 123
        %v2188 = vpop.permute.xlu0 %2187
        %2189 = vrot.lane.b32.xlu0 %v2184, 123
        %v2190 = vpop.permute.xlu0 %2189
        %v2193 = vadd.f32 %v2179, %v2188
        %v2194 = vadd.f32 %v2180, %v2190
        %s2195 = sld [smem:[#allocation9 + $0x84]]
        %v2196 = vstv %s2195
        %v2197 = vmul.f32 %v2117, %v2196
        %v2198 = vmul.f32 %v2118, %v2196
        %2201 = vrot.lane.b32.xlu0 %v2197, 122
        %v2202 = vpop.permute.xlu0 %2201
        %2203 = vrot.lane.b32.xlu0 %v2198, 122
        %v2204 = vpop.permute.xlu0 %2203
        %v2207 = vadd.f32 %v2193, %v2202
        %v2208 = vadd.f32 %v2194, %v2204
        %v2209 = vld [vmem:[%s1750 + $0x5] sm:$0xff]
        %v2210 = vld [vmem:[%s1750 + $0xd] sm:$0xff]
        %s2211 = sld [smem:[#allocation9 + $0x85]]
        %v2212 = vstv %s2211
        %v2213 = vmul.f32 %v2209, %v2212
        %v2214 = vmul.f32 %v2210, %v2212
        %v2215 = vadd.f32 %v2207, %v2213
        %v2216 = vadd.f32 %v2208, %v2214
        %s2217 = sld [smem:[#allocation9 + $0x86]]
        %v2218 = vstv %s2217
        %v2219 = vmul.f32 %v2209, %v2218
        %v2220 = vmul.f32 %v2210, %v2218
        %2223 = vrot.lane.b32.xlu0 %v2219, 127
        %v2224 = vpop.permute.xlu0 %2223
        %2225 = vrot.lane.b32.xlu0 %v2220, 127
        %v2226 = vpop.permute.xlu0 %2225
        %v2229 = vadd.f32 %v2215, %v2224
        %v2230 = vadd.f32 %v2216, %v2226
        %s2231 = sld [smem:[#allocation9 + $0x87]]
        %v2232 = vstv %s2231
        %v2233 = vmul.f32 %v2209, %v2232
        %v2234 = vmul.f32 %v2210, %v2232
        %2237 = vrot.lane.b32.xlu0 %v2233, 126
        %v2238 = vpop.permute.xlu0 %2237
        %2239 = vrot.lane.b32.xlu0 %v2234, 126
        %v2240 = vpop.permute.xlu0 %2239
        %v2243 = vadd.f32 %v2229, %v2238
        %v2244 = vadd.f32 %v2230, %v2240
        %s2245 = sld [smem:[#allocation9 + $0x88]]
        %v2246 = vstv %s2245
        %v2247 = vmul.f32 %v2209, %v2246
        %v2248 = vmul.f32 %v2210, %v2246
        %2251 = vrot.lane.b32.xlu0 %v2247, 125
        %v2252 = vpop.permute.xlu0 %2251
        %2253 = vrot.lane.b32.xlu0 %v2248, 125
        %v2254 = vpop.permute.xlu0 %2253
        %v2257 = vadd.f32 %v2243, %v2252
        %v2258 = vadd.f32 %v2244, %v2254
        %s2259 = sld [smem:[#allocation9 + $0x89]]
        %v2260 = vstv %s2259
        %v2261 = vmul.f32 %v2209, %v2260
        %v2262 = vmul.f32 %v2210, %v2260
        %2265 = vrot.lane.b32.xlu0 %v2261, 124
        %v2266 = vpop.permute.xlu0 %2265
        %2267 = vrot.lane.b32.xlu0 %v2262, 124
        %v2268 = vpop.permute.xlu0 %2267
        %v2271 = vadd.f32 %v2257, %v2266
        %v2272 = vadd.f32 %v2258, %v2268
        %s2273 = sld [smem:[#allocation9 + $0x8a]]
        %v2274 = vstv %s2273
        %v2275 = vmul.f32 %v2209, %v2274
        %v2276 = vmul.f32 %v2210, %v2274
        %2279 = vrot.lane.b32.xlu0 %v2275, 123
        %v2280 = vpop.permute.xlu0 %2279
        %2281 = vrot.lane.b32.xlu0 %v2276, 123
        %v2282 = vpop.permute.xlu0 %2281
        %v2285 = vadd.f32 %v2271, %v2280
        %v2286 = vadd.f32 %v2272, %v2282
        %s2287 = sld [smem:[#allocation9 + $0x8b]]
        %v2288 = vstv %s2287
        %v2289 = vmul.f32 %v2209, %v2288
        %v2290 = vmul.f32 %v2210, %v2288
        %2293 = vrot.lane.b32.xlu0 %v2289, 122
        %v2294 = vpop.permute.xlu0 %2293
        %2295 = vrot.lane.b32.xlu0 %v2290, 122
        %v2296 = vpop.permute.xlu0 %2295
        %v2299 = vadd.f32 %v2285, %v2294
        %v2300 = vadd.f32 %v2286, %v2296
        %v2301 = vld [vmem:[%s1750 + $0x6] sm:$0xff]
        %v2302 = vld [vmem:[%s1750 + $0xe] sm:$0xff]
        %s2303 = sld [smem:[#allocation9 + $0x8c]]
        %v2304 = vstv %s2303
        %v2305 = vmul.f32 %v2301, %v2304
        %v2306 = vmul.f32 %v2302, %v2304
        %v2307 = vadd.f32 %v2299, %v2305
        %v2308 = vadd.f32 %v2300, %v2306
        %s2309 = sld [smem:[#allocation9 + $0x8d]]
        %v2310 = vstv %s2309
        %v2311 = vmul.f32 %v2301, %v2310
        %v2312 = vmul.f32 %v2302, %v2310
        %2315 = vrot.lane.b32.xlu0 %v2311, 127
        %v2316 = vpop.permute.xlu0 %2315
        %2317 = vrot.lane.b32.xlu0 %v2312, 127
        %v2318 = vpop.permute.xlu0 %2317
        %v2321 = vadd.f32 %v2307, %v2316
        %v2322 = vadd.f32 %v2308, %v2318
        %s2323 = sld [smem:[#allocation9 + $0x8e]]
        %v2324 = vstv %s2323
        %v2325 = vmul.f32 %v2301, %v2324
        %v2326 = vmul.f32 %v2302, %v2324
        %2329 = vrot.lane.b32.xlu0 %v2325, 126
        %v2330 = vpop.permute.xlu0 %2329
        %2331 = vrot.lane.b32.xlu0 %v2326, 126
        %v2332 = vpop.permute.xlu0 %2331
        %v2335 = vadd.f32 %v2321, %v2330
        %v2336 = vadd.f32 %v2322, %v2332
        %s2337 = sld [smem:[#allocation9 + $0x8f]]
        %v2338 = vstv %s2337
        %v2339 = vmul.f32 %v2301, %v2338
        %v2340 = vmul.f32 %v2302, %v2338
        %2343 = vrot.lane.b32.xlu0 %v2339, 125
        %v2344 = vpop.permute.xlu0 %2343
        %2345 = vrot.lane.b32.xlu0 %v2340, 125
        %v2346 = vpop.permute.xlu0 %2345
        %v2349 = vadd.f32 %v2335, %v2344
        %v2350 = vadd.f32 %v2336, %v2346
        %s2351 = sld [smem:[#allocation9 + $0x90]]
        %v2352 = vstv %s2351
        %v2353 = vmul.f32 %v2301, %v2352
        %v2354 = vmul.f32 %v2302, %v2352
        %2357 = vrot.lane.b32.xlu0 %v2353, 124
        %v2358 = vpop.permute.xlu0 %2357
        %2359 = vrot.lane.b32.xlu0 %v2354, 124
        %v2360 = vpop.permute.xlu0 %2359
        %v2363 = vadd.f32 %v2349, %v2358
        %v2364 = vadd.f32 %v2350, %v2360
        %s2365 = sld [smem:[#allocation9 + $0x91]]
        %v2366 = vstv %s2365
        %v2367 = vmul.f32 %v2301, %v2366
        %v2368 = vmul.f32 %v2302, %v2366
        %2371 = vrot.lane.b32.xlu0 %v2367, 123
        %v2372 = vpop.permute.xlu0 %2371
        %2373 = vrot.lane.b32.xlu0 %v2368, 123
        %v2374 = vpop.permute.xlu0 %2373
        %v2377 = vadd.f32 %v2363, %v2372
        %v2378 = vadd.f32 %v2364, %v2374
        %s2379 = sld [smem:[#allocation9 + $0x92]]
        %v2380 = vstv %s2379
        %v2381 = vmul.f32 %v2301, %v2380
        %v2382 = vmul.f32 %v2302, %v2380
        %2385 = vrot.lane.b32.xlu0 %v2381, 122
        %v2386 = vpop.permute.xlu0 %2385
        %2387 = vrot.lane.b32.xlu0 %v2382, 122
        %v2388 = vpop.permute.xlu0 %2387
        %v2391 = vadd.f32 %v2377, %v2386
        %v2392 = vadd.f32 %v2378, %v2388
        %s2393 = sld [smem:[#allocation10 + $0x2]]
        %v2394 = vstv %s2393
        %v2395 = vmul.f32 %v2391, %v2394
        %v2396 = vmul.f32 %v2392, %v2394
        %s2397 = sld [smem:[#allocation11 + $0x2]]
        %v2398 = vstv %s2397
        %v2399 = vadd.f32 %v2395, %v2398
        %v2400 = vadd.f32 %v2396, %v2398
        %v2401 = vmax.f32 %v2399, 0.0
        %v2402 = vmax.f32 %v2400, 0.0
        %s2403 = scalar_lea.vmem [#allocation3], 32
        %2404 = vst.msk [vmem:[%s2403] sm:$0xff] %vm1091, %v2401
        %2405 = vst.msk [vmem:[%s2403 + $0x8] sm:$0xff] %vm1091, %v2402
        %s2406 = scalar_lea.vmem [#allocation2], 72
        %v2407 = vld [vmem:[%s2406] sm:$0xff]
        %v2408 = vld [vmem:[%s2406 + $0x8] sm:$0xff]
        %s2409 = sld [smem:[#allocation9 + $0x93]]
        %v2410 = vstv %s2409
        %v2411 = vmul.f32 %v2407, %v2410
        %v2412 = vmul.f32 %v2408, %v2410
        %s2413 = sld [smem:[#allocation9 + $0x94]]
        %v2414 = vstv %s2413
        %v2415 = vmul.f32 %v2407, %v2414
        %v2416 = vmul.f32 %v2408, %v2414
        %2419 = vrot.lane.b32.xlu0 %v2415, 127
        %v2420 = vpop.permute.xlu0 %2419
        %2421 = vrot.lane.b32.xlu0 %v2416, 127
        %v2422 = vpop.permute.xlu0 %2421
        %v2425 = vadd.f32 %v2411, %v2420
        %v2426 = vadd.f32 %v2412, %v2422
        %s2427 = sld [smem:[#allocation9 + $0x95]]
        %v2428 = vstv %s2427
        %v2429 = vmul.f32 %v2407, %v2428
        %v2430 = vmul.f32 %v2408, %v2428
        %2433 = vrot.lane.b32.xlu0 %v2429, 126
        %v2434 = vpop.permute.xlu0 %2433
        %2435 = vrot.lane.b32.xlu0 %v2430, 126
        %v2436 = vpop.permute.xlu0 %2435
        %v2439 = vadd.f32 %v2425, %v2434
        %v2440 = vadd.f32 %v2426, %v2436
        %s2441 = sld [smem:[#allocation9 + $0x96]]
        %v2442 = vstv %s2441
        %v2443 = vmul.f32 %v2407, %v2442
        %v2444 = vmul.f32 %v2408, %v2442
        %2447 = vrot.lane.b32.xlu0 %v2443, 125
        %v2448 = vpop.permute.xlu0 %2447
        %2449 = vrot.lane.b32.xlu0 %v2444, 125
        %v2450 = vpop.permute.xlu0 %2449
        %v2453 = vadd.f32 %v2439, %v2448
        %v2454 = vadd.f32 %v2440, %v2450
        %s2455 = sld [smem:[#allocation9 + $0x97]]
        %v2456 = vstv %s2455
        %v2457 = vmul.f32 %v2407, %v2456
        %v2458 = vmul.f32 %v2408, %v2456
        %2461 = vrot.lane.b32.xlu0 %v2457, 124
        %v2462 = vpop.permute.xlu0 %2461
        %2463 = vrot.lane.b32.xlu0 %v2458, 124
        %v2464 = vpop.permute.xlu0 %2463
        %v2467 = vadd.f32 %v2453, %v2462
        %v2468 = vadd.f32 %v2454, %v2464
        %s2469 = sld [smem:[#allocation9 + $0x98]]
        %v2470 = vstv %s2469
        %v2471 = vmul.f32 %v2407, %v2470
        %v2472 = vmul.f32 %v2408, %v2470
        %2475 = vrot.lane.b32.xlu0 %v2471, 123
        %v2476 = vpop.permute.xlu0 %2475
        %2477 = vrot.lane.b32.xlu0 %v2472, 123
        %v2478 = vpop.permute.xlu0 %2477
        %v2481 = vadd.f32 %v2467, %v2476
        %v2482 = vadd.f32 %v2468, %v2478
        %s2483 = sld [smem:[#allocation9 + $0x99]]
        %v2484 = vstv %s2483
        %v2485 = vmul.f32 %v2407, %v2484
        %v2486 = vmul.f32 %v2408, %v2484
        %2489 = vrot.lane.b32.xlu0 %v2485, 122
        %v2490 = vpop.permute.xlu0 %2489
        %2491 = vrot.lane.b32.xlu0 %v2486, 122
        %v2492 = vpop.permute.xlu0 %2491
        %v2495 = vadd.f32 %v2481, %v2490
        %v2496 = vadd.f32 %v2482, %v2492
        %v2497 = vld [vmem:[%s2406 + $0x1] sm:$0xff]
        %v2498 = vld [vmem:[%s2406 + $0x9] sm:$0xff]
        %s2499 = sld [smem:[#allocation9 + $0x9a]]
        %v2500 = vstv %s2499
        %v2501 = vmul.f32 %v2497, %v2500
        %v2502 = vmul.f32 %v2498, %v2500
        %v2503 = vadd.f32 %v2495, %v2501
        %v2504 = vadd.f32 %v2496, %v2502
        %s2505 = sld [smem:[#allocation9 + $0x9b]]
        %v2506 = vstv %s2505
        %v2507 = vmul.f32 %v2497, %v2506
        %v2508 = vmul.f32 %v2498, %v2506
        %2511 = vrot.lane.b32.xlu0 %v2507, 127
        %v2512 = vpop.permute.xlu0 %2511
        %2513 = vrot.lane.b32.xlu0 %v2508, 127
        %v2514 = vpop.permute.xlu0 %2513
        %v2517 = vadd.f32 %v2503, %v2512
        %v2518 = vadd.f32 %v2504, %v2514
        %s2519 = sld [smem:[#allocation9 + $0x9c]]
        %v2520 = vstv %s2519
        %v2521 = vmul.f32 %v2497, %v2520
        %v2522 = vmul.f32 %v2498, %v2520
        %2525 = vrot.lane.b32.xlu0 %v2521, 126
        %v2526 = vpop.permute.xlu0 %2525
        %2527 = vrot.lane.b32.xlu0 %v2522, 126
        %v2528 = vpop.permute.xlu0 %2527
        %v2531 = vadd.f32 %v2517, %v2526
        %v2532 = vadd.f32 %v2518, %v2528
        %s2533 = sld [smem:[#allocation9 + $0x9d]]
        %v2534 = vstv %s2533
        %v2535 = vmul.f32 %v2497, %v2534
        %v2536 = vmul.f32 %v2498, %v2534
        %2539 = vrot.lane.b32.xlu0 %v2535, 125
        %v2540 = vpop.permute.xlu0 %2539
        %2541 = vrot.lane.b32.xlu0 %v2536, 125
        %v2542 = vpop.permute.xlu0 %2541
        %v2545 = vadd.f32 %v2531, %v2540
        %v2546 = vadd.f32 %v2532, %v2542
        %s2547 = sld [smem:[#allocation9 + $0x9e]]
        %v2548 = vstv %s2547
        %v2549 = vmul.f32 %v2497, %v2548
        %v2550 = vmul.f32 %v2498, %v2548
        %2553 = vrot.lane.b32.xlu0 %v2549, 124
        %v2554 = vpop.permute.xlu0 %2553
        %2555 = vrot.lane.b32.xlu0 %v2550, 124
        %v2556 = vpop.permute.xlu0 %2555
        %v2559 = vadd.f32 %v2545, %v2554
        %v2560 = vadd.f32 %v2546, %v2556
        %s2561 = sld [smem:[#allocation9 + $0x9f]]
        %v2562 = vstv %s2561
        %v2563 = vmul.f32 %v2497, %v2562
        %v2564 = vmul.f32 %v2498, %v2562
        %2567 = vrot.lane.b32.xlu0 %v2563, 123
        %v2568 = vpop.permute.xlu0 %2567
        %2569 = vrot.lane.b32.xlu0 %v2564, 123
        %v2570 = vpop.permute.xlu0 %2569
        %v2573 = vadd.f32 %v2559, %v2568
        %v2574 = vadd.f32 %v2560, %v2570
        %s2575 = sld [smem:[#allocation9 + $0xa0]]
        %v2576 = vstv %s2575
        %v2577 = vmul.f32 %v2497, %v2576
        %v2578 = vmul.f32 %v2498, %v2576
        %2581 = vrot.lane.b32.xlu0 %v2577, 122
        %v2582 = vpop.permute.xlu0 %2581
        %2583 = vrot.lane.b32.xlu0 %v2578, 122
        %v2584 = vpop.permute.xlu0 %2583
        %v2587 = vadd.f32 %v2573, %v2582
        %v2588 = vadd.f32 %v2574, %v2584
        %v2589 = vld [vmem:[%s2406 + $0x2] sm:$0xff]
        %v2590 = vld [vmem:[%s2406 + $0xa] sm:$0xff]
        %s2591 = sld [smem:[#allocation9 + $0xa1]]
        %v2592 = vstv %s2591
        %v2593 = vmul.f32 %v2589, %v2592
        %v2594 = vmul.f32 %v2590, %v2592
        %v2595 = vadd.f32 %v2587, %v2593
        %v2596 = vadd.f32 %v2588, %v2594
        %s2597 = sld [smem:[#allocation9 + $0xa2]]
        %v2598 = vstv %s2597
        %v2599 = vmul.f32 %v2589, %v2598
        %v2600 = vmul.f32 %v2590, %v2598
        %2603 = vrot.lane.b32.xlu0 %v2599, 127
        %v2604 = vpop.permute.xlu0 %2603
        %2605 = vrot.lane.b32.xlu0 %v2600, 127
        %v2606 = vpop.permute.xlu0 %2605
        %v2609 = vadd.f32 %v2595, %v2604
        %v2610 = vadd.f32 %v2596, %v2606
        %s2611 = sld [smem:[#allocation9 + $0xa3]]
        %v2612 = vstv %s2611
        %v2613 = vmul.f32 %v2589, %v2612
        %v2614 = vmul.f32 %v2590, %v2612
        %2617 = vrot.lane.b32.xlu0 %v2613, 126
        %v2618 = vpop.permute.xlu0 %2617
        %2619 = vrot.lane.b32.xlu0 %v2614, 126
        %v2620 = vpop.permute.xlu0 %2619
        %v2623 = vadd.f32 %v2609, %v2618
        %v2624 = vadd.f32 %v2610, %v2620
        %s2625 = sld [smem:[#allocation9 + $0xa4]]
        %v2626 = vstv %s2625
        %v2627 = vmul.f32 %v2589, %v2626
        %v2628 = vmul.f32 %v2590, %v2626
        %2631 = vrot.lane.b32.xlu0 %v2627, 125
        %v2632 = vpop.permute.xlu0 %2631
        %2633 = vrot.lane.b32.xlu0 %v2628, 125
        %v2634 = vpop.permute.xlu0 %2633
        %v2637 = vadd.f32 %v2623, %v2632
        %v2638 = vadd.f32 %v2624, %v2634
        %s2639 = sld [smem:[#allocation9 + $0xa5]]
        %v2640 = vstv %s2639
        %v2641 = vmul.f32 %v2589, %v2640
        %v2642 = vmul.f32 %v2590, %v2640
        %2645 = vrot.lane.b32.xlu0 %v2641, 124
        %v2646 = vpop.permute.xlu0 %2645
        %2647 = vrot.lane.b32.xlu0 %v2642, 124
        %v2648 = vpop.permute.xlu0 %2647
        %v2651 = vadd.f32 %v2637, %v2646
        %v2652 = vadd.f32 %v2638, %v2648
        %s2653 = sld [smem:[#allocation9 + $0xa6]]
        %v2654 = vstv %s2653
        %v2655 = vmul.f32 %v2589, %v2654
        %v2656 = vmul.f32 %v2590, %v2654
        %2659 = vrot.lane.b32.xlu0 %v2655, 123
        %v2660 = vpop.permute.xlu0 %2659
        %2661 = vrot.lane.b32.xlu0 %v2656, 123
        %v2662 = vpop.permute.xlu0 %2661
        %v2665 = vadd.f32 %v2651, %v2660
        %v2666 = vadd.f32 %v2652, %v2662
        %s2667 = sld [smem:[#allocation9 + $0xa7]]
        %v2668 = vstv %s2667
        %v2669 = vmul.f32 %v2589, %v2668
        %v2670 = vmul.f32 %v2590, %v2668
        %2673 = vrot.lane.b32.xlu0 %v2669, 122
        %v2674 = vpop.permute.xlu0 %2673
        %2675 = vrot.lane.b32.xlu0 %v2670, 122
        %v2676 = vpop.permute.xlu0 %2675
        %v2679 = vadd.f32 %v2665, %v2674
        %v2680 = vadd.f32 %v2666, %v2676
        %v2681 = vld [vmem:[%s2406 + $0x3] sm:$0xff]
        %v2682 = vld [vmem:[%s2406 + $0xb] sm:$0xff]
        %s2683 = sld [smem:[#allocation9 + $0xa8]]
        %v2684 = vstv %s2683
        %v2685 = vmul.f32 %v2681, %v2684
        %v2686 = vmul.f32 %v2682, %v2684
        %v2687 = vadd.f32 %v2679, %v2685
        %v2688 = vadd.f32 %v2680, %v2686
        %s2689 = sld [smem:[#allocation9 + $0xa9]]
        %v2690 = vstv %s2689
        %v2691 = vmul.f32 %v2681, %v2690
        %v2692 = vmul.f32 %v2682, %v2690
        %2695 = vrot.lane.b32.xlu0 %v2691, 127
        %v2696 = vpop.permute.xlu0 %2695
        %2697 = vrot.lane.b32.xlu0 %v2692, 127
        %v2698 = vpop.permute.xlu0 %2697
        %v2701 = vadd.f32 %v2687, %v2696
        %v2702 = vadd.f32 %v2688, %v2698
        %s2703 = sld [smem:[#allocation9 + $0xaa]]
        %v2704 = vstv %s2703
        %v2705 = vmul.f32 %v2681, %v2704
        %v2706 = vmul.f32 %v2682, %v2704
        %2709 = vrot.lane.b32.xlu0 %v2705, 126
        %v2710 = vpop.permute.xlu0 %2709
        %2711 = vrot.lane.b32.xlu0 %v2706, 126
        %v2712 = vpop.permute.xlu0 %2711
        %v2715 = vadd.f32 %v2701, %v2710
        %v2716 = vadd.f32 %v2702, %v2712
        %s2717 = sld [smem:[#allocation9 + $0xab]]
        %v2718 = vstv %s2717
        %v2719 = vmul.f32 %v2681, %v2718
        %v2720 = vmul.f32 %v2682, %v2718
        %2723 = vrot.lane.b32.xlu0 %v2719, 125
        %v2724 = vpop.permute.xlu0 %2723
        %2725 = vrot.lane.b32.xlu0 %v2720, 125
        %v2726 = vpop.permute.xlu0 %2725
        %v2729 = vadd.f32 %v2715, %v2724
        %v2730 = vadd.f32 %v2716, %v2726
        %s2731 = sld [smem:[#allocation9 + $0xac]]
        %v2732 = vstv %s2731
        %v2733 = vmul.f32 %v2681, %v2732
        %v2734 = vmul.f32 %v2682, %v2732
        %2737 = vrot.lane.b32.xlu0 %v2733, 124
        %v2738 = vpop.permute.xlu0 %2737
        %2739 = vrot.lane.b32.xlu0 %v2734, 124
        %v2740 = vpop.permute.xlu0 %2739
        %v2743 = vadd.f32 %v2729, %v2738
        %v2744 = vadd.f32 %v2730, %v2740
        %s2745 = sld [smem:[#allocation9 + $0xad]]
        %v2746 = vstv %s2745
        %v2747 = vmul.f32 %v2681, %v2746
        %v2748 = vmul.f32 %v2682, %v2746
        %2751 = vrot.lane.b32.xlu0 %v2747, 123
        %v2752 = vpop.permute.xlu0 %2751
        %2753 = vrot.lane.b32.xlu0 %v2748, 123
        %v2754 = vpop.permute.xlu0 %2753
        %v2757 = vadd.f32 %v2743, %v2752
        %v2758 = vadd.f32 %v2744, %v2754
        %s2759 = sld [smem:[#allocation9 + $0xae]]
        %v2760 = vstv %s2759
        %v2761 = vmul.f32 %v2681, %v2760
        %v2762 = vmul.f32 %v2682, %v2760
        %2765 = vrot.lane.b32.xlu0 %v2761, 122
        %v2766 = vpop.permute.xlu0 %2765
        %2767 = vrot.lane.b32.xlu0 %v2762, 122
        %v2768 = vpop.permute.xlu0 %2767
        %v2771 = vadd.f32 %v2757, %v2766
        %v2772 = vadd.f32 %v2758, %v2768
        %v2773 = vld [vmem:[%s2406 + $0x4] sm:$0xff]
        %v2774 = vld [vmem:[%s2406 + $0xc] sm:$0xff]
        %s2775 = sld [smem:[#allocation9 + $0xaf]]
        %v2776 = vstv %s2775
        %v2777 = vmul.f32 %v2773, %v2776
        %v2778 = vmul.f32 %v2774, %v2776
        %v2779 = vadd.f32 %v2771, %v2777
        %v2780 = vadd.f32 %v2772, %v2778
        %s2781 = sld [smem:[#allocation9 + $0xb0]]
        %v2782 = vstv %s2781
        %v2783 = vmul.f32 %v2773, %v2782
        %v2784 = vmul.f32 %v2774, %v2782
        %2787 = vrot.lane.b32.xlu0 %v2783, 127
        %v2788 = vpop.permute.xlu0 %2787
        %2789 = vrot.lane.b32.xlu0 %v2784, 127
        %v2790 = vpop.permute.xlu0 %2789
        %v2793 = vadd.f32 %v2779, %v2788
        %v2794 = vadd.f32 %v2780, %v2790
        %s2795 = sld [smem:[#allocation9 + $0xb1]]
        %v2796 = vstv %s2795
        %v2797 = vmul.f32 %v2773, %v2796
        %v2798 = vmul.f32 %v2774, %v2796
        %2801 = vrot.lane.b32.xlu0 %v2797, 126
        %v2802 = vpop.permute.xlu0 %2801
        %2803 = vrot.lane.b32.xlu0 %v2798, 126
        %v2804 = vpop.permute.xlu0 %2803
        %v2807 = vadd.f32 %v2793, %v2802
        %v2808 = vadd.f32 %v2794, %v2804
        %s2809 = sld [smem:[#allocation9 + $0xb2]]
        %v2810 = vstv %s2809
        %v2811 = vmul.f32 %v2773, %v2810
        %v2812 = vmul.f32 %v2774, %v2810
        %2815 = vrot.lane.b32.xlu0 %v2811, 125
        %v2816 = vpop.permute.xlu0 %2815
        %2817 = vrot.lane.b32.xlu0 %v2812, 125
        %v2818 = vpop.permute.xlu0 %2817
        %v2821 = vadd.f32 %v2807, %v2816
        %v2822 = vadd.f32 %v2808, %v2818
        %s2823 = sld [smem:[#allocation9 + $0xb3]]
        %v2824 = vstv %s2823
        %v2825 = vmul.f32 %v2773, %v2824
        %v2826 = vmul.f32 %v2774, %v2824
        %2829 = vrot.lane.b32.xlu0 %v2825, 124
        %v2830 = vpop.permute.xlu0 %2829
        %2831 = vrot.lane.b32.xlu0 %v2826, 124
        %v2832 = vpop.permute.xlu0 %2831
        %v2835 = vadd.f32 %v2821, %v2830
        %v2836 = vadd.f32 %v2822, %v2832
        %s2837 = sld [smem:[#allocation9 + $0xb4]]
        %v2838 = vstv %s2837
        %v2839 = vmul.f32 %v2773, %v2838
        %v2840 = vmul.f32 %v2774, %v2838
        %2843 = vrot.lane.b32.xlu0 %v2839, 123
        %v2844 = vpop.permute.xlu0 %2843
        %2845 = vrot.lane.b32.xlu0 %v2840, 123
        %v2846 = vpop.permute.xlu0 %2845
        %v2849 = vadd.f32 %v2835, %v2844
        %v2850 = vadd.f32 %v2836, %v2846
        %s2851 = sld [smem:[#allocation9 + $0xb5]]
        %v2852 = vstv %s2851
        %v2853 = vmul.f32 %v2773, %v2852
        %v2854 = vmul.f32 %v2774, %v2852
        %2857 = vrot.lane.b32.xlu0 %v2853, 122
        %v2858 = vpop.permute.xlu0 %2857
        %2859 = vrot.lane.b32.xlu0 %v2854, 122
        %v2860 = vpop.permute.xlu0 %2859
        %v2863 = vadd.f32 %v2849, %v2858
        %v2864 = vadd.f32 %v2850, %v2860
        %v2865 = vld [vmem:[%s2406 + $0x5] sm:$0xff]
        %v2866 = vld [vmem:[%s2406 + $0xd] sm:$0xff]
        %s2867 = sld [smem:[#allocation9 + $0xb6]]
        %v2868 = vstv %s2867
        %v2869 = vmul.f32 %v2865, %v2868
        %v2870 = vmul.f32 %v2866, %v2868
        %v2871 = vadd.f32 %v2863, %v2869
        %v2872 = vadd.f32 %v2864, %v2870
        %s2873 = sld [smem:[#allocation9 + $0xb7]]
        %v2874 = vstv %s2873
        %v2875 = vmul.f32 %v2865, %v2874
        %v2876 = vmul.f32 %v2866, %v2874
        %2879 = vrot.lane.b32.xlu0 %v2875, 127
        %v2880 = vpop.permute.xlu0 %2879
        %2881 = vrot.lane.b32.xlu0 %v2876, 127
        %v2882 = vpop.permute.xlu0 %2881
        %v2885 = vadd.f32 %v2871, %v2880
        %v2886 = vadd.f32 %v2872, %v2882
        %s2887 = sld [smem:[#allocation9 + $0xb8]]
        %v2888 = vstv %s2887
        %v2889 = vmul.f32 %v2865, %v2888
        %v2890 = vmul.f32 %v2866, %v2888
        %2893 = vrot.lane.b32.xlu0 %v2889, 126
        %v2894 = vpop.permute.xlu0 %2893
        %2895 = vrot.lane.b32.xlu0 %v2890, 126
        %v2896 = vpop.permute.xlu0 %2895
        %v2899 = vadd.f32 %v2885, %v2894
        %v2900 = vadd.f32 %v2886, %v2896
        %s2901 = sld [smem:[#allocation9 + $0xb9]]
        %v2902 = vstv %s2901
        %v2903 = vmul.f32 %v2865, %v2902
        %v2904 = vmul.f32 %v2866, %v2902
        %2907 = vrot.lane.b32.xlu0 %v2903, 125
        %v2908 = vpop.permute.xlu0 %2907
        %2909 = vrot.lane.b32.xlu0 %v2904, 125
        %v2910 = vpop.permute.xlu0 %2909
        %v2913 = vadd.f32 %v2899, %v2908
        %v2914 = vadd.f32 %v2900, %v2910
        %s2915 = sld [smem:[#allocation9 + $0xba]]
        %v2916 = vstv %s2915
        %v2917 = vmul.f32 %v2865, %v2916
        %v2918 = vmul.f32 %v2866, %v2916
        %2921 = vrot.lane.b32.xlu0 %v2917, 124
        %v2922 = vpop.permute.xlu0 %2921
        %2923 = vrot.lane.b32.xlu0 %v2918, 124
        %v2924 = vpop.permute.xlu0 %2923
        %v2927 = vadd.f32 %v2913, %v2922
        %v2928 = vadd.f32 %v2914, %v2924
        %s2929 = sld [smem:[#allocation9 + $0xbb]]
        %v2930 = vstv %s2929
        %v2931 = vmul.f32 %v2865, %v2930
        %v2932 = vmul.f32 %v2866, %v2930
        %2935 = vrot.lane.b32.xlu0 %v2931, 123
        %v2936 = vpop.permute.xlu0 %2935
        %2937 = vrot.lane.b32.xlu0 %v2932, 123
        %v2938 = vpop.permute.xlu0 %2937
        %v2941 = vadd.f32 %v2927, %v2936
        %v2942 = vadd.f32 %v2928, %v2938
        %s2943 = sld [smem:[#allocation9 + $0xbc]]
        %v2944 = vstv %s2943
        %v2945 = vmul.f32 %v2865, %v2944
        %v2946 = vmul.f32 %v2866, %v2944
        %2949 = vrot.lane.b32.xlu0 %v2945, 122
        %v2950 = vpop.permute.xlu0 %2949
        %2951 = vrot.lane.b32.xlu0 %v2946, 122
        %v2952 = vpop.permute.xlu0 %2951
        %v2955 = vadd.f32 %v2941, %v2950
        %v2956 = vadd.f32 %v2942, %v2952
        %v2957 = vld [vmem:[%s2406 + $0x6] sm:$0xff]
        %v2958 = vld [vmem:[%s2406 + $0xe] sm:$0xff]
        %s2959 = sld [smem:[#allocation9 + $0xbd]]
        %v2960 = vstv %s2959
        %v2961 = vmul.f32 %v2957, %v2960
        %v2962 = vmul.f32 %v2958, %v2960
        %v2963 = vadd.f32 %v2955, %v2961
        %v2964 = vadd.f32 %v2956, %v2962
        %s2965 = sld [smem:[#allocation9 + $0xbe]]
        %v2966 = vstv %s2965
        %v2967 = vmul.f32 %v2957, %v2966
        %v2968 = vmul.f32 %v2958, %v2966
        %2971 = vrot.lane.b32.xlu0 %v2967, 127
        %v2972 = vpop.permute.xlu0 %2971
        %2973 = vrot.lane.b32.xlu0 %v2968, 127
        %v2974 = vpop.permute.xlu0 %2973
        %v2977 = vadd.f32 %v2963, %v2972
        %v2978 = vadd.f32 %v2964, %v2974
        %s2979 = sld [smem:[#allocation9 + $0xbf]]
        %v2980 = vstv %s2979
        %v2981 = vmul.f32 %v2957, %v2980
        %v2982 = vmul.f32 %v2958, %v2980
        %2985 = vrot.lane.b32.xlu0 %v2981, 126
        %v2986 = vpop.permute.xlu0 %2985
        %2987 = vrot.lane.b32.xlu0 %v2982, 126
        %v2988 = vpop.permute.xlu0 %2987
        %v2991 = vadd.f32 %v2977, %v2986
        %v2992 = vadd.f32 %v2978, %v2988
        %s2993 = sld [smem:[#allocation9 + $0xc0]]
        %v2994 = vstv %s2993
        %v2995 = vmul.f32 %v2957, %v2994
        %v2996 = vmul.f32 %v2958, %v2994
        %2999 = vrot.lane.b32.xlu0 %v2995, 125
        %v3000 = vpop.permute.xlu0 %2999
        %3001 = vrot.lane.b32.xlu0 %v2996, 125
        %v3002 = vpop.permute.xlu0 %3001
        %v3005 = vadd.f32 %v2991, %v3000
        %v3006 = vadd.f32 %v2992, %v3002
        %s3007 = sld [smem:[#allocation9 + $0xc1]]
        %v3008 = vstv %s3007
        %v3009 = vmul.f32 %v2957, %v3008
        %v3010 = vmul.f32 %v2958, %v3008
        %3013 = vrot.lane.b32.xlu0 %v3009, 124
        %v3014 = vpop.permute.xlu0 %3013
        %3015 = vrot.lane.b32.xlu0 %v3010, 124
        %v3016 = vpop.permute.xlu0 %3015
        %v3019 = vadd.f32 %v3005, %v3014
        %v3020 = vadd.f32 %v3006, %v3016
        %s3021 = sld [smem:[#allocation9 + $0xc2]]
        %v3022 = vstv %s3021
        %v3023 = vmul.f32 %v2957, %v3022
        %v3024 = vmul.f32 %v2958, %v3022
        %3027 = vrot.lane.b32.xlu0 %v3023, 123
        %v3028 = vpop.permute.xlu0 %3027
        %3029 = vrot.lane.b32.xlu0 %v3024, 123
        %v3030 = vpop.permute.xlu0 %3029
        %v3033 = vadd.f32 %v3019, %v3028
        %v3034 = vadd.f32 %v3020, %v3030
        %s3035 = sld [smem:[#allocation9 + $0xc3]]
        %v3036 = vstv %s3035
        %v3037 = vmul.f32 %v2957, %v3036
        %v3038 = vmul.f32 %v2958, %v3036
        %3041 = vrot.lane.b32.xlu0 %v3037, 122
        %v3042 = vpop.permute.xlu0 %3041
        %3043 = vrot.lane.b32.xlu0 %v3038, 122
        %v3044 = vpop.permute.xlu0 %3043
        %v3047 = vadd.f32 %v3033, %v3042
        %v3048 = vadd.f32 %v3034, %v3044
        %s3049 = sld [smem:[#allocation10 + $0x3]]
        %v3050 = vstv %s3049
        %v3051 = vmul.f32 %v3047, %v3050
        %v3052 = vmul.f32 %v3048, %v3050
        %s3053 = sld [smem:[#allocation11 + $0x3]]
        %v3054 = vstv %s3053
        %v3055 = vadd.f32 %v3051, %v3054
        %v3056 = vadd.f32 %v3052, %v3054
        %v3057 = vmax.f32 %v3055, 0.0
        %v3058 = vmax.f32 %v3056, 0.0
        %s3059 = scalar_lea.vmem [#allocation3], 48
        %3060 = vst.msk [vmem:[%s3059] sm:$0xff] %vm1091, %v3057
        %3061 = vst.msk [vmem:[%s3059 + $0x8] sm:$0xff] %vm1091, %v3058
        %v3062 = vld [vmem:[#allocation3] sm:$0xff]
        %v3063 = vld [vmem:[#allocation3 + $0x8] sm:$0xff]
        %s3064 = sld [smem:[#allocation13]]
        %v3065 = vstv %s3064
        %v3066 = vmul.f32 %v3062, %v3065
        %v3067 = vmul.f32 %v3063, %v3065
        %v3068 = vld [vmem:[%s1747] sm:$0xff]
        %v3069 = vld [vmem:[%s1747 + $0x8] sm:$0xff]
        %s3070 = sld [smem:[#allocation13 + $0x1]]
        %v3071 = vstv %s3070
        %v3072 = vmul.f32 %v3068, %v3071
        %v3073 = vmul.f32 %v3069, %v3071
        %v3074 = vadd.f32 %v3066, %v3072
        %v3075 = vadd.f32 %v3067, %v3073
        %v3076 = vld [vmem:[%s2403] sm:$0xff]
        %v3077 = vld [vmem:[%s2403 + $0x8] sm:$0xff]
        %s3078 = sld [smem:[#allocation13 + $0x2]]
        %v3079 = vstv %s3078
        %v3080 = vmul.f32 %v3076, %v3079
        %v3081 = vmul.f32 %v3077, %v3079
        %v3082 = vadd.f32 %v3074, %v3080
        %v3083 = vadd.f32 %v3075, %v3081
        %v3084 = vld [vmem:[%s3059] sm:$0xff]
        %v3085 = vld [vmem:[%s3059 + $0x8] sm:$0xff]
        %s3086 = sld [smem:[#allocation13 + $0x3]]
        %v3087 = vstv %s3086
        %v3088 = vmul.f32 %v3084, %v3087
        %v3089 = vmul.f32 %v3085, %v3087
        %v3090 = vadd.f32 %v3082, %v3088
        %v3091 = vadd.f32 %v3083, %v3089
        %s3092 = sld [smem:[#allocation14]]
        %v3093 = vstv %s3092
        %v3094 = vmul.f32 %v3090, %v3093
        %v3095 = vmul.f32 %v3091, %v3093
        %s3096 = sld [smem:[#allocation16]]
        %v3097 = vstv %s3096
        %v3098 = vadd.f32 %v3094, %v3097
        %v3099 = vadd.f32 %v3095, %v3097
        %v3100 = vmax.f32 %v3098, 0.0
        %v3101 = vmax.f32 %v3099, 0.0
        %3102 = vst.msk [vmem:[%s375] sm:$0xff] %vm1091, %v3100
        %3103 = vst.msk [vmem:[%s375 + $0x8] sm:$0xff] %vm1091, %v3101
        %v3104 = vld [vmem:[#allocation3] sm:$0xff]
        %v3105 = vld [vmem:[#allocation3 + $0x8] sm:$0xff]
        %s3106 = sld [smem:[#allocation13 + $0x4]]
        %v3107 = vstv %s3106
        %v3108 = vmul.f32 %v3104, %v3107
        %v3109 = vmul.f32 %v3105, %v3107
        %v3110 = vld [vmem:[%s1747] sm:$0xff]
        %v3111 = vld [vmem:[%s1747 + $0x8] sm:$0xff]
        %s3112 = sld [smem:[#allocation13 + $0x5]]
        %v3113 = vstv %s3112
        %v3114 = vmul.f32 %v3110, %v3113
        %v3115 = vmul.f32 %v3111, %v3113
        %v3116 = vadd.f32 %v3108, %v3114
        %v3117 = vadd.f32 %v3109, %v3115
        %v3118 = vld [vmem:[%s2403] sm:$0xff]
        %v3119 = vld [vmem:[%s2403 + $0x8] sm:$0xff]
        %s3120 = sld [smem:[#allocation13 + $0x6]]
        %v3121 = vstv %s3120
        %v3122 = vmul.f32 %v3118, %v3121
        %v3123 = vmul.f32 %v3119, %v3121
        %v3124 = vadd.f32 %v3116, %v3122
        %v3125 = vadd.f32 %v3117, %v3123
        %v3126 = vld [vmem:[%s3059] sm:$0xff]
        %v3127 = vld [vmem:[%s3059 + $0x8] sm:$0xff]
        %s3128 = sld [smem:[#allocation13 + $0x7]]
        %v3129 = vstv %s3128
        %v3130 = vmul.f32 %v3126, %v3129
        %v3131 = vmul.f32 %v3127, %v3129
        %v3132 = vadd.f32 %v3124, %v3130
        %v3133 = vadd.f32 %v3125, %v3131
        %s3134 = sld [smem:[#allocation14 + $0x1]]
        %v3135 = vstv %s3134
        %v3136 = vmul.f32 %v3132, %v3135
        %v3137 = vmul.f32 %v3133, %v3135
        %s3138 = sld [smem:[#allocation16 + $0x1]]
        %v3139 = vstv %s3138
        %v3140 = vadd.f32 %v3136, %v3139
        %v3141 = vadd.f32 %v3137, %v3139
        %v3142 = vmax.f32 %v3140, 0.0
        %v3143 = vmax.f32 %v3141, 0.0
        %s3144 = scalar_lea.vmem %s375, 16 [#allocation17]
        %3145 = vst.msk [vmem:[%s3144] sm:$0xff] %vm1091, %v3142
        %3146 = vst.msk [vmem:[%s3144 + $0x8] sm:$0xff] %vm1091, %v3143
        %v3147 = vld [vmem:[#allocation3] sm:$0xff]
        %v3148 = vld [vmem:[#allocation3 + $0x8] sm:$0xff]
        %s3149 = sld [smem:[#allocation13 + $0x8]]
        %v3150 = vstv %s3149
        %v3151 = vmul.f32 %v3147, %v3150
        %v3152 = vmul.f32 %v3148, %v3150
        %v3153 = vld [vmem:[%s1747] sm:$0xff]
        %v3154 = vld [vmem:[%s1747 + $0x8] sm:$0xff]
        %s3155 = sld [smem:[#allocation13 + $0x9]]
        %v3156 = vstv %s3155
        %v3157 = vmul.f32 %v3153, %v3156
        %v3158 = vmul.f32 %v3154, %v3156
        %v3159 = vadd.f32 %v3151, %v3157
        %v3160 = vadd.f32 %v3152, %v3158
        %v3161 = vld [vmem:[%s2403] sm:$0xff]
        %v3162 = vld [vmem:[%s2403 + $0x8] sm:$0xff]
        %s3163 = sld [smem:[#allocation13 + $0xa]]
        %v3164 = vstv %s3163
        %v3165 = vmul.f32 %v3161, %v3164
        %v3166 = vmul.f32 %v3162, %v3164
        %v3167 = vadd.f32 %v3159, %v3165
        %v3168 = vadd.f32 %v3160, %v3166
        %v3169 = vld [vmem:[%s3059] sm:$0xff]
        %v3170 = vld [vmem:[%s3059 + $0x8] sm:$0xff]
        %s3171 = sld [smem:[#allocation13 + $0xb]]
        %v3172 = vstv %s3171
        %v3173 = vmul.f32 %v3169, %v3172
        %v3174 = vmul.f32 %v3170, %v3172
        %v3175 = vadd.f32 %v3167, %v3173
        %v3176 = vadd.f32 %v3168, %v3174
        %s3177 = sld [smem:[#allocation14 + $0x2]]
        %v3178 = vstv %s3177
        %v3179 = vmul.f32 %v3175, %v3178
        %v3180 = vmul.f32 %v3176, %v3178
        %s3181 = sld [smem:[#allocation16 + $0x2]]
        %v3182 = vstv %s3181
        %v3183 = vadd.f32 %v3179, %v3182
        %v3184 = vadd.f32 %v3180, %v3182
        %v3185 = vmax.f32 %v3183, 0.0
        %v3186 = vmax.f32 %v3184, 0.0
        %s3187 = scalar_lea.vmem %s375, 32 [#allocation17]
        %3188 = vst.msk [vmem:[%s3187] sm:$0xff] %vm1091, %v3185
        %3189 = vst.msk [vmem:[%s3187 + $0x8] sm:$0xff] %vm1091, %v3186
        %v3190 = vld [vmem:[#allocation3] sm:$0xff]
        %v3191 = vld [vmem:[#allocation3 + $0x8] sm:$0xff]
        %s3192 = sld [smem:[#allocation13 + $0xc]]
        %v3193 = vstv %s3192
        %v3194 = vmul.f32 %v3190, %v3193
        %v3195 = vmul.f32 %v3191, %v3193
        %v3196 = vld [vmem:[%s1747] sm:$0xff]
        %v3197 = vld [vmem:[%s1747 + $0x8] sm:$0xff]
        %s3198 = sld [smem:[#allocation13 + $0xd]]
        %v3199 = vstv %s3198
        %v3200 = vmul.f32 %v3196, %v3199
        %v3201 = vmul.f32 %v3197, %v3199
        %v3202 = vadd.f32 %v3194, %v3200
        %v3203 = vadd.f32 %v3195, %v3201
        %v3204 = vld [vmem:[%s2403] sm:$0xff]
        %v3205 = vld [vmem:[%s2403 + $0x8] sm:$0xff]
        %s3206 = sld [smem:[#allocation13 + $0xe]]
        %v3207 = vstv %s3206
        %v3208 = vmul.f32 %v3204, %v3207
        %v3209 = vmul.f32 %v3205, %v3207
        %v3210 = vadd.f32 %v3202, %v3208
        %v3211 = vadd.f32 %v3203, %v3209
        %v3212 = vld [vmem:[%s3059] sm:$0xff]
        %v3213 = vld [vmem:[%s3059 + $0x8] sm:$0xff]
        %s3214 = sld [smem:[#allocation13 + $0xf]]
        %v3215 = vstv %s3214
        %v3216 = vmul.f32 %v3212, %v3215
        %v3217 = vmul.f32 %v3213, %v3215
        %v3218 = vadd.f32 %v3210, %v3216
        %v3219 = vadd.f32 %v3211, %v3217
        %s3220 = sld [smem:[#allocation14 + $0x3]]
        %v3221 = vstv %s3220
        %v3222 = vmul.f32 %v3218, %v3221
        %v3223 = vmul.f32 %v3219, %v3221
        %s3224 = sld [smem:[#allocation16 + $0x3]]
        %v3225 = vstv %s3224
        %v3226 = vadd.f32 %v3222, %v3225
        %v3227 = vadd.f32 %v3223, %v3225
        %v3228 = vmax.f32 %v3226, 0.0
        %v3229 = vmax.f32 %v3227, 0.0
        %s3230 = scalar_lea.vmem %s375, 48 [#allocation17]
        %3231 = vst.msk [vmem:[%s3230] sm:$0xff] %vm1091, %v3228
        %3232 = vst.msk [vmem:[%s3230 + $0x8] sm:$0xff] %vm1091, %v3229
        %v3233 = vld [vmem:[#allocation3] sm:$0xff]
        %v3234 = vld [vmem:[#allocation3 + $0x8] sm:$0xff]
        %s3235 = sld [smem:[#allocation13 + $0x10]]
        %v3236 = vstv %s3235
        %v3237 = vmul.f32 %v3233, %v3236
        %v3238 = vmul.f32 %v3234, %v3236
        %v3239 = vld [vmem:[%s1747] sm:$0xff]
        %v3240 = vld [vmem:[%s1747 + $0x8] sm:$0xff]
        %s3241 = sld [smem:[#allocation13 + $0x11]]
        %v3242 = vstv %s3241
        %v3243 = vmul.f32 %v3239, %v3242
        %v3244 = vmul.f32 %v3240, %v3242
        %v3245 = vadd.f32 %v3237, %v3243
        %v3246 = vadd.f32 %v3238, %v3244
        %v3247 = vld [vmem:[%s2403] sm:$0xff]
        %v3248 = vld [vmem:[%s2403 + $0x8] sm:$0xff]
        %s3249 = sld [smem:[#allocation13 + $0x12]]
        %v3250 = vstv %s3249
        %v3251 = vmul.f32 %v3247, %v3250
        %v3252 = vmul.f32 %v3248, %v3250
        %v3253 = vadd.f32 %v3245, %v3251
        %v3254 = vadd.f32 %v3246, %v3252
        %v3255 = vld [vmem:[%s3059] sm:$0xff]
        %v3256 = vld [vmem:[%s3059 + $0x8] sm:$0xff]
        %s3257 = sld [smem:[#allocation13 + $0x13]]
        %v3258 = vstv %s3257
        %v3259 = vmul.f32 %v3255, %v3258
        %v3260 = vmul.f32 %v3256, %v3258
        %v3261 = vadd.f32 %v3253, %v3259
        %v3262 = vadd.f32 %v3254, %v3260
        %s3263 = sld [smem:[#allocation14 + $0x4]]
        %v3264 = vstv %s3263
        %v3265 = vmul.f32 %v3261, %v3264
        %v3266 = vmul.f32 %v3262, %v3264
        %s3267 = sld [smem:[#allocation16 + $0x4]]
        %v3268 = vstv %s3267
        %v3269 = vadd.f32 %v3265, %v3268
        %v3270 = vadd.f32 %v3266, %v3268
        %v3271 = vmax.f32 %v3269, 0.0
        %v3272 = vmax.f32 %v3270, 0.0
        %s3273 = scalar_lea.vmem %s375, 64 [#allocation17]
        %3274 = vst.msk [vmem:[%s3273] sm:$0xff] %vm1091, %v3271
        %3275 = vst.msk [vmem:[%s3273 + $0x8] sm:$0xff] %vm1091, %v3272
        %v3276 = vld [vmem:[#allocation3] sm:$0xff]
        %v3277 = vld [vmem:[#allocation3 + $0x8] sm:$0xff]
        %s3278 = sld [smem:[#allocation13 + $0x14]]
        %v3279 = vstv %s3278
        %v3280 = vmul.f32 %v3276, %v3279
        %v3281 = vmul.f32 %v3277, %v3279
        %v3282 = vld [vmem:[%s1747] sm:$0xff]
        %v3283 = vld [vmem:[%s1747 + $0x8] sm:$0xff]
        %s3284 = sld [smem:[#allocation13 + $0x15]]
        %v3285 = vstv %s3284
        %v3286 = vmul.f32 %v3282, %v3285
        %v3287 = vmul.f32 %v3283, %v3285
        %v3288 = vadd.f32 %v3280, %v3286
        %v3289 = vadd.f32 %v3281, %v3287
        %v3290 = vld [vmem:[%s2403] sm:$0xff]
        %v3291 = vld [vmem:[%s2403 + $0x8] sm:$0xff]
        %s3292 = sld [smem:[#allocation13 + $0x16]]
        %v3293 = vstv %s3292
        %v3294 = vmul.f32 %v3290, %v3293
        %v3295 = vmul.f32 %v3291, %v3293
        %v3296 = vadd.f32 %v3288, %v3294
        %v3297 = vadd.f32 %v3289, %v3295
        %v3298 = vld [vmem:[%s3059] sm:$0xff]
        %v3299 = vld [vmem:[%s3059 + $0x8] sm:$0xff]
        %s3300 = sld [smem:[#allocation13 + $0x17]]
        %v3301 = vstv %s3300
        %v3302 = vmul.f32 %v3298, %v3301
        %v3303 = vmul.f32 %v3299, %v3301
        %v3304 = vadd.f32 %v3296, %v3302
        %v3305 = vadd.f32 %v3297, %v3303
        %s3306 = sld [smem:[#allocation14 + $0x5]]
        %v3307 = vstv %s3306
        %v3308 = vmul.f32 %v3304, %v3307
        %v3309 = vmul.f32 %v3305, %v3307
        %s3310 = sld [smem:[#allocation16 + $0x5]]
        %v3311 = vstv %s3310
        %v3312 = vadd.f32 %v3308, %v3311
        %v3313 = vadd.f32 %v3309, %v3311
        %v3314 = vmax.f32 %v3312, 0.0
        %v3315 = vmax.f32 %v3313, 0.0
        %s3316 = scalar_lea.vmem %s375, 80 [#allocation17]
        %3317 = vst.msk [vmem:[%s3316] sm:$0xff] %vm1091, %v3314
        %3318 = vst.msk [vmem:[%s3316 + $0x8] sm:$0xff] %vm1091, %v3315
        %v3319 = vld [vmem:[#allocation3] sm:$0xff]
        %v3320 = vld [vmem:[#allocation3 + $0x8] sm:$0xff]
        %s3321 = sld [smem:[#allocation13 + $0x18]]
        %v3322 = vstv %s3321
        %v3323 = vmul.f32 %v3319, %v3322
        %v3324 = vmul.f32 %v3320, %v3322
        %v3325 = vld [vmem:[%s1747] sm:$0xff]
        %v3326 = vld [vmem:[%s1747 + $0x8] sm:$0xff]
        %s3327 = sld [smem:[#allocation13 + $0x19]]
        %v3328 = vstv %s3327
        %v3329 = vmul.f32 %v3325, %v3328
        %v3330 = vmul.f32 %v3326, %v3328
        %v3331 = vadd.f32 %v3323, %v3329
        %v3332 = vadd.f32 %v3324, %v3330
        %v3333 = vld [vmem:[%s2403] sm:$0xff]
        %v3334 = vld [vmem:[%s2403 + $0x8] sm:$0xff]
        %s3335 = sld [smem:[#allocation13 + $0x1a]]
        %v3336 = vstv %s3335
        %v3337 = vmul.f32 %v3333, %v3336
        %v3338 = vmul.f32 %v3334, %v3336
        %v3339 = vadd.f32 %v3331, %v3337
        %v3340 = vadd.f32 %v3332, %v3338
        %v3341 = vld [vmem:[%s3059] sm:$0xff]
        %v3342 = vld [vmem:[%s3059 + $0x8] sm:$0xff]
        %s3343 = sld [smem:[#allocation13 + $0x1b]]
        %v3344 = vstv %s3343
        %v3345 = vmul.f32 %v3341, %v3344
        %v3346 = vmul.f32 %v3342, %v3344
        %v3347 = vadd.f32 %v3339, %v3345
        %v3348 = vadd.f32 %v3340, %v3346
        %s3349 = sld [smem:[#allocation14 + $0x6]]
        %v3350 = vstv %s3349
        %v3351 = vmul.f32 %v3347, %v3350
        %v3352 = vmul.f32 %v3348, %v3350
        %s3353 = sld [smem:[#allocation16 + $0x6]]
        %v3354 = vstv %s3353
        %v3355 = vadd.f32 %v3351, %v3354
        %v3356 = vadd.f32 %v3352, %v3354
        %v3357 = vmax.f32 %v3355, 0.0
        %v3358 = vmax.f32 %v3356, 0.0
        %s3359 = scalar_lea.vmem %s375, 96 [#allocation17]
        %3360 = vst.msk [vmem:[%s3359] sm:$0xff] %vm1091, %v3357
        %3361 = vst.msk [vmem:[%s3359 + $0x8] sm:$0xff] %vm1091, %v3358
        %v3362 = vld [vmem:[#allocation3] sm:$0xff]
        %v3363 = vld [vmem:[#allocation3 + $0x8] sm:$0xff]
        %s3364 = sld [smem:[#allocation13 + $0x1c]]
        %v3365 = vstv %s3364
        %v3366 = vmul.f32 %v3362, %v3365
        %v3367 = vmul.f32 %v3363, %v3365
        %v3368 = vld [vmem:[%s1747] sm:$0xff]
        %v3369 = vld [vmem:[%s1747 + $0x8] sm:$0xff]
        %s3370 = sld [smem:[#allocation13 + $0x1d]]
        %v3371 = vstv %s3370
        %v3372 = vmul.f32 %v3368, %v3371
        %v3373 = vmul.f32 %v3369, %v3371
        %v3374 = vadd.f32 %v3366, %v3372
        %v3375 = vadd.f32 %v3367, %v3373
        %v3376 = vld [vmem:[%s2403] sm:$0xff]
        %v3377 = vld [vmem:[%s2403 + $0x8] sm:$0xff]
        %s3378 = sld [smem:[#allocation13 + $0x1e]]
        %v3379 = vstv %s3378
        %v3380 = vmul.f32 %v3376, %v3379
        %v3381 = vmul.f32 %v3377, %v3379
        %v3382 = vadd.f32 %v3374, %v3380
        %v3383 = vadd.f32 %v3375, %v3381
        %v3384 = vld [vmem:[%s3059] sm:$0xff]
        %v3385 = vld [vmem:[%s3059 + $0x8] sm:$0xff]
        %s3386 = sld [smem:[#allocation13 + $0x1f]]
        %v3387 = vstv %s3386
        %v3388 = vmul.f32 %v3384, %v3387
        %v3389 = vmul.f32 %v3385, %v3387
        %v3390 = vadd.f32 %v3382, %v3388
        %v3391 = vadd.f32 %v3383, %v3389
        %s3392 = sld [smem:[#allocation14 + $0x7]]
        %v3393 = vstv %s3392
        %v3394 = vmul.f32 %v3390, %v3393
        %v3395 = vmul.f32 %v3391, %v3393
        %s3396 = sld [smem:[#allocation16 + $0x7]]
        %v3397 = vstv %s3396
        %v3398 = vadd.f32 %v3394, %v3397
        %v3399 = vadd.f32 %v3395, %v3397
        %v3400 = vmax.f32 %v3398, 0.0
        %v3401 = vmax.f32 %v3399, 0.0
        %s3402 = scalar_lea.vmem %s375, 112 [#allocation17]
        %3403 = vst.msk [vmem:[%s3402] sm:$0xff] %vm1091, %v3400
        %3404 = vst.msk [vmem:[%s3402 + $0x8] sm:$0xff] %vm1091, %v3401
        %s3405 = sand.u32 %s188, 1
        %s3406 = scalar_lea.sflag [#allocation6], %s3405
        %s3407 = sand.u32 %s188, 1
        %s3408 = smul.addr %s3407, 128
        %s3409 = scalar_lea.vmem [#allocation17], %s3408
        // Predicated region
        $region77: #{tpu_custom_call.1} parent=47 // pred_check
          %p3410 = pneg %p198
        $region78: #{tpu_custom_call.1} parent=47 // pred_check_branch
          %3412 = sbr.rel (%p3410) target = $region80
        $region79: #{tpu_custom_call.1} parent=47 // pred_region
          %3414 = vsyncadd %s3406, 0
          %s3415 = smul.addr %s28, 16
          %s3416 = smul.addr %s3415, 8
          %s3417 = scalar_lea.hbm %s7, %s3416
          %s3418 = sshll.u32 %s3409, 4
          %s3419 = int_to_ptr.vmem [resolvable:$true] %s3418
          %s3420 = sshll.u32 %s3417, 4
          %s3421 = int_to_ptr.hbm [resolvable:$true] %s3420
          %3426 = dma.vmem_to_hbm [thread:$0]  %s3419, 2048, %s3421, %s3406, 128, 128, 8
        $region80: #{tpu_custom_call.1} parent=47 // pred_fallthru
          _
      $region48: #{tpu_custom_call.1} parent=5 // pred_fallthru
        _
      %p3427 = scmp.le.s32.totalorder 2, %s23
      // Predicated region
      $region81: #{tpu_custom_call.1} parent=5 // pred_check
        %p3428 = pneg %p3427
      $region82: #{tpu_custom_call.1} parent=5 // pred_check_branch
        %3430 = sbr.rel (%p3428) target = $region84
      $region83: #{tpu_custom_call.1} parent=5 // pred_region
        %s3431 = ssub.s32 %s23, 2
        // Predicated region
        $region85: #{tpu_custom_call.1} parent=83 // pred_check
          %p3432 = pneg %p204
        $region86: #{tpu_custom_call.1} parent=83 // pred_check_branch
          %3434 = sbr.rel (%p3432) target = $region88
        $region87: #{tpu_custom_call.1} parent=83 // pred_region
          %s3435 = sand.u32 %s189, 1
          %s3436 = scalar_lea.sflag [#allocation6], %s3435
          %s3437 = sand.u32 %s189, 1
          %s3438 = smul.addr %s3437, 128
          %s3439 = scalar_lea.vmem [#allocation17], %s3438
          %3441 = dma.done %s3436, 2048
        $region88: #{tpu_custom_call.1} parent=83 // pred_fallthru
          _
      $region84: #{tpu_custom_call.1} parent=5 // pred_fallthru
        _
    $region6: #{tpu_custom_call.1} parent=1 // loop_footer
      %s27 = sadd.s32 1, %s23
    $region7: #{tpu_custom_call.1} parent=1 // loop_footer_branch
      %22 = sbr.rel target = $region3
    $region8: #{tpu_custom_call.1} parent=1 // loop_exit
      _
    %3442 = vsyncpa [#allocation5], 1
    %s3443 = scalar_lea.sflag [#allocation5], 1
    %3444 = vsyncpa %s3443, 1
    %3445 = vsyncpa [#allocation6], 1
    %s3446 = scalar_lea.sflag [#allocation6], 1
    %3447 = vsyncpa %s3446, 1
    %3448 = vsyncpa [#allocation7], 1
    %s3449 = scalar_lea.sflag [#allocation7], 1
    %3450 = vsyncpa %s3449, 1
    %3451 = vsyncpa [#allocation8], 1
    %s3452 = scalar_lea.sflag [#allocation8], 1
    %3453 = vsyncpa %s3452, 1
    %3454 = vsyncpa [#allocation12], 1
    %3455 = vsyncpa [#allocation15], 1

</llo_original>
